<compile_context>
chip_gen: v6e
topology: v6e:2x2x1
jax: 0.10.0
libtpu: 0.0.40
codegen_flags: <defaults>
</compile_context>

<pallas_src>
import math

import jax
import jax.numpy as jnp
from jax.experimental import pallas as pl
from jax.experimental.pallas import tpu as pltpu


def _round_up(x, m):
    return ((x + m - 1) // m) * m


# ----------------------------------------------------------------------------
# Pallas kernel: fused edge-MLP + masked max aggregation (row-folded).
# ----------------------------------------------------------------------------
def edge_mlp_max_kernel(f_ref, m_ref, w1_ref, b1_ref, w2_ref, b2_ref, o_ref):
    """One grid step of the fused edge-MLP + masked max aggregation.

    f_ref : (1, RT, Cin) bf16  RT = kt neighbour-slots x m targets (slot-major)
    m_ref : (1, RT, 1)   bf16  1.0 for valid edges, 0.0 for padding slots
    w1/b1 : (Cin, H1) bf16 / (1, H1) f32
    w2/b2 : (H1, H2) bf16 / (1, H2) f32
    o_ref : (1, m, H2)   f32   running max over all neighbour slots
    """
    rt = f_ref.shape[1]
    m = o_ref.shape[1]
    h2c = o_ref.shape[2]
    kt = rt // m

    @pl.when(pl.program_id(1) == 0)
    def _init():
        o_ref[...] = jnp.zeros_like(o_ref)

    x = f_ref[0]                                                   # (RT, Cin) bf16
    h = jnp.dot(x, w1_ref[...], preferred_element_type=jnp.float32) + b1_ref[...]
    h = jnp.maximum(h, 0.0)
    h = jnp.dot(h.astype(jnp.bfloat16), w2_ref[...],
                preferred_element_type=jnp.float32) + b2_ref[...]
    h = jnp.maximum(h, 0.0)                                        # (RT, H2) f32, >= 0
    # Zero out invalid / padded slots.  Correct only under the >=0 / >=1-valid
    # invariant documented at the top of the file.
    h = h * m_ref[0]

    if m == 1:
        part = jnp.max(h, axis=0, keepdims=True)                   # (1, H2)
    else:
        part = jnp.max(h.reshape(kt, m, h2c), axis=0)              # (m, H2)
    o_ref[0] = jnp.maximum(o_ref[0], part)


def _vmem_limit_bytes(rt, cin, h1, h2, m_pad):
    """Conservative per-step VMEM budget (double-buffered inputs + weights +
    output block + intermediate activations), with headroom.  Explicit so a
    future rows_per_tile bump fails loudly against v7x's 64 MiB instead of
    silently OOM-ing only on that generation."""
    cinp = _round_up(cin, 128)
    h1p = _round_up(h1, 128)
    h2p = _round_up(h2, 128)
    feats = 2 * rt * cinp * 2               # bf16, double buffered
    maskb = 2 * rt * 128 * 2                # (rt,1) bf16, lane-padded to 128
    wts = cinp * h1p * 2 + h1p * h2p * 2 + (h1p + h2p) * 4
    outb = 2 * max(m_pad, 8) * h2p * 4
    act = rt * (h1p + h2p) * 4              # intermediate activations
    est = feats + maskb + wts + outb + act
    return int(min(64 * 1024 * 1024, max(32 * 1024 * 1024, 2 * est)))


def edge_mlp_max(feats, mask, w1, b1, w2, b2, rows_per_tile=1024):
    """Fused two-layer edge MLP + masked max over neighbour slots.

    feats : (B, K, M, Cin)  slot-major per-slot, per-target input features
    mask  : (B, K, M) bool  validity of each slot
    Returns (B, M, H2) f32 with out[b, m] = max over valid k of
        relu(relu(feats[b, k, m] @ w1 + b1) @ w2 + b2)
    """
    B, K, M, Cin = feats.shape
    H1 = w1.shape[1]
    H2 = w2.shape[1]

    # Pad the target dim to a sublane multiple so the in-kernel (kt, m, H2)
    # view of the row-folded activations is tile aligned.  (For M == 1 the
    # kernel reduces over all rows directly, no padding needed.)
    m_pad = M if M == 1 else _round_up(M, 8)
    if m_pad != M:
        feats = jnp.pad(feats, ((0, 0), (0, 0), (0, m_pad - M), (0, 0)))
        mask = jnp.pad(mask, ((0, 0), (0, 0), (0, m_pad - M)))

    # Slots-per-tile: pack ~rows_per_tile MXU rows per grid step.  If all slots
    # fit one tile the grid collapses to (B, 1) (no per-tile overhead at all).
    kt_max = max(1, rows_per_tile // m_pad)
    if kt_max >= K:
        kt, n_tiles = K, 1
    else:
        n_tiles = -(-K // kt_max)
        kt = -(-K // n_tiles)
        # When the row block is not the full array dim, it must be a multiple
        # of 16 (bf16 sublane packing / (8,128) tiling).
        unit = 16 // math.gcd(m_pad, 16)
        kt = _round_up(kt, unit)
        n_tiles = -(-K // kt)
    k_pad = kt * n_tiles
    if k_pad != K:
        feats = jnp.pad(feats, ((0, 0), (0, k_pad - K), (0, 0), (0, 0)))
        mask = jnp.pad(mask, ((0, 0), (0, k_pad - K), (0, 0)))

    rt = kt * m_pad                      # rows per grid step
    rows = k_pad * m_pad                 # total folded rows
    feats_rows = feats.reshape(B, rows, Cin).astype(jnp.bfloat16)
    mask_rows = mask.reshape(B, rows, 1).astype(jnp.bfloat16)

    # TODO(synk): on v7x (2 TensorCores), add the target dim as a second
    # "parallel" grid axis so small-batch workloads use both cores.
    out = pl.pallas_call(
        edge_mlp_max_kernel,
        out_shape=jax.ShapeDtypeStruct((B, m_pad, H2), jnp.float32),
        grid=(B, n_tiles),
        in_specs=[
            pl.BlockSpec((1, rt, Cin), lambda b, t: (b, t, 0)),
            pl.BlockSpec((1, rt, 1), lambda b, t: (b, t, 0)),
            pl.BlockSpec((Cin, H1), lambda b, t: (0, 0)),
            pl.BlockSpec((1, H1), lambda b, t: (0, 0)),
            pl.BlockSpec((H1, H2), lambda b, t: (0, 0)),
            pl.BlockSpec((1, H2), lambda b, t: (0, 0)),
        ],
        out_specs=pl.BlockSpec((1, m_pad, H2), lambda b, t: (b, 0, 0)),
        compiler_params=pltpu.CompilerParams(
            dimension_semantics=("parallel", "arbitrary"),
            vmem_limit_bytes=_vmem_limit_bytes(rt, Cin, H1, H2, m_pad)),
    )(feats_rows, mask_rows,
      w1.astype(jnp.bfloat16), b1.reshape(1, H1).astype(jnp.float32),
      w2.astype(jnp.bfloat16), b2.reshape(1, H2).astype(jnp.float32))
    return out[:, :M, :]


# ----------------------------------------------------------------------------
# Plain-JAX glue: FPS, radius neighbour search, slot-major edge assembly.
# ----------------------------------------------------------------------------
def fps_dense(pos, n_samples):
    """Farthest point sampling per graph.  pos: (B, N, 3) -> idx: (B, M)."""
    # TODO(synk): torch_geometric fps uses a random start point; we start from
    # point 0 (== random_start=False).  Also serial O(M*N) per graph -- this is
    # the remaining wall-clock wall for large N once the kernel is tuned.
    def one(p):
        d0 = jnp.sum((p - p[0]) ** 2, axis=-1)

        def body(i, state):
            idx, dists = state
            nxt = jnp.argmax(dists).astype(jnp.int32)
            idx = idx.at[i].set(nxt)
            d = jnp.sum((p - p[nxt]) ** 2, axis=-1)
            return idx, jnp.minimum(dists, d)

        idx0 = jnp.zeros((n_samples,), jnp.int32)
        idx, _ = jax.lax.fori_loop(1, n_samples, body, (idx0, d0))
        return idx

    return jax.vmap(one)(pos)


def radius_dense(points, centroids, r, max_nbrs):
    """For each centroid, up to `max_nbrs` points within radius r (first-by-index).
    points: (B, N, 3), centroids: (B, M, 3) -> (nbr_idx (B,M,K), valid (B,M,K)).
    NOTE: PyG's `radius` may pick a different subset when > max_nbrs neighbours
    exist; we keep the lowest-index ones (semantic difference on dense clouds)."""
    B, N, _ = points.shape
    d2 = jnp.sum((centroids[:, :, None, :] - points[:, None, :, :]) ** 2, axis=-1)
    within = d2 <= r * r
    order = jnp.arange(N, dtype=jnp.int32)
    key = jnp.where(within, N - order[None, None, :], 0)
    vals, nbr = jax.lax.top_k(key, max_nbrs)        # picks smallest valid indices
    valid = vals > 0
    nbr = jnp.where(valid, nbr, 0).astype(jnp.int32)
    return nbr, valid


def point_conv_stage(x, pos, ratio, r, params, max_nbrs=16):
    """One PointNetPP stage: FPS -> radius graph -> PointConv (edge MLP + max)."""
    B, N, Cin = x.shape
    M = int(math.ceil(ratio * N))

    idx = fps_dense(pos, M)                                            # (B, M)
    centroids = jnp.take_along_axis(pos, idx[..., None], axis=1)       # (B, M, 3)
    nbr, valid = radius_dense(pos, centroids, r, max_nbrs)             # (B, M, 16)

    # torch_geometric PointNetConv(add_self_loops=True):
    #   remove edges where source-index == target-ordinal, then add (i, i).
    # NOTE: this mirrors PyG's quirk exactly -- the appended "self" source is
    # point i of the *full* cloud, not the FPS-selected centroid idx[i].
    ordinal = jnp.arange(M, dtype=jnp.int32)[None, :, None]            # (1, M, 1)
    valid = valid & (nbr != ordinal)
    nbr = jnp.concatenate([nbr, jnp.broadcast_to(ordinal, (B, M, 1))], axis=-1)
    valid = jnp.concatenate([valid, jnp.ones((B, M, 1), bool)], axis=-1)
    K = max_nbrs + 1

    # Slot-major gather: transpose the (cheap, int32) index tensor, not the big
    # gathered edge tensor, and gather features directly in bf16 so the
    # K-duplicated edge array hits HBM exactly once, already in kernel layout.
    # TODO(synk): the gather itself could move into the kernel via
    # PrefetchScalarGridSpec (nbr indices in SMEM, x/pos as pl.ANY) to avoid
    # materializing the edge tensor at all.
    nbr_t = jnp.transpose(nbr, (0, 2, 1)).reshape(B, K * M, 1)         # (B, K*M, 1)
    valid_t = jnp.transpose(valid, (0, 2, 1))                          # (B, K, M)
    x_j = jnp.take_along_axis(x.astype(jnp.bfloat16), nbr_t, axis=1)
    x_j = x_j.reshape(B, K, M, Cin)
    pos_j = jnp.take_along_axis(pos, nbr_t, axis=1).reshape(B, K, M, 3)
    rel = (pos_j - centroids[:, None, :, :]).astype(jnp.bfloat16)      # f32 sub, bf16 cast
    msg = jnp.concatenate([x_j, rel], axis=-1)                         # (B, K, M, Cin+3) bf16

    w1, b1, w2, b2 = params
    out = edge_mlp_max(msg, valid_t, w1, b1, w2, b2)                   # (B, M, H2)
    return out, centroids


def global_pool_stage(x, pos, params):
    """GlobalPool: per-node MLP on cat([x, pos]) then global max pool per graph.
    Reuses the edge kernel with a single target and the M nodes as 'slots':
    one (M, Cp)x(Cp, H1) matmul per graph + an in-kernel row reduce."""
    B, M, C = x.shape
    feats = jnp.concatenate([x, pos], axis=-1).astype(jnp.bfloat16)    # (B, M, C+3)
    feats = feats[:, :, None, :]                                       # (B, M(slots), 1, C+3)
    mask = jnp.ones((B, M, 1), bool)
    w1, b1, w2, b2 = params
    out = edge_mlp_max(feats, mask, w1, b1, w2, b2)                    # (B, 1, 512)
    return out[:, 0, :]


# ----------------------------------------------------------------------------
# Parameter init (deterministic, PyTorch-Linear-like uniform).
# ----------------------------------------------------------------------------
def init_mlp_params(key, dims):
    params = []
    for i in range(1, len(dims)):
        key, k1, k2 = jax.random.split(key, 3)
        bound = 1.0 / math.sqrt(dims[i - 1])
        w = jax.random.uniform(k1, (dims[i - 1], dims[i]), jnp.float32, -bound, bound)
        b = jax.random.uniform(k2, (dims[i],), jnp.float32, -bound, bound)
        params.append((w, b))
    return params


def _prep(two_layer_params):
    """Keep exact (unpadded) shapes; weights in bf16 for the MXU, biases in f32."""
    (w1, b1), (w2, b2) = two_layer_params
    return (w1.astype(jnp.bfloat16), b1, w2.astype(jnp.bfloat16), b2)


class MMGraphExtractorPallas:
    """JAX/Pallas port of MMGraphExtractor (output: per-graph 512-d shape code)."""

    def __init__(self, key):
        k1, k2, k3 = jax.random.split(key, 3)
        # MLP([1+3, 64, 256]), MLP([256+3, 256, 384]), MLP([384+3, 384, 512])
        self.mlp1 = _prep(init_mlp_params(k1, [1 + 3, 64, 256]))
        self.mlp2 = _prep(init_mlp_params(k2, [256 + 3, 256, 384]))
        self.mlp3 = _prep(init_mlp_params(k3, [384 + 3, 384, 512]))
        self._forward = jax.jit(self._forward_impl)

    def _forward_impl(self, pos, score):
        score = score.reshape(score.shape[0], -1, 1)                   # (B, N, 1)
        x1, pos1 = point_conv_stage(score, pos, 0.25, 1.0, self.mlp1)
        x2, pos2 = point_conv_stage(x1, pos1, 0.25, 2.0, self.mlp2)
        return global_pool_stage(x2, pos2, self.mlp3)                  # (B, 512)

    def __call__(self, fea, pos, score, pi=None):
        # `fea` is unused by the reference forward; `pi` is implicit in the
        # dense [B, N, ...] layout (every graph has N points).
        del fea, pi
        return self._forward(pos, score)


if __name__ == "__main__":
    key = jax.random.PRNGKey(0)
    kpos, kscore, kfea, kparam = jax.random.split(key, 4)

    B, N = 2, 64
    pos = jax.random.uniform(kpos, (B, N, 3), jnp.float32)
    score = jax.random.uniform(kscore, (B, N), jnp.float32)
    fea = jax.random.normal(kfea, (B, N, 8), jnp.float32)   # unused by forward

    model = MMGraphExtractorPallas(kparam)
    out = model(fea, pos, score)
    out = jax.block_until_ready(out)

    assert out.shape == (B, 512), out.shape
    assert bool(jnp.all(jnp.isfinite(out)))
    print("KERNEL_OK")
</pallas_src>

<mosaic_0001>
module attributes {stable_mosaic.version = 11 : i64} {
  func.func @edge_mlp_max_kernel(%arg0: i32, %arg1: i32, %arg2: memref<1x272x4xbf16, #tpu.memory_space<vmem>>, %arg3: memref<1x272x1xbf16, #tpu.memory_space<vmem>>, %arg4: memref<4x64xbf16, #tpu.memory_space<vmem>>, %arg5: memref<1x64xf32, #tpu.memory_space<vmem>>, %arg6: memref<64x256xbf16, #tpu.memory_space<vmem>>, %arg7: memref<1x256xf32, #tpu.memory_space<vmem>>, %arg8: memref<1x16x256xf32, #tpu.memory_space<vmem>>) attributes {dimension_semantics = [#tpu.dimension_semantics<parallel>, #tpu.dimension_semantics<arbitrary>], iteration_bounds = array<i64: 2, 1>, scalar_prefetch = 0 : i64, scratch_operands = 0 : i64, tpu.core_type = #tpu.core_type<tc>, window_params = [{transform_indices = @transform_0, window_bounds = array<i64: 1, 272, 4>}, {transform_indices = @transform_1, window_bounds = array<i64: 1, 272, 1>}, {pipeline_mode = #tpu.pipeline_mode<synchronous>, transform_indices = @transform_2, window_bounds = array<i64: 4, 64>}, {pipeline_mode = #tpu.pipeline_mode<synchronous>, transform_indices = @transform_3, window_bounds = array<i64: 1, 64>}, {pipeline_mode = #tpu.pipeline_mode<synchronous>, transform_indices = @transform_4, window_bounds = array<i64: 64, 256>}, {pipeline_mode = #tpu.pipeline_mode<synchronous>, transform_indices = @transform_5, window_bounds = array<i64: 1, 256>}, {transform_indices = @transform_6, window_bounds = array<i64: 1, 16, 256>}]} {
    %c0_i32 = arith.constant 0 : i32
    %0 = arith.cmpi eq, %arg1, %c0_i32 : i32
    %1 = arith.extui %0 : i1 to i32
    %c0_i32_0 = arith.constant 0 : i32
    %2 = arith.cmpi ne, %1, %c0_i32_0 : i32
    scf.if %2 {
      %cst_24 = arith.constant 0.000000e+00 : f32
      %33 = vector.broadcast %cst_24 : f32 to vector<1x16x256xf32>
      %c0_25 = arith.constant 0 : index
      %c0_26 = arith.constant 0 : index
      %c0_27 = arith.constant 0 : index
      %34 = vector.load %arg8[%c0_25, %c0_26, %c0_27] : memref<1x16x256xf32, #tpu.memory_space<vmem>>, vector<1x16x256xf32>
      tpu.vector_store %arg8[%c0_25, %c0_26, %c0_27], %33 {strides = array<i32>} : memref<1x16x256xf32, #tpu.memory_space<vmem>>, vector<1x16x256xf32>,
    } else {
    }
    %c0 = arith.constant 0 : index
    %c0_1 = arith.constant 0 : index
    %c0_2 = arith.constant 0 : index
    %3 = vector.load %arg2[%c0, %c0_1, %c0_2] : memref<1x272x4xbf16, #tpu.memory_space<vmem>>, vector<1x272x4xbf16>
    %4 = vector.shape_cast %3 : vector<1x272x4xbf16> to vector<272x4xbf16>
    %c0_3 = arith.constant 0 : index
    %c0_4 = arith.constant 0 : index
    %5 = vector.load %arg4[%c0_3, %c0_4] : memref<4x64xbf16, #tpu.memory_space<vmem>>, vector<4x64xbf16>
    %cst = arith.constant dense<0.000000e+00> : vector<272x64xf32>
    %6 = tpu.matmul %4, %5, %cst {dimension_numbers = #tpu.dot_dimension_numbers<[1], [0], [0], [1], [0, 0, 1, 1], [], []>} : vector<272x4xbf16>, vector<4x64xbf16>, vector<272x64xf32> -> vector<272x64xf32>
    %c0_5 = arith.constant 0 : index
    %c0_6 = arith.constant 0 : index
    %7 = vector.load %arg5[%c0_5, %c0_6] : memref<1x64xf32, #tpu.memory_space<vmem>>, vector<1x64xf32>
    %8 = vector.broadcast %7 : vector<1x64xf32> to vector<272x64xf32>
    %9 = arith.addf %6, %8 : vector<272x64xf32>
    %cst_7 = arith.constant 0.000000e+00 : f32
    %10 = vector.broadcast %cst_7 : f32 to vector<272x64xf32>
    %11 = arith.maximumf %9, %10 : vector<272x64xf32>
    %12 = arith.truncf %11 : vector<272x64xf32> to vector<272x64xbf16>
    %c0_8 = arith.constant 0 : index
    %c0_9 = arith.constant 0 : index
    %13 = vector.load %arg6[%c0_8, %c0_9] : memref<64x256xbf16, #tpu.memory_space<vmem>>, vector<64x256xbf16>
    %cst_10 = arith.constant dense<0.000000e+00> : vector<272x256xf32>
    %14 = tpu.matmul %12, %13, %cst_10 {dimension_numbers = #tpu.dot_dimension_numbers<[1], [0], [0], [1], [0, 0, 1, 1], [], []>} : vector<272x64xbf16>, vector<64x256xbf16>, vector<272x256xf32> -> vector<272x256xf32>
    %c0_11 = arith.constant 0 : index
    %c0_12 = arith.constant 0 : index
    %15 = vector.load %arg7[%c0_11, %c0_12] : memref<1x256xf32, #tpu.memory_space<vmem>>, vector<1x256xf32>
    %16 = vector.broadcast %15 : vector<1x256xf32> to vector<272x256xf32>
    %17 = arith.addf %14, %16 : vector<272x256xf32>
    %cst_13 = arith.constant 0.000000e+00 : f32
    %18 = vector.broadcast %cst_13 : f32 to vector<272x256xf32>
    %19 = arith.maximumf %17, %18 : vector<272x256xf32>
    %c0_14 = arith.constant 0 : index
    %c0_15 = arith.constant 0 : index
    %c0_16 = arith.constant 0 : index
    %20 = vector.load %arg3[%c0_14, %c0_15, %c0_16] : memref<1x272x1xbf16, #tpu.memory_space<vmem>>, vector<1x272x1xbf16>
    %21 = vector.shape_cast %20 : vector<1x272x1xbf16> to vector<272x1xbf16>
    %22 = arith.extf %21 : vector<272x1xbf16> to vector<272x1xf32>
    %23 = vector.broadcast %22 : vector<272x1xf32> to vector<272x256xf32>
    %24 = arith.mulf %19, %23 : vector<272x256xf32>
    %25 = vector.shape_cast %24 : vector<272x256xf32> to vector<17x16x256xf32>
    %cst_17 = arith.constant dense<0xFF800000> : vector<16x256xf32>
    %26 = vector.multi_reduction <maximumf>, %25, %cst_17 [0] : vector<17x16x256xf32> to vector<16x256xf32>
    %c0_18 = arith.constant 0 : index
    %c0_19 = arith.constant 0 : index
    %c0_20 = arith.constant 0 : index
    %27 = vector.load %arg8[%c0_18, %c0_19, %c0_20] : memref<1x16x256xf32, #tpu.memory_space<vmem>>, vector<1x16x256xf32>
    %28 = vector.shape_cast %27 : vector<1x16x256xf32> to vector<16x256xf32>
    %29 = arith.maximumf %28, %26 : vector<16x256xf32>
    %c0_21 = arith.constant 0 : index
    %c0_22 = arith.constant 0 : index
    %c0_23 = arith.constant 0 : index
    %30 = vector.load %arg8[%c0_21, %c0_22, %c0_23] : memref<1x16x256xf32, #tpu.memory_space<vmem>>, vector<1x16x256xf32>
    %31 = vector.shape_cast %30 : vector<1x16x256xf32> to vector<16x256xf32>
    %32 = vector.shape_cast %29 : vector<16x256xf32> to vector<1x16x256xf32>
    tpu.vector_store %arg8[%c0_21, %c0_22, %c0_23], %32 {strides = array<i32>} : memref<1x16x256xf32, #tpu.memory_space<vmem>>, vector<1x16x256xf32>,
    return
  }
  func.func @transform_0(%arg0: i32, %arg1: i32) -> (i32, i32, i32) {
    %c0_i32 = arith.constant 0 : i32
    %c0_i32_0 = arith.constant 0 : i32
    return %arg0, %arg1, %c0_i32 : i32, i32, i32
  }
  func.func @transform_1(%arg0: i32, %arg1: i32) -> (i32, i32, i32) {
    %c0_i32 = arith.constant 0 : i32
    %c0_i32_0 = arith.constant 0 : i32
    return %arg0, %arg1, %c0_i32 : i32, i32, i32
  }
  func.func @transform_2(%arg0: i32, %arg1: i32) -> (i32, i32) {
    %c0_i32 = arith.constant 0 : i32
    %c0_i32_0 = arith.constant 0 : i32
    %c0_i32_1 = arith.constant 0 : i32
    return %c0_i32, %c0_i32_0 : i32, i32
  }
  func.func @transform_3(%arg0: i32, %arg1: i32) -> (i32, i32) {
    %c0_i32 = arith.constant 0 : i32
    %c0_i32_0 = arith.constant 0 : i32
    %c0_i32_1 = arith.constant 0 : i32
    return %c0_i32, %c0_i32_0 : i32, i32
  }
  func.func @transform_4(%arg0: i32, %arg1: i32) -> (i32, i32) {
    %c0_i32 = arith.constant 0 : i32
    %c0_i32_0 = arith.constant 0 : i32
    %c0_i32_1 = arith.constant 0 : i32
    return %c0_i32, %c0_i32_0 : i32, i32
  }
  func.func @transform_5(%arg0: i32, %arg1: i32) -> (i32, i32) {
    %c0_i32 = arith.constant 0 : i32
    %c0_i32_0 = arith.constant 0 : i32
    %c0_i32_1 = arith.constant 0 : i32
    return %c0_i32, %c0_i32_0 : i32, i32
  }
  func.func @transform_6(%arg0: i32, %arg1: i32) -> (i32, i32, i32) {
    %c0_i32 = arith.constant 0 : i32
    %c0_i32_0 = arith.constant 0 : i32
    %c0_i32_1 = arith.constant 0 : i32
    return %arg0, %c0_i32, %c0_i32_0 : i32, i32, i32
  }
}

module attributes {stable_mosaic.version = 11 : i64} {
  func.func @edge_mlp_max_kernel(%arg0: i32, %arg1: i32, %arg2: memref<1x136x259xbf16, #tpu.memory_space<vmem>>, %arg3: memref<1x136x1xbf16, #tpu.memory_space<vmem>>, %arg4: memref<259x256xbf16, #tpu.memory_space<vmem>>, %arg5: memref<1x256xf32, #tpu.memory_space<vmem>>, %arg6: memref<256x384xbf16, #tpu.memory_space<vmem>>, %arg7: memref<1x384xf32, #tpu.memory_space<vmem>>, %arg8: memref<1x8x384xf32, #tpu.memory_space<vmem>>) attributes {dimension_semantics = [#tpu.dimension_semantics<parallel>, #tpu.dimension_semantics<arbitrary>], iteration_bounds = array<i64: 2, 1>, scalar_prefetch = 0 : i64, scratch_operands = 0 : i64, tpu.core_type = #tpu.core_type<tc>, window_params = [{transform_indices = @transform_0, window_bounds = array<i64: 1, 136, 259>}, {transform_indices = @transform_1, window_bounds = array<i64: 1, 136, 1>}, {pipeline_mode = #tpu.pipeline_mode<synchronous>, transform_indices = @transform_2, window_bounds = array<i64: 259, 256>}, {pipeline_mode = #tpu.pipeline_mode<synchronous>, transform_indices = @transform_3, window_bounds = array<i64: 1, 256>}, {pipeline_mode = #tpu.pipeline_mode<synchronous>, transform_indices = @transform_4, window_bounds = array<i64: 256, 384>}, {pipeline_mode = #tpu.pipeline_mode<synchronous>, transform_indices = @transform_5, window_bounds = array<i64: 1, 384>}, {transform_indices = @transform_6, window_bounds = array<i64: 1, 8, 384>}]} {
    %c0_i32 = arith.constant 0 : i32
    %0 = arith.cmpi eq, %arg1, %c0_i32 : i32
    %1 = arith.extui %0 : i1 to i32
    %c0_i32_0 = arith.constant 0 : i32
    %2 = arith.cmpi ne, %1, %c0_i32_0 : i32
    scf.if %2 {
      %cst_24 = arith.constant 0.000000e+00 : f32
      %33 = vector.broadcast %cst_24 : f32 to vector<1x8x384xf32>
      %c0_25 = arith.constant 0 : index
      %c0_26 = arith.constant 0 : index
      %c0_27 = arith.constant 0 : index
      %34 = vector.load %arg8[%c0_25, %c0_26, %c0_27] : memref<1x8x384xf32, #tpu.memory_space<vmem>>, vector<1x8x384xf32>
      tpu.vector_store %arg8[%c0_25, %c0_26, %c0_27], %33 {strides = array<i32>} : memref<1x8x384xf32, #tpu.memory_space<vmem>>, vector<1x8x384xf32>,
    } else {
    }
    %c0 = arith.constant 0 : index
    %c0_1 = arith.constant 0 : index
    %c0_2 = arith.constant 0 : index
    %3 = vector.load %arg2[%c0, %c0_1, %c0_2] : memref<1x136x259xbf16, #tpu.memory_space<vmem>>, vector<1x136x259xbf16>
    %4 = vector.shape_cast %3 : vector<1x136x259xbf16> to vector<136x259xbf16>
    %c0_3 = arith.constant 0 : index
    %c0_4 = arith.constant 0 : index
    %5 = vector.load %arg4[%c0_3, %c0_4] : memref<259x256xbf16, #tpu.memory_space<vmem>>, vector<259x256xbf16>
    %cst = arith.constant dense<0.000000e+00> : vector<136x256xf32>
    %6 = tpu.matmul %4, %5, %cst {dimension_numbers = #tpu.dot_dimension_numbers<[1], [0], [0], [1], [0, 0, 1, 1], [], []>} : vector<136x259xbf16>, vector<259x256xbf16>, vector<136x256xf32> -> vector<136x256xf32>
    %c0_5 = arith.constant 0 : index
    %c0_6 = arith.constant 0 : index
    %7 = vector.load %arg5[%c0_5, %c0_6] : memref<1x256xf32, #tpu.memory_space<vmem>>, vector<1x256xf32>
    %8 = vector.broadcast %7 : vector<1x256xf32> to vector<136x256xf32>
    %9 = arith.addf %6, %8 : vector<136x256xf32>
    %cst_7 = arith.constant 0.000000e+00 : f32
    %10 = vector.broadcast %cst_7 : f32 to vector<136x256xf32>
    %11 = arith.maximumf %9, %10 : vector<136x256xf32>
    %12 = arith.truncf %11 : vector<136x256xf32> to vector<136x256xbf16>
    %c0_8 = arith.constant 0 : index
    %c0_9 = arith.constant 0 : index
    %13 = vector.load %arg6[%c0_8, %c0_9] : memref<256x384xbf16, #tpu.memory_space<vmem>>, vector<256x384xbf16>
    %cst_10 = arith.constant dense<0.000000e+00> : vector<136x384xf32>
    %14 = tpu.matmul %12, %13, %cst_10 {dimension_numbers = #tpu.dot_dimension_numbers<[1], [0], [0], [1], [0, 0, 1, 1], [], []>} : vector<136x256xbf16>, vector<256x384xbf16>, vector<136x384xf32> -> vector<136x384xf32>
    %c0_11 = arith.constant 0 : index
    %c0_12 = arith.constant 0 : index
    %15 = vector.load %arg7[%c0_11, %c0_12] : memref<1x384xf32, #tpu.memory_space<vmem>>, vector<1x384xf32>
    %16 = vector.broadcast %15 : vector<1x384xf32> to vector<136x384xf32>
    %17 = arith.addf %14, %16 : vector<136x384xf32>
    %cst_13 = arith.constant 0.000000e+00 : f32
    %18 = vector.broadcast %cst_13 : f32 to vector<136x384xf32>
    %19 = arith.maximumf %17, %18 : vector<136x384xf32>
    %c0_14 = arith.constant 0 : index
    %c0_15 = arith.constant 0 : index
    %c0_16 = arith.constant 0 : index
    %20 = vector.load %arg3[%c0_14, %c0_15, %c0_16] : memref<1x136x1xbf16, #tpu.memory_space<vmem>>, vector<1x136x1xbf16>
    %21 = vector.shape_cast %20 : vector<1x136x1xbf16> to vector<136x1xbf16>
    %22 = arith.extf %21 : vector<136x1xbf16> to vector<136x1xf32>
    %23 = vector.broadcast %22 : vector<136x1xf32> to vector<136x384xf32>
    %24 = arith.mulf %19, %23 : vector<136x384xf32>
    %25 = vector.shape_cast %24 : vector<136x384xf32> to vector<17x8x384xf32>
    %cst_17 = arith.constant dense<0xFF800000> : vector<8x384xf32>
    %26 = vector.multi_reduction <maximumf>, %25, %cst_17 [0] : vector<17x8x384xf32> to vector<8x384xf32>
    %c0_18 = arith.constant 0 : index
    %c0_19 = arith.constant 0 : index
    %c0_20 = arith.constant 0 : index
    %27 = vector.load %arg8[%c0_18, %c0_19, %c0_20] : memref<1x8x384xf32, #tpu.memory_space<vmem>>, vector<1x8x384xf32>
    %28 = vector.shape_cast %27 : vector<1x8x384xf32> to vector<8x384xf32>
    %29 = arith.maximumf %28, %26 : vector<8x384xf32>
    %c0_21 = arith.constant 0 : index
    %c0_22 = arith.constant 0 : index
    %c0_23 = arith.constant 0 : index
    %30 = vector.load %arg8[%c0_21, %c0_22, %c0_23] : memref<1x8x384xf32, #tpu.memory_space<vmem>>, vector<1x8x384xf32>
    %31 = vector.shape_cast %30 : vector<1x8x384xf32> to vector<8x384xf32>
    %32 = vector.shape_cast %29 : vector<8x384xf32> to vector<1x8x384xf32>
    tpu.vector_store %arg8[%c0_21, %c0_22, %c0_23], %32 {strides = array<i32>} : memref<1x8x384xf32, #tpu.memory_space<vmem>>, vector<1x8x384xf32>,
    return
  }
  func.func @transform_0(%arg0: i32, %arg1: i32) -> (i32, i32, i32) {
    %c0_i32 = arith.constant 0 : i32
    %c0_i32_0 = arith.constant 0 : i32
    return %arg0, %arg1, %c0_i32 : i32, i32, i32
  }
  func.func @transform_1(%arg0: i32, %arg1: i32) -> (i32, i32, i32) {
    %c0_i32 = arith.constant 0 : i32
    %c0_i32_0 = arith.constant 0 : i32
    return %arg0, %arg1, %c0_i32 : i32, i32, i32
  }
  func.func @transform_2(%arg0: i32, %arg1: i32) -> (i32, i32) {
    %c0_i32 = arith.constant 0 : i32
    %c0_i32_0 = arith.constant 0 : i32
    %c0_i32_1 = arith.constant 0 : i32
    return %c0_i32, %c0_i32_0 : i32, i32
  }
  func.func @transform_3(%arg0: i32, %arg1: i32) -> (i32, i32) {
    %c0_i32 = arith.constant 0 : i32
    %c0_i32_0 = arith.constant 0 : i32
    %c0_i32_1 = arith.constant 0 : i32
    return %c0_i32, %c0_i32_0 : i32, i32
  }
  func.func @transform_4(%arg0: i32, %arg1: i32) -> (i32, i32) {
    %c0_i32 = arith.constant 0 : i32
    %c0_i32_0 = arith.constant 0 : i32
    %c0_i32_1 = arith.constant 0 : i32
    return %c0_i32, %c0_i32_0 : i32, i32
  }
  func.func @transform_5(%arg0: i32, %arg1: i32) -> (i32, i32) {
    %c0_i32 = arith.constant 0 : i32
    %c0_i32_0 = arith.constant 0 : i32
    %c0_i32_1 = arith.constant 0 : i32
    return %c0_i32, %c0_i32_0 : i32, i32
  }
  func.func @transform_6(%arg0: i32, %arg1: i32) -> (i32, i32, i32) {
    %c0_i32 = arith.constant 0 : i32
    %c0_i32_0 = arith.constant 0 : i32
    %c0_i32_1 = arith.constant 0 : i32
    return %arg0, %c0_i32, %c0_i32_0 : i32, i32, i32
  }
}

module attributes {stable_mosaic.version = 11 : i64} {
  func.func @edge_mlp_max_kernel(%arg0: i32, %arg1: i32, %arg2: memref<1x4x387xbf16, #tpu.memory_space<vmem>>, %arg3: memref<1x4x1xbf16, #tpu.memory_space<vmem>>, %arg4: memref<387x384xbf16, #tpu.memory_space<vmem>>, %arg5: memref<1x384xf32, #tpu.memory_space<vmem>>, %arg6: memref<384x512xbf16, #tpu.memory_space<vmem>>, %arg7: memref<1x512xf32, #tpu.memory_space<vmem>>, %arg8: memref<1x1x512xf32, #tpu.memory_space<vmem>>) attributes {dimension_semantics = [#tpu.dimension_semantics<parallel>, #tpu.dimension_semantics<arbitrary>], iteration_bounds = array<i64: 2, 1>, scalar_prefetch = 0 : i64, scratch_operands = 0 : i64, tpu.core_type = #tpu.core_type<tc>, window_params = [{transform_indices = @transform_0, window_bounds = array<i64: 1, 4, 387>}, {transform_indices = @transform_1, window_bounds = array<i64: 1, 4, 1>}, {pipeline_mode = #tpu.pipeline_mode<synchronous>, transform_indices = @transform_2, window_bounds = array<i64: 387, 384>}, {pipeline_mode = #tpu.pipeline_mode<synchronous>, transform_indices = @transform_3, window_bounds = array<i64: 1, 384>}, {pipeline_mode = #tpu.pipeline_mode<synchronous>, transform_indices = @transform_4, window_bounds = array<i64: 384, 512>}, {pipeline_mode = #tpu.pipeline_mode<synchronous>, transform_indices = @transform_5, window_bounds = array<i64: 1, 512>}, {transform_indices = @transform_6, window_bounds = array<i64: 1, 1, 512>}]} {
    %c0_i32 = arith.constant 0 : i32
    %0 = arith.cmpi eq, %arg1, %c0_i32 : i32
    %1 = arith.extui %0 : i1 to i32
    %c0_i32_0 = arith.constant 0 : i32
    %2 = arith.cmpi ne, %1, %c0_i32_0 : i32
    scf.if %2 {
      %cst_24 = arith.constant 0.000000e+00 : f32
      %33 = vector.broadcast %cst_24 : f32 to vector<1x1x512xf32>
      %c0_25 = arith.constant 0 : index
      %c0_26 = arith.constant 0 : index
      %c0_27 = arith.constant 0 : index
      %34 = vector.load %arg8[%c0_25, %c0_26, %c0_27] : memref<1x1x512xf32, #tpu.memory_space<vmem>>, vector<1x1x512xf32>
      tpu.vector_store %arg8[%c0_25, %c0_26, %c0_27], %33 {strides = array<i32>} : memref<1x1x512xf32, #tpu.memory_space<vmem>>, vector<1x1x512xf32>,
    } else {
    }
    %c0 = arith.constant 0 : index
    %c0_1 = arith.constant 0 : index
    %c0_2 = arith.constant 0 : index
    %3 = vector.load %arg2[%c0, %c0_1, %c0_2] : memref<1x4x387xbf16, #tpu.memory_space<vmem>>, vector<1x4x387xbf16>
    %4 = vector.shape_cast %3 : vector<1x4x387xbf16> to vector<4x387xbf16>
    %c0_3 = arith.constant 0 : index
    %c0_4 = arith.constant 0 : index
    %5 = vector.load %arg4[%c0_3, %c0_4] : memref<387x384xbf16, #tpu.memory_space<vmem>>, vector<387x384xbf16>
    %cst = arith.constant dense<0.000000e+00> : vector<4x384xf32>
    %6 = tpu.matmul %4, %5, %cst {dimension_numbers = #tpu.dot_dimension_numbers<[1], [0], [0], [1], [0, 0, 1, 1], [], []>} : vector<4x387xbf16>, vector<387x384xbf16>, vector<4x384xf32> -> vector<4x384xf32>
    %c0_5 = arith.constant 0 : index
    %c0_6 = arith.constant 0 : index
    %7 = vector.load %arg5[%c0_5, %c0_6] : memref<1x384xf32, #tpu.memory_space<vmem>>, vector<1x384xf32>
    %8 = vector.broadcast %7 : vector<1x384xf32> to vector<4x384xf32>
    %9 = arith.addf %6, %8 : vector<4x384xf32>
    %cst_7 = arith.constant 0.000000e+00 : f32
    %10 = vector.broadcast %cst_7 : f32 to vector<4x384xf32>
    %11 = arith.maximumf %9, %10 : vector<4x384xf32>
    %12 = arith.truncf %11 : vector<4x384xf32> to vector<4x384xbf16>
    %c0_8 = arith.constant 0 : index
    %c0_9 = arith.constant 0 : index
    %13 = vector.load %arg6[%c0_8, %c0_9] : memref<384x512xbf16, #tpu.memory_space<vmem>>, vector<384x512xbf16>
    %cst_10 = arith.constant dense<0.000000e+00> : vector<4x512xf32>
    %14 = tpu.matmul %12, %13, %cst_10 {dimension_numbers = #tpu.dot_dimension_numbers<[1], [0], [0], [1], [0, 0, 1, 1], [], []>} : vector<4x384xbf16>, vector<384x512xbf16>, vector<4x512xf32> -> vector<4x512xf32>
    %c0_11 = arith.constant 0 : index
    %c0_12 = arith.constant 0 : index
    %15 = vector.load %arg7[%c0_11, %c0_12] : memref<1x512xf32, #tpu.memory_space<vmem>>, vector<1x512xf32>
    %16 = vector.broadcast %15 : vector<1x512xf32> to vector<4x512xf32>
    %17 = arith.addf %14, %16 : vector<4x512xf32>
    %cst_13 = arith.constant 0.000000e+00 : f32
    %18 = vector.broadcast %cst_13 : f32 to vector<4x512xf32>
    %19 = arith.maximumf %17, %18 : vector<4x512xf32>
    %c0_14 = arith.constant 0 : index
    %c0_15 = arith.constant 0 : index
    %c0_16 = arith.constant 0 : index
    %20 = vector.load %arg3[%c0_14, %c0_15, %c0_16] : memref<1x4x1xbf16, #tpu.memory_space<vmem>>, vector<1x4x1xbf16>
    %21 = vector.shape_cast %20 : vector<1x4x1xbf16> to vector<4x1xbf16>
    %22 = arith.extf %21 : vector<4x1xbf16> to vector<4x1xf32>
    %23 = vector.broadcast %22 : vector<4x1xf32> to vector<4x512xf32>
    %24 = arith.mulf %19, %23 : vector<4x512xf32>
    %cst_17 = arith.constant dense<0xFF800000> : vector<512xf32>
    %25 = vector.multi_reduction <maximumf>, %24, %cst_17 [0] : vector<4x512xf32> to vector<512xf32>
    %26 = vector.shape_cast %25 : vector<512xf32> to vector<1x512xf32>
    %c0_18 = arith.constant 0 : index
    %c0_19 = arith.constant 0 : index
    %c0_20 = arith.constant 0 : index
    %27 = vector.load %arg8[%c0_18, %c0_19, %c0_20] : memref<1x1x512xf32, #tpu.memory_space<vmem>>, vector<1x1x512xf32>
    %28 = vector.shape_cast %27 : vector<1x1x512xf32> to vector<1x512xf32>
    %29 = arith.maximumf %28, %26 : vector<1x512xf32>
    %c0_21 = arith.constant 0 : index
    %c0_22 = arith.constant 0 : index
    %c0_23 = arith.constant 0 : index
    %30 = vector.load %arg8[%c0_21, %c0_22, %c0_23] : memref<1x1x512xf32, #tpu.memory_space<vmem>>, vector<1x1x512xf32>
    %31 = vector.shape_cast %30 : vector<1x1x512xf32> to vector<1x512xf32>
    %32 = vector.shape_cast %29 : vector<1x512xf32> to vector<1x1x512xf32>
    tpu.vector_store %arg8[%c0_21, %c0_22, %c0_23], %32 {strides = array<i32>} : memref<1x1x512xf32, #tpu.memory_space<vmem>>, vector<1x1x512xf32>,
    return
  }
  func.func @transform_0(%arg0: i32, %arg1: i32) -> (i32, i32, i32) {
    %c0_i32 = arith.constant 0 : i32
    %c0_i32_0 = arith.constant 0 : i32
    return %arg0, %arg1, %c0_i32 : i32, i32, i32
  }
  func.func @transform_1(%arg0: i32, %arg1: i32) -> (i32, i32, i32) {
    %c0_i32 = arith.constant 0 : i32
    %c0_i32_0 = arith.constant 0 : i32
    return %arg0, %arg1, %c0_i32 : i32, i32, i32
  }
  func.func @transform_2(%arg0: i32, %arg1: i32) -> (i32, i32) {
    %c0_i32 = arith.constant 0 : i32
    %c0_i32_0 = arith.constant 0 : i32
    %c0_i32_1 = arith.constant 0 : i32
    return %c0_i32, %c0_i32_0 : i32, i32
  }
  func.func @transform_3(%arg0: i32, %arg1: i32) -> (i32, i32) {
    %c0_i32 = arith.constant 0 : i32
    %c0_i32_0 = arith.constant 0 : i32
    %c0_i32_1 = arith.constant 0 : i32
    return %c0_i32, %c0_i32_0 : i32, i32
  }
  func.func @transform_4(%arg0: i32, %arg1: i32) -> (i32, i32) {
    %c0_i32 = arith.constant 0 : i32
    %c0_i32_0 = arith.constant 0 : i32
    %c0_i32_1 = arith.constant 0 : i32
    return %c0_i32, %c0_i32_0 : i32, i32
  }
  func.func @transform_5(%arg0: i32, %arg1: i32) -> (i32, i32) {
    %c0_i32 = arith.constant 0 : i32
    %c0_i32_0 = arith.constant 0 : i32
    %c0_i32_1 = arith.constant 0 : i32
    return %c0_i32, %c0_i32_0 : i32, i32
  }
  func.func @transform_6(%arg0: i32, %arg1: i32) -> (i32, i32, i32) {
    %c0_i32 = arith.constant 0 : i32
    %c0_i32_0 = arith.constant 0 : i32
    %c0_i32_1 = arith.constant 0 : i32
    return %arg0, %c0_i32, %c0_i32_0 : i32, i32, i32
  }
}

</mosaic_0001>

<llo_original>
// kernel: _forward_impl.3
$region0: #{_forward_impl.3}
  #allocation0 [shape = 'u32[]', space=smem, size = 0x4, offset = 0x4, fixed_abs, tag = 'smem constant byte address 0x4 - core index']
  #allocation1 [shape = 'u32[144,128]{1,0:T(1,128)}', space=vmem, size = 0x12000, scoped, tag = 'internal scratch']
  %s0 = inlined_call_operand.vmem [shape: bf16[2,272,4], index: 0, kind: input, shape index: {}]
  %s1 = inlined_call_operand.vmem [shape: bf16[2,272,1], index: 1, kind: input, shape index: {}]
  %s2 = inlined_call_operand.vmem [shape: bf16[4,64], index: 2, kind: input, shape index: {}]
  %s3 = inlined_call_operand.vmem [shape: f32[1,64], index: 3, kind: input, shape index: {}]
  %s4 = inlined_call_operand.vmem [shape: bf16[64,256], index: 4, kind: input, shape index: {}]
  %s5 = inlined_call_operand.vmem [shape: f32[1,256], index: 5, kind: input, shape index: {}]
  %s6 = inlined_call_operand.vmem [shape: f32[2,16,256], index: 6, kind: output, shape index: {}]
  %s7 = sld [smem:[#allocation0]]
  $region61: #{_forward_impl.3} parent=0
    _
  %s9 = ssub.s32 1, %s7
  %s10 = scalar_select 0, %s9, %s7
  loop: start=0, step=1, limit=4
  $region2: #{_forward_impl.3} parent=0 // loop_pre_header
    _
  $region3: #{_forward_impl.3} parent=0 // loop_header
    %s12 = sphi 0, %s16
    %p13 = scmp.ge.s32.totalorder %s12, 4
    %s19 = sphi 0, %s31
    %s20 = sphi 0, %s27
    %s21 = sphi 0, %s19
    %s22 = sphi 0, %s20
    %s23 = sphi 0, %s21
    %s24 = sphi 0, %s22
    %s36 = sphi 0, %s38
    %s39 = sphi 0, %s36
    %s40 = sphi 0, %s39
    %s56 = sphi 0, %s40
    %s64 = sphi 0, %s66
    %s67 = sphi 0, %s64
    %s68 = sphi 0, %s67
    %s84 = sphi 0, %s68
    %s88 = sphi 0, %s88
    %s90 = sphi 0, %s88
    %s91 = sphi 0, %s90
    %s105 = sphi 0, %s91
    %s109 = sphi 0, %s109
    %s111 = sphi 0, %s109
    %s112 = sphi 0, %s111
    %s126 = sphi 0, %s112
    %s130 = sphi 0, %s130
    %s132 = sphi 0, %s130
    %s133 = sphi 0, %s132
    %s147 = sphi 0, %s133
    %s151 = sphi 0, %s151
    %s153 = sphi 0, %s151
    %s154 = sphi 0, %s153
    %s168 = sphi 0, %s154
    %s174 = sphi 0, %s176
    %s177 = sphi 0, %s174
    %s178 = sphi 0, %s177
    %s194 = sphi 0, %s178
  $region4: #{_forward_impl.3} parent=0 // loop_header_branch
    %15 = sbr.rel (%p13) target = $region8
  $region5: #{_forward_impl.3} parent=0 // loop_body
    %s17 = ssub.s32 %s12, 1
    %s18 = ssub.s32 %s12, 2
    %s25 = sadd.s32 1, %s20
    %p26 = scmp.ge.s32.totalorder %s25, 1
    %s27 = scalar_select %p26, 0, %s25
    %s28 = sadd.s32 1, %s19
    %s29 = scalar_select %p26, %s28, %s19
    %p30 = scmp.ge.s32.totalorder %s29, 2
    %s31 = scalar_select %p30, 0, %s29
    %s32 = ssub.s32 %s19, %s31
    %s33 = ssub.s32 %s20, %s27
    %s34 = sor.u32 %s32, %s33
    %p35 = scmp.eq.s32.totalorder %s34, 0
    %s37 = sadd.s32 %s36, 1
    %s38 = scalar_select %p35, %s36, %s37
    %p41 = pneg %p35
    %p42 = scmp.eq.s32.totalorder %s12, 1
    %p43 = por %p41, %p42
    %p44 = scmp.ne.s32.totalorder %s36, %s39
    %p45 = scmp.eq.s32.totalorder %s12, 0
    %p46 = por %p44, %p45
    %p47 = scmp.ne.s32.totalorder %s36, %s39
    %p48 = scmp.eq.s32.totalorder %s17, 1
    %p49 = por %p47, %p48
    %p50 = scmp.ne.s32.totalorder %s39, %s40
    %p51 = scmp.eq.s32.totalorder %s17, 0
    %p52 = por %p50, %p51
    %p53 = scmp.ne.s32.totalorder %s39, %s40
    %p54 = scmp.eq.s32.totalorder %s18, 1
    %p55 = por %p53, %p54
    %p57 = scmp.ne.s32.totalorder %s40, %s56
    %p58 = scmp.eq.s32.totalorder %s18, 0
    %p59 = por %p57, %p58
    %s60 = ssub.s32 %s19, %s31
    %s61 = ssub.s32 %s20, %s27
    %s62 = sor.u32 %s60, %s61
    %p63 = scmp.eq.s32.totalorder %s62, 0
    %s65 = sadd.s32 %s64, 1
    %s66 = scalar_select %p63, %s64, %s65
    %p69 = pneg %p63
    %p70 = scmp.eq.s32.totalorder %s12, 1
    %p71 = por %p69, %p70
    %p72 = scmp.ne.s32.totalorder %s64, %s67
    %p73 = scmp.eq.s32.totalorder %s12, 0
    %p74 = por %p72, %p73
    %p75 = scmp.ne.s32.totalorder %s64, %s67
    %p76 = scmp.eq.s32.totalorder %s17, 1
    %p77 = por %p75, %p76
    %p78 = scmp.ne.s32.totalorder %s67, %s68
    %p79 = scmp.eq.s32.totalorder %s17, 0
    %p80 = por %p78, %p79
    %p81 = scmp.ne.s32.totalorder %s67, %s68
    %p82 = scmp.eq.s32.totalorder %s18, 1
    %p83 = por %p81, %p82
    %p85 = scmp.ne.s32.totalorder %s68, %s84
    %p86 = scmp.eq.s32.totalorder %s18, 0
    %p87 = por %p85, %p86
    %s89 = sadd.s32 %s88, 1
    %p92 = scmp.eq.s32.totalorder %s12, 1
    %p93 = scmp.ne.s32.totalorder %s88, %s90
    %p94 = scmp.eq.s32.totalorder %s12, 0
    %p95 = por %p93, %p94
    %p96 = scmp.ne.s32.totalorder %s88, %s90
    %p97 = scmp.eq.s32.totalorder %s17, 1
    %p98 = por %p96, %p97
    %p99 = scmp.ne.s32.totalorder %s90, %s91
    %p100 = scmp.eq.s32.totalorder %s17, 0
    %p101 = por %p99, %p100
    %p102 = scmp.ne.s32.totalorder %s90, %s91
    %p103 = scmp.eq.s32.totalorder %s18, 1
    %p104 = por %p102, %p103
    %p106 = scmp.ne.s32.totalorder %s91, %s105
    %p107 = scmp.eq.s32.totalorder %s18, 0
    %p108 = por %p106, %p107
    %s110 = sadd.s32 %s109, 1
    %p113 = scmp.eq.s32.totalorder %s12, 1
    %p114 = scmp.ne.s32.totalorder %s109, %s111
    %p115 = scmp.eq.s32.totalorder %s12, 0
    %p116 = por %p114, %p115
    %p117 = scmp.ne.s32.totalorder %s109, %s111
    %p118 = scmp.eq.s32.totalorder %s17, 1
    %p119 = por %p117, %p118
    %p120 = scmp.ne.s32.totalorder %s111, %s112
    %p121 = scmp.eq.s32.totalorder %s17, 0
    %p122 = por %p120, %p121
    %p123 = scmp.ne.s32.totalorder %s111, %s112
    %p124 = scmp.eq.s32.totalorder %s18, 1
    %p125 = por %p123, %p124
    %p127 = scmp.ne.s32.totalorder %s112, %s126
    %p128 = scmp.eq.s32.totalorder %s18, 0
    %p129 = por %p127, %p128
    %s131 = sadd.s32 %s130, 1
    %p134 = scmp.eq.s32.totalorder %s12, 1
    %p135 = scmp.ne.s32.totalorder %s130, %s132
    %p136 = scmp.eq.s32.totalorder %s12, 0
    %p137 = por %p135, %p136
    %p138 = scmp.ne.s32.totalorder %s130, %s132
    %p139 = scmp.eq.s32.totalorder %s17, 1
    %p140 = por %p138, %p139
    %p141 = scmp.ne.s32.totalorder %s132, %s133
    %p142 = scmp.eq.s32.totalorder %s17, 0
    %p143 = por %p141, %p142
    %p144 = scmp.ne.s32.totalorder %s132, %s133
    %p145 = scmp.eq.s32.totalorder %s18, 1
    %p146 = por %p144, %p145
    %p148 = scmp.ne.s32.totalorder %s133, %s147
    %p149 = scmp.eq.s32.totalorder %s18, 0
    %p150 = por %p148, %p149
    %s152 = sadd.s32 %s151, 1
    %p155 = scmp.eq.s32.totalorder %s12, 1
    %p156 = scmp.ne.s32.totalorder %s151, %s153
    %p157 = scmp.eq.s32.totalorder %s12, 0
    %p158 = por %p156, %p157
    %p159 = scmp.ne.s32.totalorder %s151, %s153
    %p160 = scmp.eq.s32.totalorder %s17, 1
    %p161 = por %p159, %p160
    %p162 = scmp.ne.s32.totalorder %s153, %s154
    %p163 = scmp.eq.s32.totalorder %s17, 0
    %p164 = por %p162, %p163
    %p165 = scmp.ne.s32.totalorder %s153, %s154
    %p166 = scmp.eq.s32.totalorder %s18, 1
    %p167 = por %p165, %p166
    %p169 = scmp.ne.s32.totalorder %s154, %s168
    %p170 = scmp.eq.s32.totalorder %s18, 0
    %p171 = por %p169, %p170
    %s172 = ssub.s32 %s19, %s31
    %p173 = scmp.eq.s32.totalorder %s172, 0
    %s175 = sadd.s32 %s174, 1
    %s176 = scalar_select %p173, %s174, %s175
    %p179 = pneg %p173
    %p180 = scmp.eq.s32.totalorder %s12, 1
    %p181 = por %p179, %p180
    %p182 = scmp.ne.s32.totalorder %s174, %s177
    %p183 = scmp.eq.s32.totalorder %s12, 0
    %p184 = por %p182, %p183
    %p185 = scmp.ne.s32.totalorder %s174, %s177
    %p186 = scmp.eq.s32.totalorder %s17, 1
    %p187 = por %p185, %p186
    %p188 = scmp.ne.s32.totalorder %s177, %s178
    %p189 = scmp.eq.s32.totalorder %s17, 0
    %p190 = por %p188, %p189
    %p191 = scmp.ne.s32.totalorder %s177, %s178
    %p192 = scmp.eq.s32.totalorder %s18, 1
    %p193 = por %p191, %p192
    %p195 = scmp.ne.s32.totalorder %s178, %s194
    %p196 = scmp.eq.s32.totalorder %s18, 0
    %p197 = por %p195, %p196
    %p198 = scmp.le.s32.totalorder 1, %s12
    %p199 = scmp.lt.s32.totalorder %s12, 3
    %p200 = pnand %p198, %p199
    %p201 = pneg %p200
    // Predicated region
    $region9: #{_forward_impl.3} parent=5 // pred_check
      _
    $region10: #{_forward_impl.3} parent=5 // pred_check_branch
      %203 = sbr.rel (%p200) target = $region12
    $region11: #{_forward_impl.3} parent=5 // pred_region
      %s204 = ssub.s32 %s12, 1
      // Predicated region
      $region13: #{_forward_impl.3} parent=11 // pred_check
        %p205 = pneg %p101
      $region14: #{_forward_impl.3} parent=11 // pred_check_branch
        %207 = sbr.rel (%p205) target = $region16
      $region15: #{_forward_impl.3} parent=11 // pred_region
        _
      $region16: #{_forward_impl.3} parent=11 // pred_fallthru
        _
      // Predicated region
      $region17: #{_forward_impl.3} parent=11 // pred_check
        %p208 = pneg %p122
      $region18: #{_forward_impl.3} parent=11 // pred_check_branch
        %210 = sbr.rel (%p208) target = $region20
      $region19: #{_forward_impl.3} parent=11 // pred_region
        _
      $region20: #{_forward_impl.3} parent=11 // pred_fallthru
        _
      // Predicated region
      $region21: #{_forward_impl.3} parent=11 // pred_check
        %p211 = pneg %p143
      $region22: #{_forward_impl.3} parent=11 // pred_check_branch
        %213 = sbr.rel (%p211) target = $region24
      $region23: #{_forward_impl.3} parent=11 // pred_region
        _
      $region24: #{_forward_impl.3} parent=11 // pred_fallthru
        _
      // Predicated region
      $region25: #{_forward_impl.3} parent=11 // pred_check
        %p214 = pneg %p164
      $region26: #{_forward_impl.3} parent=11 // pred_check_branch
        %216 = sbr.rel (%p214) target = $region28
      $region27: #{_forward_impl.3} parent=11 // pred_region
        _
      $region28: #{_forward_impl.3} parent=11 // pred_fallthru
        _
    $region12: #{_forward_impl.3} parent=5 // pred_fallthru
      _
    %p217 = scmp.lt.s32.totalorder %s12, 2
    // Predicated region
    $region29: #{_forward_impl.3} parent=5 // pred_check
      %p218 = pneg %p217
    $region30: #{_forward_impl.3} parent=5 // pred_check_branch
      %220 = sbr.rel (%p218) target = $region32
    $region31: #{_forward_impl.3} parent=5 // pred_region
      // Predicated region
      $region33: #{_forward_impl.3} parent=31 // pred_check
        %p221 = pneg %p46
      $region34: #{_forward_impl.3} parent=31 // pred_check_branch
        %223 = sbr.rel (%p221) target = $region36
      $region35: #{_forward_impl.3} parent=31 // pred_region
        %s224 = smul.u32 34, %s20
        %p225 = scmp.lt.s32.totalorder %s19, 1
        %s226 = scalar_select %p225, %s19, 1
        %p227 = scmp.lt.s32.totalorder %s224, 33
        %s228 = scalar_select %p227, %s224, 33
        %s229 = smul.addr %s226, 34
        %s230 = sadd.s32 %s228, %s229
        %s231 = smul.addr %s230, 4
        %s232 = scalar_lea.vmem %s0, %s231
        %s233 = smul.u32 34, %s20
      $region36: #{_forward_impl.3} parent=31 // pred_fallthru
        _
      // Predicated region
      $region37: #{_forward_impl.3} parent=31 // pred_check
        %p234 = pneg %p74
      $region38: #{_forward_impl.3} parent=31 // pred_check_branch
        %236 = sbr.rel (%p234) target = $region40
      $region39: #{_forward_impl.3} parent=31 // pred_region
        %s237 = smul.u32 34, %s20
        %p238 = scmp.lt.s32.totalorder %s19, 1
        %s239 = scalar_select %p238, %s19, 1
        %p240 = scmp.lt.s32.totalorder %s237, 33
        %s241 = scalar_select %p240, %s237, 33
        %s242 = smul.addr %s239, 34
        %s243 = sadd.s32 %s241, %s242
        %s244 = smul.addr %s243, 4
        %s245 = scalar_lea.vmem %s1, %s244
        %s246 = smul.u32 34, %s20
      $region40: #{_forward_impl.3} parent=31 // pred_fallthru
        _
    $region32: #{_forward_impl.3} parent=5 // pred_fallthru
      _
    %p247 = scmp.le.s32.totalorder 1, %s12
    %p248 = scmp.lt.s32.totalorder %s12, 3
    %p249 = pnand %p247, %p248
    %p250 = pneg %p249
    // Predicated region
    $region41: #{_forward_impl.3} parent=5 // pred_check
      _
    $region42: #{_forward_impl.3} parent=5 // pred_check_branch
      %252 = sbr.rel (%p249) target = $region44
    $region43: #{_forward_impl.3} parent=5 // pred_region
      %s253 = ssub.s32 %s12, 1
      %s254 = smul.u32 34, %s22
      %p255 = scmp.lt.s32.totalorder %s21, 1
      %s256 = scalar_select %p255, %s21, 1
      %p257 = scmp.lt.s32.totalorder %s254, 33
      %s258 = scalar_select %p257, %s254, 33
      %s259 = smul.addr %s256, 34
      %s260 = sadd.s32 %s258, %s259
      %s261 = smul.addr %s260, 4
      %s262 = scalar_lea.vmem %s0, %s261
      %p263 = pneg %p52
      %p264 = pneg %p49
      %s265 = smul.u32 34, %s22
      %p266 = scmp.lt.s32.totalorder %s21, 1
      %s267 = scalar_select %p266, %s21, 1
      %p268 = scmp.lt.s32.totalorder %s265, 33
      %s269 = scalar_select %p268, %s265, 33
      %s270 = smul.addr %s267, 34
      %s271 = sadd.s32 %s269, %s270
      %s272 = smul.addr %s271, 4
      %s273 = scalar_lea.vmem %s1, %s272
      %p274 = pneg %p80
      %p275 = pneg %p77
      %p276 = pneg %p101
      %p277 = pneg %p98
      %p278 = pneg %p122
      %p279 = pneg %p119
      %p280 = pneg %p143
      %p281 = pneg %p140
      %p282 = pneg %p164
      %p283 = pneg %p161
      %p284 = pneg %p190
      %p285 = pneg %p187
      %p286 = scmp.lt.s32.totalorder %s21, 1
      %s287 = scalar_select %p286, %s21, 1
      %s288 = smul.addr %s287, 4
      %s289 = smul.addr %s288, 8
      %s290 = scalar_lea.vmem %s6, %s289
      %s291 = smul.u32 34, %s22
      %p292 = scmp.lt.s32.totalorder %s21, 1
      %s293 = scalar_select %p292, %s21, 1
      %p294 = scmp.lt.s32.totalorder %s291, 33
      %s295 = scalar_select %p294, %s291, 33
      %s296 = smul.addr %s293, 34
      %s297 = sadd.s32 %s295, %s296
      %s298 = smul.addr %s297, 4
      %s299 = scalar_lea.vmem %s0, %s298
      %s300 = smul.u32 34, %s22
      %s301 = smul.u32 34, %s22
      %p302 = scmp.lt.s32.totalorder %s21, 1
      %s303 = scalar_select %p302, %s21, 1
      %p304 = scmp.lt.s32.totalorder %s301, 33
      %s305 = scalar_select %p304, %s301, 33
      %s306 = smul.addr %s303, 34
      %s307 = sadd.s32 %s305, %s306
      %s308 = smul.addr %s307, 4
      %s309 = scalar_lea.vmem %s1, %s308
      %s310 = smul.u32 34, %s22
      %p311 = scmp.lt.s32.totalorder %s21, 1
      %s312 = scalar_select %p311, %s21, 1
      %s313 = smul.addr %s312, 4
      %s314 = smul.addr %s313, 8
      %s315 = scalar_lea.vmem %s6, %s314
      %p317 = scmp.eq.s32.totalorder %s22, 0
      // Predicated region
      $region45: #{_forward_impl.3} parent=43 // pred_check
        %p318 = pneg %p317
      $region46: #{_forward_impl.3} parent=43 // pred_check_branch
        %320 = sbr.rel (%p318) target = $region48
      $region47: #{_forward_impl.3} parent=43 // pred_region
        %321 = vst [vmem:[%s315] sm:$0xff] 0.0
        %322 = vst [vmem:[%s315 + $0x8] sm:$0xff] 0.0
        %323 = vst [vmem:[%s315 + $0x10] sm:$0xff] 0.0
        %324 = vst [vmem:[%s315 + $0x18] sm:$0xff] 0.0
      $region48: #{_forward_impl.3} parent=43 // pred_fallthru
        _
      %v325 = vld [vmem:[%s299] sm:$0xf]
      %v326 = vld [vmem:[%s299 + $0x4] sm:$0xf]
      %v327 = vld [vmem:[%s299 + $0x8] sm:$0xf]
      %v328 = vld [vmem:[%s299 + $0xc] sm:$0xf]
      %v329 = vld [vmem:[%s299 + $0x10] sm:$0xf]
      %v330 = vld [vmem:[%s299 + $0x14] sm:$0xf]
      %v331 = vld [vmem:[%s299 + $0x18] sm:$0xf]
      %v332 = vld [vmem:[%s299 + $0x1c] sm:$0xf]
      %v333 = vld [vmem:[%s299 + $0x20] sm:$0xf]
      %v334 = vld [vmem:[%s299 + $0x24] sm:$0xf]
      %v335 = vld [vmem:[%s299 + $0x28] sm:$0xf]
      %v336 = vld [vmem:[%s299 + $0x2c] sm:$0xf]
      %v337 = vld [vmem:[%s299 + $0x30] sm:$0xf]
      %v338 = vld [vmem:[%s299 + $0x34] sm:$0xf]
      %v339 = vld [vmem:[%s299 + $0x38] sm:$0xf]
      %v340 = vld [vmem:[%s299 + $0x3c] sm:$0xf]
      %v341 = vld [vmem:[%s299 + $0x40] sm:$0xf]
      %v342 = vld [vmem:[%s299 + $0x44] sm:$0xf]
      %v343 = vld [vmem:[%s299 + $0x48] sm:$0xf]
      %v344 = vld [vmem:[%s299 + $0x4c] sm:$0xf]
      %v345 = vld [vmem:[%s299 + $0x50] sm:$0xf]
      %v346 = vld [vmem:[%s299 + $0x54] sm:$0xf]
      %v347 = vld [vmem:[%s299 + $0x58] sm:$0xf]
      %v348 = vld [vmem:[%s299 + $0x5c] sm:$0xf]
      %v349 = vld [vmem:[%s299 + $0x60] sm:$0xf]
      %v350 = vld [vmem:[%s299 + $0x64] sm:$0xf]
      %v351 = vld [vmem:[%s299 + $0x68] sm:$0xf]
      %v352 = vld [vmem:[%s299 + $0x6c] sm:$0xf]
      %v353 = vld [vmem:[%s299 + $0x70] sm:$0xf]
      %v354 = vld [vmem:[%s299 + $0x74] sm:$0xf]
      %v355 = vld [vmem:[%s299 + $0x78] sm:$0xf]
      %v356 = vld [vmem:[%s299 + $0x7c] sm:$0xf]
      %v357 = vld [vmem:[%s299 + $0x80] sm:$0xf]
      %v358 = vld [vmem:[%s299 + $0x84] sm:$0xf]
      %v359 = vld [vmem:[%s2] sm:$0x3]
      %v360 = vld [vmem:[%s3] sm:$0x1]
      %v362 = vlaneseq
      %v363 = vshrl.u32 %v362, 7
      %v364 = vsub.s32 0, %v363
      %v365 = vrot.slane %v360, %v364
      %v401 = vunpack.c.l.b16 %v325
      %v402 = vunpack.c.l.b16 %v326
      %v403 = vunpack.c.l.b16 %v327
      %v404 = vunpack.c.l.b16 %v328
      %v405 = vunpack.c.l.b16 %v329
      %v406 = vunpack.c.l.b16 %v330
      %v407 = vunpack.c.l.b16 %v331
      %v408 = vunpack.c.l.b16 %v332
      %v409 = vunpack.c.l.b16 %v333
      %v410 = vunpack.c.l.b16 %v334
      %v411 = vunpack.c.l.b16 %v335
      %v412 = vunpack.c.l.b16 %v336
      %v413 = vunpack.c.l.b16 %v337
      %v414 = vunpack.c.l.b16 %v338
      %v415 = vunpack.c.l.b16 %v339
      %v416 = vunpack.c.l.b16 %v340
      %v417 = vunpack.c.l.b16 %v341
      %v418 = vunpack.c.l.b16 %v342
      %v419 = vunpack.c.l.b16 %v343
      %v420 = vunpack.c.l.b16 %v344
      %v421 = vunpack.c.l.b16 %v345
      %v422 = vunpack.c.l.b16 %v346
      %v423 = vunpack.c.l.b16 %v347
      %v424 = vunpack.c.l.b16 %v348
      %v425 = vunpack.c.l.b16 %v349
      %v426 = vunpack.c.l.b16 %v350
      %v427 = vunpack.c.l.b16 %v351
      %v428 = vunpack.c.l.b16 %v352
      %v429 = vunpack.c.l.b16 %v353
      %v430 = vunpack.c.l.b16 %v354
      %v431 = vunpack.c.l.b16 %v355
      %v432 = vunpack.c.l.b16 %v356
      %v433 = vunpack.c.l.b16 %v357
      %v434 = vunpack.c.l.b16 %v358
      %v435 = vpack.c.b16 %v402, %v401
      %v436 = vpack.c.b16 %v404, %v403
      %v437 = vpack.c.b16 %v406, %v405
      %v438 = vpack.c.b16 %v408, %v407
      %v439 = vpack.c.b16 %v410, %v409
      %v440 = vpack.c.b16 %v412, %v411
      %v441 = vpack.c.b16 %v414, %v413
      %v442 = vpack.c.b16 %v416, %v415
      %v443 = vpack.c.b16 %v418, %v417
      %v444 = vpack.c.b16 %v420, %v419
      %v445 = vpack.c.b16 %v422, %v421
      %v446 = vpack.c.b16 %v424, %v423
      %v447 = vpack.c.b16 %v426, %v425
      %v448 = vpack.c.b16 %v428, %v427
      %v449 = vpack.c.b16 %v430, %v429
      %v450 = vpack.c.b16 %v432, %v431
      %v451 = vpack.c.b16 %v434, %v433
      %vm452 = vcmask 31744
      %v454 = vsel %vm452, %v435, 0
      %v457 = vsel %vm452, %v436, 0
      %v460 = vsel %vm452, %v437, 0
      %v463 = vsel %vm452, %v438, 0
      %v466 = vsel %vm452, %v439, 0
      %v469 = vsel %vm452, %v440, 0
      %v472 = vsel %vm452, %v441, 0
      %v475 = vsel %vm452, %v442, 0
      %v478 = vsel %vm452, %v443, 0
      %v481 = vsel %vm452, %v444, 0
      %v484 = vsel %vm452, %v445, 0
      %v487 = vsel %vm452, %v446, 0
      %v490 = vsel %vm452, %v447, 0
      %v493 = vsel %vm452, %v448, 0
      %v496 = vsel %vm452, %v449, 0
      %v499 = vsel %vm452, %v450, 0
      %v502 = vsel %vm452, %v451, 0
      %vm504 = vcmask 1041408
      %v506 = vsel %vm504, %v359, 0
      %508 = vmatprep.subr.bf16.mxu0 0
      %509 = vmatpush1.bf16.msra.mxu0 0
      %510 = vmatprep.subr.bf16.mxu0 0
      %511 = vmatpush1.bf16.msra.mxu0 0
      %512 = vmatprep.subr.bf16.mxu0 0
      %513 = vmatpush1.bf16.msra.mxu0 0
      %514 = vmatprep.subr.bf16.mxu0 0
      %515 = vmatpush1.bf16.msra.mxu0 0
      %516 = vmatprep.subr.bf16.mxu0 0
      %517 = vmatpush1.bf16.msra.mxu0 0
      %518 = vmatprep.subr.bf16.mxu0 0
      %519 = vmatpush1.bf16.msra.mxu0 0
      %520 = vmatprep.subr.bf16.mxu0 0
      %521 = vmatpush1.bf16.msra.mxu0 0
      %522 = vmatprep.subr.bf16.mxu0 0
      %523 = vmatpush1.bf16.msra.mxu0 %v506
      %524 = vmatprep.subr.bf16.mxu0 0
      %525 = vmatpush2.bf16.msra.mxu0 0
      %526 = vmatprep.subr.bf16.mxu0 0
      %527 = vmatpush2.bf16.msra.mxu0 0
      %528 = vmatprep.subr.bf16.mxu0 0
      %529 = vmatpush2.bf16.msra.mxu0 0
      %530 = vmatprep.subr.bf16.mxu0 0
      %531 = vmatpush2.bf16.msra.mxu0 0
      %532 = vmatprep.subr.bf16.mxu0 0
      %533 = vmatpush2.bf16.msra.mxu0 0
      %534 = vmatprep.subr.bf16.mxu0 0
      %535 = vmatpush2.bf16.msra.mxu0 0
      %536 = vmatprep.subr.bf16.mxu0 0
      %537 = vmatpush2.bf16.msra.mxu0 0
      %538 = vmatprep.subr.bf16.mxu0 0
      %539 = vmatpush2.bf16.msra.mxu0 0
      %540 = vmatprep.mubr.bf16.mxu0 0
      %541 = vmatmul.mubr.bf16.gmra.mxu0 %v454
      %v542 = vpop.f32.mrf.mxu0
      %v543 = vadd.f32 %v365, %v542
      %v544 = vpop.f32.mrf.mxu0
      %v545 = vpop.f32.mrf.mxu0
      %v546 = vadd.f32 %v365, %v545
      %v547 = vpop.f32.mrf.mxu0
      %548 = vmatprep.mubr.bf16.mxu0 0
      %549 = vmatmul.mubr.bf16.gmra.mxu0 %v457
      %v550 = vpop.f32.mrf.mxu0
      %v551 = vadd.f32 %v365, %v550
      %v552 = vpop.f32.mrf.mxu0
      %v553 = vpop.f32.mrf.mxu0
      %v554 = vadd.f32 %v365, %v553
      %v555 = vpop.f32.mrf.mxu0
      %556 = vmatprep.mubr.bf16.mxu0 0
      %557 = vmatmul.mubr.bf16.gmra.mxu0 %v460
      %v558 = vpop.f32.mrf.mxu0
      %v559 = vadd.f32 %v365, %v558
      %v560 = vpop.f32.mrf.mxu0
      %v561 = vpop.f32.mrf.mxu0
      %v562 = vadd.f32 %v365, %v561
      %v563 = vpop.f32.mrf.mxu0
      %564 = vmatprep.mubr.bf16.mxu0 0
      %565 = vmatmul.mubr.bf16.gmra.mxu0 %v463
      %v566 = vpop.f32.mrf.mxu0
      %v567 = vadd.f32 %v365, %v566
      %v568 = vpop.f32.mrf.mxu0
      %v569 = vpop.f32.mrf.mxu0
      %v570 = vadd.f32 %v365, %v569
      %v571 = vpop.f32.mrf.mxu0
      %572 = vmatprep.mubr.bf16.mxu0 0
      %573 = vmatmul.mubr.bf16.gmra.mxu0 %v466
      %v574 = vpop.f32.mrf.mxu0
      %v575 = vadd.f32 %v365, %v574
      %v576 = vpop.f32.mrf.mxu0
      %v577 = vpop.f32.mrf.mxu0
      %v578 = vadd.f32 %v365, %v577
      %v579 = vpop.f32.mrf.mxu0
      %580 = vmatprep.mubr.bf16.mxu0 0
      %581 = vmatmul.mubr.bf16.gmra.mxu0 %v469
      %v582 = vpop.f32.mrf.mxu0
      %v583 = vadd.f32 %v365, %v582
      %v584 = vpop.f32.mrf.mxu0
      %v585 = vpop.f32.mrf.mxu0
      %v586 = vadd.f32 %v365, %v585
      %v587 = vpop.f32.mrf.mxu0
      %588 = vmatprep.mubr.bf16.mxu0 0
      %589 = vmatmul.mubr.bf16.gmra.mxu0 %v472
      %v590 = vpop.f32.mrf.mxu0
      %v591 = vadd.f32 %v365, %v590
      %v592 = vpop.f32.mrf.mxu0
      %v593 = vpop.f32.mrf.mxu0
      %v594 = vadd.f32 %v365, %v593
      %v595 = vpop.f32.mrf.mxu0
      %596 = vmatprep.mubr.bf16.mxu0 0
      %597 = vmatmul.mubr.bf16.gmra.mxu0 %v475
      %v598 = vpop.f32.mrf.mxu0
      %v599 = vadd.f32 %v365, %v598
      %v600 = vpop.f32.mrf.mxu0
      %v601 = vpop.f32.mrf.mxu0
      %v602 = vadd.f32 %v365, %v601
      %v603 = vpop.f32.mrf.mxu0
      %604 = vmatprep.mubr.bf16.mxu0 0
      %605 = vmatmul.mubr.bf16.gmra.mxu0 %v478
      %v606 = vpop.f32.mrf.mxu0
      %v607 = vadd.f32 %v365, %v606
      %v608 = vpop.f32.mrf.mxu0
      %v609 = vpop.f32.mrf.mxu0
      %v610 = vadd.f32 %v365, %v609
      %v611 = vpop.f32.mrf.mxu0
      %612 = vmatprep.mubr.bf16.mxu0 0
      %613 = vmatmul.mubr.bf16.gmra.mxu0 %v481
      %v614 = vpop.f32.mrf.mxu0
      %v615 = vadd.f32 %v365, %v614
      %v616 = vpop.f32.mrf.mxu0
      %v617 = vpop.f32.mrf.mxu0
      %v618 = vadd.f32 %v365, %v617
      %v619 = vpop.f32.mrf.mxu0
      %620 = vmatprep.mubr.bf16.mxu0 0
      %621 = vmatmul.mubr.bf16.gmra.mxu0 %v484
      %v622 = vpop.f32.mrf.mxu0
      %v623 = vadd.f32 %v365, %v622
      %v624 = vpop.f32.mrf.mxu0
      %v625 = vpop.f32.mrf.mxu0
      %v626 = vadd.f32 %v365, %v625
      %v627 = vpop.f32.mrf.mxu0
      %628 = vmatprep.mubr.bf16.mxu0 0
      %629 = vmatmul.mubr.bf16.gmra.mxu0 %v487
      %v630 = vpop.f32.mrf.mxu0
      %v631 = vadd.f32 %v365, %v630
      %v632 = vpop.f32.mrf.mxu0
      %v633 = vpop.f32.mrf.mxu0
      %v634 = vadd.f32 %v365, %v633
      %v635 = vpop.f32.mrf.mxu0
      %636 = vmatprep.mubr.bf16.mxu0 0
      %637 = vmatmul.mubr.bf16.gmra.mxu0 %v490
      %v638 = vpop.f32.mrf.mxu0
      %v639 = vadd.f32 %v365, %v638
      %v640 = vpop.f32.mrf.mxu0
      %v641 = vpop.f32.mrf.mxu0
      %v642 = vadd.f32 %v365, %v641
      %v643 = vpop.f32.mrf.mxu0
      %644 = vmatprep.mubr.bf16.mxu0 0
      %645 = vmatmul.mubr.bf16.gmra.mxu0 %v493
      %v646 = vpop.f32.mrf.mxu0
      %v647 = vadd.f32 %v365, %v646
      %v648 = vpop.f32.mrf.mxu0
      %v649 = vpop.f32.mrf.mxu0
      %v650 = vadd.f32 %v365, %v649
      %v651 = vpop.f32.mrf.mxu0
      %652 = vmatprep.mubr.bf16.mxu0 0
      %653 = vmatmul.mubr.bf16.gmra.mxu0 %v496
      %v654 = vpop.f32.mrf.mxu0
      %v655 = vadd.f32 %v365, %v654
      %v656 = vpop.f32.mrf.mxu0
      %v657 = vpop.f32.mrf.mxu0
      %v658 = vadd.f32 %v365, %v657
      %v659 = vpop.f32.mrf.mxu0
      %660 = vmatprep.mubr.bf16.mxu0 0
      %661 = vmatmul.mubr.bf16.gmra.mxu0 %v499
      %v662 = vpop.f32.mrf.mxu0
      %v663 = vadd.f32 %v365, %v662
      %v664 = vpop.f32.mrf.mxu0
      %v665 = vpop.f32.mrf.mxu0
      %v666 = vadd.f32 %v365, %v665
      %v667 = vpop.f32.mrf.mxu0
      %668 = vmatprep.mubr.bf16.mxu0 0
      %669 = vmatmul.mubr.bf16.gmra.mxu0 %v502
      %v670 = vpop.f32.mrf.mxu0
      %v671 = vadd.f32 %v365, %v670
      %v672 = vpop.f32.mrf.mxu0
      %v673 = vpop.f32.mrf.mxu0
      %v674 = vadd.f32 %v365, %v673
      %v675 = vpop.f32.mrf.mxu0
      %676 = vdwg.mxu0
      %v677 = vmax.f32 %v543, 0.0
      %v678 = vmax.f32 %v546, 0.0
      %v679 = vmax.f32 %v551, 0.0
      %v680 = vmax.f32 %v554, 0.0
      %v681 = vmax.f32 %v559, 0.0
      %v682 = vmax.f32 %v562, 0.0
      %v683 = vmax.f32 %v567, 0.0
      %v684 = vmax.f32 %v570, 0.0
      %v685 = vmax.f32 %v575, 0.0
      %v686 = vmax.f32 %v578, 0.0
      %v687 = vmax.f32 %v583, 0.0
      %v688 = vmax.f32 %v586, 0.0
      %v689 = vmax.f32 %v591, 0.0
      %v690 = vmax.f32 %v594, 0.0
      %v691 = vmax.f32 %v599, 0.0
      %v692 = vmax.f32 %v602, 0.0
      %v693 = vmax.f32 %v607, 0.0
      %v694 = vmax.f32 %v610, 0.0
      %v695 = vmax.f32 %v615, 0.0
      %v696 = vmax.f32 %v618, 0.0
      %v697 = vmax.f32 %v623, 0.0
      %v698 = vmax.f32 %v626, 0.0
      %v699 = vmax.f32 %v631, 0.0
      %v700 = vmax.f32 %v634, 0.0
      %v701 = vmax.f32 %v639, 0.0
      %v702 = vmax.f32 %v642, 0.0
      %v703 = vmax.f32 %v647, 0.0
      %v704 = vmax.f32 %v650, 0.0
      %v705 = vmax.f32 %v655, 0.0
      %v706 = vmax.f32 %v658, 0.0
      %v707 = vmax.f32 %v663, 0.0
      %v708 = vmax.f32 %v666, 0.0
      %v709 = vmax.f32 %v671, 0.0
      %v710 = vmax.f32 %v674, 0.0
      %v711 = vpack.c.bf16 %v678, %v677
      %v712 = vpack.c.bf16 %v680, %v679
      %v713 = vpack.c.bf16 %v682, %v681
      %v714 = vpack.c.bf16 %v684, %v683
      %v715 = vpack.c.bf16 %v686, %v685
      %v716 = vpack.c.bf16 %v688, %v687
      %v717 = vpack.c.bf16 %v690, %v689
      %v718 = vpack.c.bf16 %v692, %v691
      %v719 = vpack.c.bf16 %v694, %v693
      %v720 = vpack.c.bf16 %v696, %v695
      %v721 = vpack.c.bf16 %v698, %v697
      %v722 = vpack.c.bf16 %v700, %v699
      %v723 = vpack.c.bf16 %v702, %v701
      %v724 = vpack.c.bf16 %v704, %v703
      %v725 = vpack.c.bf16 %v706, %v705
      %v726 = vpack.c.bf16 %v708, %v707
      %v727 = vpack.c.bf16 %v710, %v709
      %v728 = vld [vmem:[%s4] sm:$0xff]
      %v729 = vld [vmem:[%s4 + $0x8] sm:$0xff]
      %v730 = vld [vmem:[%s4 + $0x10] sm:$0xff]
      %v731 = vld [vmem:[%s4 + $0x18] sm:$0xff]
      %v732 = vld [vmem:[%s4 + $0x20] sm:$0xff]
      %v733 = vld [vmem:[%s4 + $0x28] sm:$0xff]
      %v734 = vld [vmem:[%s4 + $0x30] sm:$0xff]
      %v735 = vld [vmem:[%s4 + $0x38] sm:$0xff]
      %v736 = vld [vmem:[%s5] sm:$0x3]
      %v738 = vlaneseq
      %v739 = vshrl.u32 %v738, 7
      %v740 = vsub.s32 0, %v739
      %v741 = vrot.slane %v736, %v740
      %v742 = vlaneseq
      %v743 = vshrl.u32 %v742, 7
      %v744 = vsub.s32 1, %v743
      %v745 = vrot.slane %v736, %v744
      %v756 = vunpack.c.l.b16 %v728
      %v757 = vunpack.c.h.b16 %v728
      %v758 = vunpack.c.l.b16 %v729
      %v759 = vunpack.c.h.b16 %v729
      %v760 = vunpack.c.l.b16 %v730
      %v761 = vunpack.c.h.b16 %v730
      %v762 = vunpack.c.l.b16 %v731
      %v763 = vunpack.c.h.b16 %v731
      %v764 = vunpack.c.l.b16 %v732
      %v765 = vunpack.c.h.b16 %v732
      %v766 = vunpack.c.l.b16 %v733
      %v767 = vunpack.c.h.b16 %v733
      %v768 = vunpack.c.l.b16 %v734
      %v769 = vunpack.c.h.b16 %v734
      %v770 = vunpack.c.l.b16 %v735
      %v771 = vunpack.c.h.b16 %v735
      %v772 = vpack.c.b16 %v758, %v756
      %v773 = vpack.c.b16 %v759, %v757
      %v774 = vpack.c.b16 %v762, %v760
      %v775 = vpack.c.b16 %v763, %v761
      %v776 = vpack.c.b16 %v766, %v764
      %v777 = vpack.c.b16 %v767, %v765
      %v778 = vpack.c.b16 %v770, %v768
      %v779 = vpack.c.b16 %v771, %v769
      %vm788 = vcmask 523264
      %v790 = vsel %vm788, %v711, 0
      %v793 = vsel %vm788, %v712, 0
      %v796 = vsel %vm788, %v713, 0
      %v799 = vsel %vm788, %v714, 0
      %v802 = vsel %vm788, %v715, 0
      %v805 = vsel %vm788, %v716, 0
      %v808 = vsel %vm788, %v717, 0
      %v811 = vsel %vm788, %v718, 0
      %v814 = vsel %vm788, %v719, 0
      %v817 = vsel %vm788, %v720, 0
      %v820 = vsel %vm788, %v721, 0
      %v823 = vsel %vm788, %v722, 0
      %v826 = vsel %vm788, %v723, 0
      %v829 = vsel %vm788, %v724, 0
      %v832 = vsel %vm788, %v725, 0
      %v835 = vsel %vm788, %v726, 0
      %v838 = vsel %vm788, %v727, 0
      %840 = vmatprep.subr.bf16.mxu0 0
      %841 = vmatpush1.bf16.msra.mxu0 0
      %842 = vmatprep.subr.bf16.mxu0 0
      %843 = vmatpush1.bf16.msra.mxu0 0
      %844 = vmatprep.subr.bf16.mxu0 0
      %845 = vmatpush1.bf16.msra.mxu0 0
      %846 = vmatprep.subr.bf16.mxu0 0
      %847 = vmatpush1.bf16.msra.mxu0 0
      %848 = vmatprep.subr.bf16.mxu0 %v779
      %849 = vmatpush1.bf16.msra.mxu0 %v778
      %850 = vmatprep.subr.bf16.mxu0 %v777
      %851 = vmatpush1.bf16.msra.mxu0 %v776
      %852 = vmatprep.subr.bf16.mxu0 %v775
      %853 = vmatpush1.bf16.msra.mxu0 %v774
      %854 = vmatprep.subr.bf16.mxu0 %v773
      %855 = vmatpush1.bf16.msra.mxu0 %v772
      %856 = vmatprep.subr.bf16.mxu0 0
      %857 = vmatpush2.bf16.msra.mxu0 0
      %858 = vmatprep.subr.bf16.mxu0 0
      %859 = vmatpush2.bf16.msra.mxu0 0
      %860 = vmatprep.subr.bf16.mxu0 0
      %861 = vmatpush2.bf16.msra.mxu0 0
      %862 = vmatprep.subr.bf16.mxu0 0
      %863 = vmatpush2.bf16.msra.mxu0 0
      %864 = vmatprep.subr.bf16.mxu0 0
      %865 = vmatpush2.bf16.msra.mxu0 0
      %866 = vmatprep.subr.bf16.mxu0 0
      %867 = vmatpush2.bf16.msra.mxu0 0
      %868 = vmatprep.subr.bf16.mxu0 0
      %869 = vmatpush2.bf16.msra.mxu0 0
      %870 = vmatprep.subr.bf16.mxu0 0
      %871 = vmatpush2.bf16.msra.mxu0 0
      %872 = vmatprep.mubr.bf16.mxu0 0
      %873 = vmatmul.mubr.bf16.gmra.mxu0 %v790
      %v874 = vpop.f32.mrf.mxu0
      %v875 = vadd.f32 %v741, %v874
      %v876 = vpop.f32.mrf.mxu0
      %v877 = vadd.f32 %v745, %v876
      %v878 = vpop.f32.mrf.mxu0
      %v879 = vadd.f32 %v741, %v878
      %v880 = vpop.f32.mrf.mxu0
      %v881 = vadd.f32 %v745, %v880
      %882 = vmatprep.mubr.bf16.mxu0 0
      %883 = vmatmul.mubr.bf16.gmra.mxu0 %v793
      %v884 = vpop.f32.mrf.mxu0
      %v885 = vadd.f32 %v741, %v884
      %v886 = vpop.f32.mrf.mxu0
      %v887 = vadd.f32 %v745, %v886
      %v888 = vpop.f32.mrf.mxu0
      %v889 = vadd.f32 %v741, %v888
      %v890 = vpop.f32.mrf.mxu0
      %v891 = vadd.f32 %v745, %v890
      %892 = vmatprep.mubr.bf16.mxu0 0
      %893 = vmatmul.mubr.bf16.gmra.mxu0 %v796
      %v894 = vpop.f32.mrf.mxu0
      %v895 = vadd.f32 %v741, %v894
      %v896 = vpop.f32.mrf.mxu0
      %v897 = vadd.f32 %v745, %v896
      %v898 = vpop.f32.mrf.mxu0
      %v899 = vadd.f32 %v741, %v898
      %v900 = vpop.f32.mrf.mxu0
      %v901 = vadd.f32 %v745, %v900
      %902 = vmatprep.mubr.bf16.mxu0 0
      %903 = vmatmul.mubr.bf16.gmra.mxu0 %v799
      %v904 = vpop.f32.mrf.mxu0
      %v905 = vadd.f32 %v741, %v904
      %v906 = vpop.f32.mrf.mxu0
      %v907 = vadd.f32 %v745, %v906
      %v908 = vpop.f32.mrf.mxu0
      %v909 = vadd.f32 %v741, %v908
      %v910 = vpop.f32.mrf.mxu0
      %v911 = vadd.f32 %v745, %v910
      %912 = vmatprep.mubr.bf16.mxu0 0
      %913 = vmatmul.mubr.bf16.gmra.mxu0 %v802
      %v914 = vpop.f32.mrf.mxu0
      %v915 = vadd.f32 %v741, %v914
      %v916 = vpop.f32.mrf.mxu0
      %v917 = vadd.f32 %v745, %v916
      %v918 = vpop.f32.mrf.mxu0
      %v919 = vadd.f32 %v741, %v918
      %v920 = vpop.f32.mrf.mxu0
      %v921 = vadd.f32 %v745, %v920
      %922 = vmatprep.mubr.bf16.mxu0 0
      %923 = vmatmul.mubr.bf16.gmra.mxu0 %v805
      %v924 = vpop.f32.mrf.mxu0
      %v925 = vadd.f32 %v741, %v924
      %v926 = vpop.f32.mrf.mxu0
      %v927 = vadd.f32 %v745, %v926
      %v928 = vpop.f32.mrf.mxu0
      %v929 = vadd.f32 %v741, %v928
      %v930 = vpop.f32.mrf.mxu0
      %v931 = vadd.f32 %v745, %v930
      %932 = vmatprep.mubr.bf16.mxu0 0
      %933 = vmatmul.mubr.bf16.gmra.mxu0 %v808
      %v934 = vpop.f32.mrf.mxu0
      %v935 = vadd.f32 %v741, %v934
      %v936 = vpop.f32.mrf.mxu0
      %v937 = vadd.f32 %v745, %v936
      %v938 = vpop.f32.mrf.mxu0
      %v939 = vadd.f32 %v741, %v938
      %v940 = vpop.f32.mrf.mxu0
      %v941 = vadd.f32 %v745, %v940
      %942 = vmatprep.mubr.bf16.mxu0 0
      %943 = vmatmul.mubr.bf16.gmra.mxu0 %v811
      %v944 = vpop.f32.mrf.mxu0
      %v945 = vadd.f32 %v741, %v944
      %v946 = vpop.f32.mrf.mxu0
      %v947 = vadd.f32 %v745, %v946
      %v948 = vpop.f32.mrf.mxu0
      %v949 = vadd.f32 %v741, %v948
      %v950 = vpop.f32.mrf.mxu0
      %v951 = vadd.f32 %v745, %v950
      %952 = vmatprep.mubr.bf16.mxu0 0
      %953 = vmatmul.mubr.bf16.gmra.mxu0 %v814
      %v954 = vpop.f32.mrf.mxu0
      %v955 = vadd.f32 %v741, %v954
      %v956 = vpop.f32.mrf.mxu0
      %v957 = vadd.f32 %v745, %v956
      %v958 = vpop.f32.mrf.mxu0
      %v959 = vadd.f32 %v741, %v958
      %v960 = vpop.f32.mrf.mxu0
      %v961 = vadd.f32 %v745, %v960
      %962 = vmatprep.mubr.bf16.mxu0 0
      %963 = vmatmul.mubr.bf16.gmra.mxu0 %v817
      %v964 = vpop.f32.mrf.mxu0
      %v965 = vadd.f32 %v741, %v964
      %v966 = vpop.f32.mrf.mxu0
      %v967 = vadd.f32 %v745, %v966
      %v968 = vpop.f32.mrf.mxu0
      %v969 = vadd.f32 %v741, %v968
      %v970 = vpop.f32.mrf.mxu0
      %v971 = vadd.f32 %v745, %v970
      %972 = vmatprep.mubr.bf16.mxu0 0
      %973 = vmatmul.mubr.bf16.gmra.mxu0 %v820
      %v974 = vpop.f32.mrf.mxu0
      %v975 = vadd.f32 %v741, %v974
      %v976 = vpop.f32.mrf.mxu0
      %v977 = vadd.f32 %v745, %v976
      %v978 = vpop.f32.mrf.mxu0
      %v979 = vadd.f32 %v741, %v978
      %v980 = vpop.f32.mrf.mxu0
      %v981 = vadd.f32 %v745, %v980
      %982 = vmatprep.mubr.bf16.mxu0 0
      %983 = vmatmul.mubr.bf16.gmra.mxu0 %v823
      %v984 = vpop.f32.mrf.mxu0
      %v985 = vadd.f32 %v741, %v984
      %v986 = vpop.f32.mrf.mxu0
      %v987 = vadd.f32 %v745, %v986
      %v988 = vpop.f32.mrf.mxu0
      %v989 = vadd.f32 %v741, %v988
      %v990 = vpop.f32.mrf.mxu0
      %v991 = vadd.f32 %v745, %v990
      %992 = vmatprep.mubr.bf16.mxu0 0
      %993 = vmatmul.mubr.bf16.gmra.mxu0 %v826
      %v994 = vpop.f32.mrf.mxu0
      %v995 = vadd.f32 %v741, %v994
      %v996 = vpop.f32.mrf.mxu0
      %v997 = vadd.f32 %v745, %v996
      %v998 = vpop.f32.mrf.mxu0
      %v999 = vadd.f32 %v741, %v998
      %v1000 = vpop.f32.mrf.mxu0
      %v1001 = vadd.f32 %v745, %v1000
      %1002 = vmatprep.mubr.bf16.mxu0 0
      %1003 = vmatmul.mubr.bf16.gmra.mxu0 %v829
      %v1004 = vpop.f32.mrf.mxu0
      %v1005 = vadd.f32 %v741, %v1004
      %v1006 = vpop.f32.mrf.mxu0
      %v1007 = vadd.f32 %v745, %v1006
      %v1008 = vpop.f32.mrf.mxu0
      %v1009 = vadd.f32 %v741, %v1008
      %v1010 = vpop.f32.mrf.mxu0
      %v1011 = vadd.f32 %v745, %v1010
      %1012 = vmatprep.mubr.bf16.mxu0 0
      %1013 = vmatmul.mubr.bf16.gmra.mxu0 %v832
      %v1014 = vpop.f32.mrf.mxu0
      %v1015 = vadd.f32 %v741, %v1014
      %v1016 = vpop.f32.mrf.mxu0
      %v1017 = vadd.f32 %v745, %v1016
      %v1018 = vpop.f32.mrf.mxu0
      %v1019 = vadd.f32 %v741, %v1018
      %v1020 = vpop.f32.mrf.mxu0
      %v1021 = vadd.f32 %v745, %v1020
      %1022 = vmatprep.mubr.bf16.mxu0 0
      %1023 = vmatmul.mubr.bf16.gmra.mxu0 %v835
      %v1024 = vpop.f32.mrf.mxu0
      %v1025 = vadd.f32 %v741, %v1024
      %v1026 = vpop.f32.mrf.mxu0
      %v1027 = vadd.f32 %v745, %v1026
      %v1028 = vpop.f32.mrf.mxu0
      %v1029 = vadd.f32 %v741, %v1028
      %v1030 = vpop.f32.mrf.mxu0
      %v1031 = vadd.f32 %v745, %v1030
      %1032 = vmatprep.mubr.bf16.mxu0 0
      %1033 = vmatmul.mubr.bf16.gmra.mxu0 %v838
      %v1034 = vpop.f32.mrf.mxu0
      %v1035 = vadd.f32 %v741, %v1034
      %v1036 = vpop.f32.mrf.mxu0
      %v1037 = vadd.f32 %v745, %v1036
      %v1038 = vpop.f32.mrf.mxu0
      %v1039 = vadd.f32 %v741, %v1038
      %v1040 = vpop.f32.mrf.mxu0
      %v1041 = vadd.f32 %v745, %v1040
      %1042 = vdwg.mxu0
      %v1043 = vmax.f32 %v875, 0.0
      %v1044 = vmax.f32 %v877, 0.0
      %v1045 = vmax.f32 %v879, 0.0
      %v1046 = vmax.f32 %v881, 0.0
      %v1047 = vmax.f32 %v885, 0.0
      %v1048 = vmax.f32 %v887, 0.0
      %v1049 = vmax.f32 %v889, 0.0
      %v1050 = vmax.f32 %v891, 0.0
      %v1051 = vmax.f32 %v895, 0.0
      %v1052 = vmax.f32 %v897, 0.0
      %v1053 = vmax.f32 %v899, 0.0
      %v1054 = vmax.f32 %v901, 0.0
      %v1055 = vmax.f32 %v905, 0.0
      %v1056 = vmax.f32 %v907, 0.0
      %v1057 = vmax.f32 %v909, 0.0
      %v1058 = vmax.f32 %v911, 0.0
      %v1059 = vmax.f32 %v915, 0.0
      %v1060 = vmax.f32 %v917, 0.0
      %v1061 = vmax.f32 %v919, 0.0
      %v1062 = vmax.f32 %v921, 0.0
      %v1063 = vmax.f32 %v925, 0.0
      %v1064 = vmax.f32 %v927, 0.0
      %v1065 = vmax.f32 %v929, 0.0
      %v1066 = vmax.f32 %v931, 0.0
      %v1067 = vmax.f32 %v935, 0.0
      %v1068 = vmax.f32 %v937, 0.0
      %v1069 = vmax.f32 %v939, 0.0
      %v1070 = vmax.f32 %v941, 0.0
      %v1071 = vmax.f32 %v945, 0.0
      %v1072 = vmax.f32 %v947, 0.0
      %v1073 = vmax.f32 %v949, 0.0
      %v1074 = vmax.f32 %v951, 0.0
      %v1075 = vmax.f32 %v955, 0.0
      %v1076 = vmax.f32 %v957, 0.0
      %v1077 = vmax.f32 %v959, 0.0
      %v1078 = vmax.f32 %v961, 0.0
      %v1079 = vmax.f32 %v965, 0.0
      %v1080 = vmax.f32 %v967, 0.0
      %v1081 = vmax.f32 %v969, 0.0
      %v1082 = vmax.f32 %v971, 0.0
      %v1083 = vmax.f32 %v975, 0.0
      %v1084 = vmax.f32 %v977, 0.0
      %v1085 = vmax.f32 %v979, 0.0
      %v1086 = vmax.f32 %v981, 0.0
      %v1087 = vmax.f32 %v985, 0.0
      %v1088 = vmax.f32 %v987, 0.0
      %v1089 = vmax.f32 %v989, 0.0
      %v1090 = vmax.f32 %v991, 0.0
      %v1091 = vmax.f32 %v995, 0.0
      %v1092 = vmax.f32 %v997, 0.0
      %v1093 = vmax.f32 %v999, 0.0
      %v1094 = vmax.f32 %v1001, 0.0
      %v1095 = vmax.f32 %v1005, 0.0
      %v1096 = vmax.f32 %v1007, 0.0
      %v1097 = vmax.f32 %v1009, 0.0
      %v1098 = vmax.f32 %v1011, 0.0
      %v1099 = vmax.f32 %v1015, 0.0
      %v1100 = vmax.f32 %v1017, 0.0
      %v1101 = vmax.f32 %v1019, 0.0
      %v1102 = vmax.f32 %v1021, 0.0
      %v1103 = vmax.f32 %v1025, 0.0
      %v1104 = vmax.f32 %v1027, 0.0
      %v1105 = vmax.f32 %v1029, 0.0
      %v1106 = vmax.f32 %v1031, 0.0
      %v1107 = vmax.f32 %v1035, 0.0
      %v1108 = vmax.f32 %v1037, 0.0
      %v1109 = vmax.f32 %v1039, 0.0
      %v1110 = vmax.f32 %v1041, 0.0
      %v1111 = vld [vmem:[%s309] sm:$0xf]
      %v1112 = vld [vmem:[%s309 + $0x4] sm:$0xf]
      %v1113 = vld [vmem:[%s309 + $0x8] sm:$0xf]
      %v1114 = vld [vmem:[%s309 + $0xc] sm:$0xf]
      %v1115 = vld [vmem:[%s309 + $0x10] sm:$0xf]
      %v1116 = vld [vmem:[%s309 + $0x14] sm:$0xf]
      %v1117 = vld [vmem:[%s309 + $0x18] sm:$0xf]
      %v1118 = vld [vmem:[%s309 + $0x1c] sm:$0xf]
      %v1119 = vld [vmem:[%s309 + $0x20] sm:$0xf]
      %v1120 = vld [vmem:[%s309 + $0x24] sm:$0xf]
      %v1121 = vld [vmem:[%s309 + $0x28] sm:$0xf]
      %v1122 = vld [vmem:[%s309 + $0x2c] sm:$0xf]
      %v1123 = vld [vmem:[%s309 + $0x30] sm:$0xf]
      %v1124 = vld [vmem:[%s309 + $0x34] sm:$0xf]
      %v1125 = vld [vmem:[%s309 + $0x38] sm:$0xf]
      %v1126 = vld [vmem:[%s309 + $0x3c] sm:$0xf]
      %v1127 = vld [vmem:[%s309 + $0x40] sm:$0xf]
      %v1128 = vld [vmem:[%s309 + $0x44] sm:$0xf]
      %v1129 = vld [vmem:[%s309 + $0x48] sm:$0xf]
      %v1130 = vld [vmem:[%s309 + $0x4c] sm:$0xf]
      %v1131 = vld [vmem:[%s309 + $0x50] sm:$0xf]
      %v1132 = vld [vmem:[%s309 + $0x54] sm:$0xf]
      %v1133 = vld [vmem:[%s309 + $0x58] sm:$0xf]
      %v1134 = vld [vmem:[%s309 + $0x5c] sm:$0xf]
      %v1135 = vld [vmem:[%s309 + $0x60] sm:$0xf]
      %v1136 = vld [vmem:[%s309 + $0x64] sm:$0xf]
      %v1137 = vld [vmem:[%s309 + $0x68] sm:$0xf]
      %v1138 = vld [vmem:[%s309 + $0x6c] sm:$0xf]
      %v1139 = vld [vmem:[%s309 + $0x70] sm:$0xf]
      %v1140 = vld [vmem:[%s309 + $0x74] sm:$0xf]
      %v1141 = vld [vmem:[%s309 + $0x78] sm:$0xf]
      %v1142 = vld [vmem:[%s309 + $0x7c] sm:$0xf]
      %v1143 = vld [vmem:[%s309 + $0x80] sm:$0xf]
      %v1144 = vld [vmem:[%s309 + $0x84] sm:$0xf]
      %v1145 = vunpack.c.l.bf16 %v1111
      %v1146 = vunpack.c.l.bf16 %v1112
      %v1147 = vunpack.c.l.bf16 %v1113
      %v1148 = vunpack.c.l.bf16 %v1114
      %v1149 = vunpack.c.l.bf16 %v1115
      %v1150 = vunpack.c.l.bf16 %v1116
      %v1151 = vunpack.c.l.bf16 %v1117
      %v1152 = vunpack.c.l.bf16 %v1118
      %v1153 = vunpack.c.l.bf16 %v1119
      %v1154 = vunpack.c.l.bf16 %v1120
      %v1155 = vunpack.c.l.bf16 %v1121
      %v1156 = vunpack.c.l.bf16 %v1122
      %v1157 = vunpack.c.l.bf16 %v1123
      %v1158 = vunpack.c.l.bf16 %v1124
      %v1159 = vunpack.c.l.bf16 %v1125
      %v1160 = vunpack.c.l.bf16 %v1126
      %v1161 = vunpack.c.l.bf16 %v1127
      %v1162 = vunpack.c.l.bf16 %v1128
      %v1163 = vunpack.c.l.bf16 %v1129
      %v1164 = vunpack.c.l.bf16 %v1130
      %v1165 = vunpack.c.l.bf16 %v1131
      %v1166 = vunpack.c.l.bf16 %v1132
      %v1167 = vunpack.c.l.bf16 %v1133
      %v1168 = vunpack.c.l.bf16 %v1134
      %v1169 = vunpack.c.l.bf16 %v1135
      %v1170 = vunpack.c.l.bf16 %v1136
      %v1171 = vunpack.c.l.bf16 %v1137
      %v1172 = vunpack.c.l.bf16 %v1138
      %v1173 = vunpack.c.l.bf16 %v1139
      %v1174 = vunpack.c.l.bf16 %v1140
      %v1175 = vunpack.c.l.bf16 %v1141
      %v1176 = vunpack.c.l.bf16 %v1142
      %v1177 = vunpack.c.l.bf16 %v1143
      %v1178 = vunpack.c.l.bf16 %v1144
      %1180 = vset.pattern.permute.xlu0 0
      %1181 = vperm.xlu0 %1180, %v1145
      %v1182 = vpop.permute.xlu0 %1181
      %1185 = vset.pattern.permute.xlu0 0
      %1186 = vperm.xlu0 %1185, %v1146
      %v1187 = vpop.permute.xlu0 %1186
      %1190 = vset.pattern.permute.xlu0 0
      %1191 = vperm.xlu0 %1190, %v1147
      %v1192 = vpop.permute.xlu0 %1191
      %1195 = vset.pattern.permute.xlu0 0
      %1196 = vperm.xlu0 %1195, %v1148
      %v1197 = vpop.permute.xlu0 %1196
      %1200 = vset.pattern.permute.xlu0 0
      %1201 = vperm.xlu0 %1200, %v1149
      %v1202 = vpop.permute.xlu0 %1201
      %1205 = vset.pattern.permute.xlu0 0
      %1206 = vperm.xlu0 %1205, %v1150
      %v1207 = vpop.permute.xlu0 %1206
      %1210 = vset.pattern.permute.xlu0 0
      %1211 = vperm.xlu0 %1210, %v1151
      %v1212 = vpop.permute.xlu0 %1211
      %1215 = vset.pattern.permute.xlu0 0
      %1216 = vperm.xlu0 %1215, %v1152
      %v1217 = vpop.permute.xlu0 %1216
      %1220 = vset.pattern.permute.xlu0 0
      %1221 = vperm.xlu0 %1220, %v1153
      %v1222 = vpop.permute.xlu0 %1221
      %1225 = vset.pattern.permute.xlu0 0
      %1226 = vperm.xlu0 %1225, %v1154
      %v1227 = vpop.permute.xlu0 %1226
      %1230 = vset.pattern.permute.xlu0 0
      %1231 = vperm.xlu0 %1230, %v1155
      %v1232 = vpop.permute.xlu0 %1231
      %1235 = vset.pattern.permute.xlu0 0
      %1236 = vperm.xlu0 %1235, %v1156
      %v1237 = vpop.permute.xlu0 %1236
      %1240 = vset.pattern.permute.xlu0 0
      %1241 = vperm.xlu0 %1240, %v1157
      %v1242 = vpop.permute.xlu0 %1241
      %1245 = vset.pattern.permute.xlu0 0
      %1246 = vperm.xlu0 %1245, %v1158
      %v1247 = vpop.permute.xlu0 %1246
      %1250 = vset.pattern.permute.xlu0 0
      %1251 = vperm.xlu0 %1250, %v1159
      %v1252 = vpop.permute.xlu0 %1251
      %1255 = vset.pattern.permute.xlu0 0
      %1256 = vperm.xlu0 %1255, %v1160
      %v1257 = vpop.permute.xlu0 %1256
      %1260 = vset.pattern.permute.xlu0 0
      %1261 = vperm.xlu0 %1260, %v1161
      %v1262 = vpop.permute.xlu0 %1261
      %1265 = vset.pattern.permute.xlu0 0
      %1266 = vperm.xlu0 %1265, %v1162
      %v1267 = vpop.permute.xlu0 %1266
      %1270 = vset.pattern.permute.xlu0 0
      %1271 = vperm.xlu0 %1270, %v1163
      %v1272 = vpop.permute.xlu0 %1271
      %1275 = vset.pattern.permute.xlu0 0
      %1276 = vperm.xlu0 %1275, %v1164
      %v1277 = vpop.permute.xlu0 %1276
      %1280 = vset.pattern.permute.xlu0 0
      %1281 = vperm.xlu0 %1280, %v1165
      %v1282 = vpop.permute.xlu0 %1281
      %1285 = vset.pattern.permute.xlu0 0
      %1286 = vperm.xlu0 %1285, %v1166
      %v1287 = vpop.permute.xlu0 %1286
      %1290 = vset.pattern.permute.xlu0 0
      %1291 = vperm.xlu0 %1290, %v1167
      %v1292 = vpop.permute.xlu0 %1291
      %1295 = vset.pattern.permute.xlu0 0
      %1296 = vperm.xlu0 %1295, %v1168
      %v1297 = vpop.permute.xlu0 %1296
      %1300 = vset.pattern.permute.xlu0 0
      %1301 = vperm.xlu0 %1300, %v1169
      %v1302 = vpop.permute.xlu0 %1301
      %1305 = vset.pattern.permute.xlu0 0
      %1306 = vperm.xlu0 %1305, %v1170
      %v1307 = vpop.permute.xlu0 %1306
      %1310 = vset.pattern.permute.xlu0 0
      %1311 = vperm.xlu0 %1310, %v1171
      %v1312 = vpop.permute.xlu0 %1311
      %1315 = vset.pattern.permute.xlu0 0
      %1316 = vperm.xlu0 %1315, %v1172
      %v1317 = vpop.permute.xlu0 %1316
      %1320 = vset.pattern.permute.xlu0 0
      %1321 = vperm.xlu0 %1320, %v1173
      %v1322 = vpop.permute.xlu0 %1321
      %1325 = vset.pattern.permute.xlu0 0
      %1326 = vperm.xlu0 %1325, %v1174
      %v1327 = vpop.permute.xlu0 %1326
      %1330 = vset.pattern.permute.xlu0 0
      %1331 = vperm.xlu0 %1330, %v1175
      %v1332 = vpop.permute.xlu0 %1331
      %1335 = vset.pattern.permute.xlu0 0
      %1336 = vperm.xlu0 %1335, %v1176
      %v1337 = vpop.permute.xlu0 %1336
      %1340 = vset.pattern.permute.xlu0 0
      %1341 = vperm.xlu0 %1340, %v1177
      %v1342 = vpop.permute.xlu0 %1341
      %1345 = vset.pattern.permute.xlu0 0
      %1346 = vperm.xlu0 %1345, %v1178
      %v1347 = vpop.permute.xlu0 %1346
      %v1349 = vmul.f32 %v1043, %v1182
      %v1350 = vmul.f32 %v1044, %v1182
      %v1351 = vmul.f32 %v1045, %v1187
      %v1352 = vmul.f32 %v1046, %v1187
      %v1353 = vmul.f32 %v1047, %v1192
      %v1354 = vmul.f32 %v1048, %v1192
      %v1355 = vmul.f32 %v1049, %v1197
      %v1356 = vmul.f32 %v1050, %v1197
      %v1357 = vmul.f32 %v1051, %v1202
      %v1358 = vmul.f32 %v1052, %v1202
      %v1359 = vmul.f32 %v1053, %v1207
      %v1360 = vmul.f32 %v1054, %v1207
      %v1361 = vmul.f32 %v1055, %v1212
      %v1362 = vmul.f32 %v1056, %v1212
      %v1363 = vmul.f32 %v1057, %v1217
      %v1364 = vmul.f32 %v1058, %v1217
      %v1365 = vmul.f32 %v1059, %v1222
      %v1366 = vmul.f32 %v1060, %v1222
      %v1367 = vmul.f32 %v1061, %v1227
      %v1368 = vmul.f32 %v1062, %v1227
      %v1369 = vmul.f32 %v1063, %v1232
      %v1370 = vmul.f32 %v1064, %v1232
      %v1371 = vmul.f32 %v1065, %v1237
      %v1372 = vmul.f32 %v1066, %v1237
      %v1373 = vmul.f32 %v1067, %v1242
      %v1374 = vmul.f32 %v1068, %v1242
      %v1375 = vmul.f32 %v1069, %v1247
      %v1376 = vmul.f32 %v1070, %v1247
      %v1377 = vmul.f32 %v1071, %v1252
      %v1378 = vmul.f32 %v1072, %v1252
      %v1379 = vmul.f32 %v1073, %v1257
      %v1380 = vmul.f32 %v1074, %v1257
      %v1381 = vmul.f32 %v1075, %v1262
      %v1382 = vmul.f32 %v1076, %v1262
      %v1383 = vmul.f32 %v1077, %v1267
      %v1384 = vmul.f32 %v1078, %v1267
      %v1385 = vmul.f32 %v1079, %v1272
      %v1386 = vmul.f32 %v1080, %v1272
      %v1387 = vmul.f32 %v1081, %v1277
      %v1388 = vmul.f32 %v1082, %v1277
      %v1389 = vmul.f32 %v1083, %v1282
      %v1390 = vmul.f32 %v1084, %v1282
      %v1391 = vmul.f32 %v1085, %v1287
      %v1392 = vmul.f32 %v1086, %v1287
      %v1393 = vmul.f32 %v1087, %v1292
      %v1394 = vmul.f32 %v1088, %v1292
      %v1395 = vmul.f32 %v1089, %v1297
      %v1396 = vmul.f32 %v1090, %v1297
      %v1397 = vmul.f32 %v1091, %v1302
      %v1398 = vmul.f32 %v1092, %v1302
      %v1399 = vmul.f32 %v1093, %v1307
      %v1400 = vmul.f32 %v1094, %v1307
      %v1401 = vmul.f32 %v1095, %v1312
      %v1402 = vmul.f32 %v1096, %v1312
      %v1403 = vmul.f32 %v1097, %v1317
      %v1404 = vmul.f32 %v1098, %v1317
      %v1405 = vmul.f32 %v1099, %v1322
      %v1406 = vmul.f32 %v1100, %v1322
      %v1407 = vmul.f32 %v1101, %v1327
      %v1408 = vmul.f32 %v1102, %v1327
      %v1409 = vmul.f32 %v1103, %v1332
      %v1410 = vmul.f32 %v1104, %v1332
      %v1411 = vmul.f32 %v1105, %v1337
      %v1412 = vmul.f32 %v1106, %v1337
      %v1413 = vmul.f32 %v1107, %v1342
      %v1414 = vmul.f32 %v1108, %v1342
      %v1415 = vmul.f32 %v1109, %v1347
      %v1416 = vmul.f32 %v1110, %v1347
      %v1417 = vmax.f32 %v1349, %v1353
      %v1418 = vmax.f32 %v1417, %v1357
      %v1419 = vmax.f32 %v1418, %v1361
      %v1420 = vmax.f32 %v1419, %v1365
      %v1421 = vmax.f32 %v1420, %v1369
      %v1422 = vmax.f32 %v1421, %v1373
      %v1423 = vmax.f32 %v1422, %v1377
      %v1424 = vmax.f32 %v1423, %v1381
      %v1425 = vmax.f32 %v1424, %v1385
      %v1426 = vmax.f32 %v1425, %v1389
      %v1427 = vmax.f32 %v1426, %v1393
      %v1428 = vmax.f32 %v1427, %v1397
      %v1429 = vmax.f32 %v1428, %v1401
      %v1430 = vmax.f32 %v1429, %v1405
      %v1431 = vmax.f32 %v1430, %v1409
      %v1432 = vmax.f32 %v1431, %v1413
      %v1433 = vmax.f32 %v1350, %v1354
      %v1434 = vmax.f32 %v1433, %v1358
      %v1435 = vmax.f32 %v1434, %v1362
      %v1436 = vmax.f32 %v1435, %v1366
      %v1437 = vmax.f32 %v1436, %v1370
      %v1438 = vmax.f32 %v1437, %v1374
      %v1439 = vmax.f32 %v1438, %v1378
      %v1440 = vmax.f32 %v1439, %v1382
      %v1441 = vmax.f32 %v1440, %v1386
      %v1442 = vmax.f32 %v1441, %v1390
      %v1443 = vmax.f32 %v1442, %v1394
      %v1444 = vmax.f32 %v1443, %v1398
      %v1445 = vmax.f32 %v1444, %v1402
      %v1446 = vmax.f32 %v1445, %v1406
      %v1447 = vmax.f32 %v1446, %v1410
      %v1448 = vmax.f32 %v1447, %v1414
      %v1449 = vmax.f32 %v1351, %v1355
      %v1450 = vmax.f32 %v1449, %v1359
      %v1451 = vmax.f32 %v1450, %v1363
      %v1452 = vmax.f32 %v1451, %v1367
      %v1453 = vmax.f32 %v1452, %v1371
      %v1454 = vmax.f32 %v1453, %v1375
      %v1455 = vmax.f32 %v1454, %v1379
      %v1456 = vmax.f32 %v1455, %v1383
      %v1457 = vmax.f32 %v1456, %v1387
      %v1458 = vmax.f32 %v1457, %v1391
      %v1459 = vmax.f32 %v1458, %v1395
      %v1460 = vmax.f32 %v1459, %v1399
      %v1461 = vmax.f32 %v1460, %v1403
      %v1462 = vmax.f32 %v1461, %v1407
      %v1463 = vmax.f32 %v1462, %v1411
      %v1464 = vmax.f32 %v1463, %v1415
      %v1465 = vmax.f32 %v1352, %v1356
      %v1466 = vmax.f32 %v1465, %v1360
      %v1467 = vmax.f32 %v1466, %v1364
      %v1468 = vmax.f32 %v1467, %v1368
      %v1469 = vmax.f32 %v1468, %v1372
      %v1470 = vmax.f32 %v1469, %v1376
      %v1471 = vmax.f32 %v1470, %v1380
      %v1472 = vmax.f32 %v1471, %v1384
      %v1473 = vmax.f32 %v1472, %v1388
      %v1474 = vmax.f32 %v1473, %v1392
      %v1475 = vmax.f32 %v1474, %v1396
      %v1476 = vmax.f32 %v1475, %v1400
      %v1477 = vmax.f32 %v1476, %v1404
      %v1478 = vmax.f32 %v1477, %v1408
      %v1479 = vmax.f32 %v1478, %v1412
      %v1480 = vmax.f32 %v1479, %v1416
      %v1481 = vld [vmem:[%s315] sm:$0xff]
      %v1482 = vld [vmem:[%s315 + $0x8] sm:$0xff]
      %v1483 = vld [vmem:[%s315 + $0x10] sm:$0xff]
      %v1484 = vld [vmem:[%s315 + $0x18] sm:$0xff]
      %v1485 = vmax.f32 %v1481, %v1432
      %v1486 = vmax.f32 %v1482, %v1448
      %v1487 = vmax.f32 %v1483, %v1464
      %v1488 = vmax.f32 %v1484, %v1480
      %1489 = vst [vmem:[%s315] sm:$0xff] %v1485
      %1490 = vst [vmem:[%s315 + $0x8] sm:$0xff] %v1486
      %1491 = vst [vmem:[%s315 + $0x10] sm:$0xff] %v1487
      %1492 = vst [vmem:[%s315 + $0x18] sm:$0xff] %v1488
      %p1493 = scmp.lt.s32.totalorder %s21, 1
      %s1494 = scalar_select %p1493, %s21, 1
      %s1495 = smul.addr %s1494, 4
      %s1496 = smul.addr %s1495, 8
      %s1497 = scalar_lea.vmem %s6, %s1496
      // Predicated region
      $region49: #{_forward_impl.3} parent=43 // pred_check
        %p1498 = pneg %p187
      $region50: #{_forward_impl.3} parent=43 // pred_check_branch
        %1500 = sbr.rel (%p1498) target = $region52
      $region51: #{_forward_impl.3} parent=43 // pred_region
        _
      $region52: #{_forward_impl.3} parent=43 // pred_fallthru
        _
    $region44: #{_forward_impl.3} parent=5 // pred_fallthru
      _
    %p1501 = scmp.le.s32.totalorder 2, %s12
    // Predicated region
    $region53: #{_forward_impl.3} parent=5 // pred_check
      %p1502 = pneg %p1501
    $region54: #{_forward_impl.3} parent=5 // pred_check_branch
      %1504 = sbr.rel (%p1502) target = $region56
    $region55: #{_forward_impl.3} parent=5 // pred_region
      %s1505 = ssub.s32 %s12, 2
      // Predicated region
      $region57: #{_forward_impl.3} parent=55 // pred_check
        %p1506 = pneg %p193
      $region58: #{_forward_impl.3} parent=55 // pred_check_branch
        %1508 = sbr.rel (%p1506) target = $region60
      $region59: #{_forward_impl.3} parent=55 // pred_region
        %p1509 = scmp.lt.s32.totalorder %s23, 1
        %s1510 = scalar_select %p1509, %s23, 1
        %s1511 = smul.addr %s1510, 4
        %s1512 = smul.addr %s1511, 8
        %s1513 = scalar_lea.vmem %s6, %s1512
      $region60: #{_forward_impl.3} parent=55 // pred_fallthru
        _
    $region56: #{_forward_impl.3} parent=5 // pred_fallthru
      _
  $region6: #{_forward_impl.3} parent=0 // loop_footer
    %s16 = sadd.s32 1, %s12
  $region7: #{_forward_impl.3} parent=0 // loop_footer_branch
    %11 = sbr.rel target = $region3
  $region8: #{_forward_impl.3} parent=0 // loop_exit
    _

// kernel: _forward_impl.4
$region0: #{_forward_impl.4}
  #allocation0 [shape = 'u32[]', space=smem, size = 0x4, offset = 0x4, fixed_abs, tag = 'smem constant byte address 0x4 - core index']
  #allocation1 [shape = 'u32[144,128]{1,0:T(1,128)}', space=vmem, size = 0x12000, scoped, tag = 'internal scratch']
  %s0 = inlined_call_operand.vmem [shape: bf16[2,136,259], index: 0, kind: input, shape index: {}]
  %s1 = inlined_call_operand.vmem [shape: bf16[2,136,1], index: 1, kind: input, shape index: {}]
  %s2 = inlined_call_operand.vmem [shape: bf16[259,256], index: 2, kind: input, shape index: {}]
  %s3 = inlined_call_operand.vmem [shape: f32[1,256], index: 3, kind: input, shape index: {}]
  %s4 = inlined_call_operand.vmem [shape: bf16[256,384], index: 4, kind: input, shape index: {}]
  %s5 = inlined_call_operand.vmem [shape: f32[1,384], index: 5, kind: input, shape index: {}]
  %s6 = inlined_call_operand.vmem [shape: f32[2,8,384], index: 6, kind: output, shape index: {}]
  %s7 = sld [smem:[#allocation0]]
  $region61: #{_forward_impl.4} parent=0
    _
  %s9 = ssub.s32 1, %s7
  %s10 = scalar_select 0, %s9, %s7
  loop: start=0, step=1, limit=4
  $region2: #{_forward_impl.4} parent=0 // loop_pre_header
    _
  $region3: #{_forward_impl.4} parent=0 // loop_header
    %s12 = sphi 0, %s16
    %p13 = scmp.ge.s32.totalorder %s12, 4
    %s19 = sphi 0, %s31
    %s20 = sphi 0, %s27
    %s21 = sphi 0, %s19
    %s22 = sphi 0, %s20
    %s23 = sphi 0, %s21
    %s24 = sphi 0, %s22
    %s36 = sphi 0, %s38
    %s39 = sphi 0, %s36
    %s40 = sphi 0, %s39
    %s56 = sphi 0, %s40
    %s64 = sphi 0, %s66
    %s67 = sphi 0, %s64
    %s68 = sphi 0, %s67
    %s84 = sphi 0, %s68
    %s88 = sphi 0, %s88
    %s90 = sphi 0, %s88
    %s91 = sphi 0, %s90
    %s105 = sphi 0, %s91
    %s109 = sphi 0, %s109
    %s111 = sphi 0, %s109
    %s112 = sphi 0, %s111
    %s126 = sphi 0, %s112
    %s130 = sphi 0, %s130
    %s132 = sphi 0, %s130
    %s133 = sphi 0, %s132
    %s147 = sphi 0, %s133
    %s151 = sphi 0, %s151
    %s153 = sphi 0, %s151
    %s154 = sphi 0, %s153
    %s168 = sphi 0, %s154
    %s174 = sphi 0, %s176
    %s177 = sphi 0, %s174
    %s178 = sphi 0, %s177
    %s194 = sphi 0, %s178
  $region4: #{_forward_impl.4} parent=0 // loop_header_branch
    %15 = sbr.rel (%p13) target = $region8
  $region5: #{_forward_impl.4} parent=0 // loop_body
    %s17 = ssub.s32 %s12, 1
    %s18 = ssub.s32 %s12, 2
    %s25 = sadd.s32 1, %s20
    %p26 = scmp.ge.s32.totalorder %s25, 1
    %s27 = scalar_select %p26, 0, %s25
    %s28 = sadd.s32 1, %s19
    %s29 = scalar_select %p26, %s28, %s19
    %p30 = scmp.ge.s32.totalorder %s29, 2
    %s31 = scalar_select %p30, 0, %s29
    %s32 = ssub.s32 %s19, %s31
    %s33 = ssub.s32 %s20, %s27
    %s34 = sor.u32 %s32, %s33
    %p35 = scmp.eq.s32.totalorder %s34, 0
    %s37 = sadd.s32 %s36, 1
    %s38 = scalar_select %p35, %s36, %s37
    %p41 = pneg %p35
    %p42 = scmp.eq.s32.totalorder %s12, 1
    %p43 = por %p41, %p42
    %p44 = scmp.ne.s32.totalorder %s36, %s39
    %p45 = scmp.eq.s32.totalorder %s12, 0
    %p46 = por %p44, %p45
    %p47 = scmp.ne.s32.totalorder %s36, %s39
    %p48 = scmp.eq.s32.totalorder %s17, 1
    %p49 = por %p47, %p48
    %p50 = scmp.ne.s32.totalorder %s39, %s40
    %p51 = scmp.eq.s32.totalorder %s17, 0
    %p52 = por %p50, %p51
    %p53 = scmp.ne.s32.totalorder %s39, %s40
    %p54 = scmp.eq.s32.totalorder %s18, 1
    %p55 = por %p53, %p54
    %p57 = scmp.ne.s32.totalorder %s40, %s56
    %p58 = scmp.eq.s32.totalorder %s18, 0
    %p59 = por %p57, %p58
    %s60 = ssub.s32 %s19, %s31
    %s61 = ssub.s32 %s20, %s27
    %s62 = sor.u32 %s60, %s61
    %p63 = scmp.eq.s32.totalorder %s62, 0
    %s65 = sadd.s32 %s64, 1
    %s66 = scalar_select %p63, %s64, %s65
    %p69 = pneg %p63
    %p70 = scmp.eq.s32.totalorder %s12, 1
    %p71 = por %p69, %p70
    %p72 = scmp.ne.s32.totalorder %s64, %s67
    %p73 = scmp.eq.s32.totalorder %s12, 0
    %p74 = por %p72, %p73
    %p75 = scmp.ne.s32.totalorder %s64, %s67
    %p76 = scmp.eq.s32.totalorder %s17, 1
    %p77 = por %p75, %p76
    %p78 = scmp.ne.s32.totalorder %s67, %s68
    %p79 = scmp.eq.s32.totalorder %s17, 0
    %p80 = por %p78, %p79
    %p81 = scmp.ne.s32.totalorder %s67, %s68
    %p82 = scmp.eq.s32.totalorder %s18, 1
    %p83 = por %p81, %p82
    %p85 = scmp.ne.s32.totalorder %s68, %s84
    %p86 = scmp.eq.s32.totalorder %s18, 0
    %p87 = por %p85, %p86
    %s89 = sadd.s32 %s88, 1
    %p92 = scmp.eq.s32.totalorder %s12, 1
    %p93 = scmp.ne.s32.totalorder %s88, %s90
    %p94 = scmp.eq.s32.totalorder %s12, 0
    %p95 = por %p93, %p94
    %p96 = scmp.ne.s32.totalorder %s88, %s90
    %p97 = scmp.eq.s32.totalorder %s17, 1
    %p98 = por %p96, %p97
    %p99 = scmp.ne.s32.totalorder %s90, %s91
    %p100 = scmp.eq.s32.totalorder %s17, 0
    %p101 = por %p99, %p100
    %p102 = scmp.ne.s32.totalorder %s90, %s91
    %p103 = scmp.eq.s32.totalorder %s18, 1
    %p104 = por %p102, %p103
    %p106 = scmp.ne.s32.totalorder %s91, %s105
    %p107 = scmp.eq.s32.totalorder %s18, 0
    %p108 = por %p106, %p107
    %s110 = sadd.s32 %s109, 1
    %p113 = scmp.eq.s32.totalorder %s12, 1
    %p114 = scmp.ne.s32.totalorder %s109, %s111
    %p115 = scmp.eq.s32.totalorder %s12, 0
    %p116 = por %p114, %p115
    %p117 = scmp.ne.s32.totalorder %s109, %s111
    %p118 = scmp.eq.s32.totalorder %s17, 1
    %p119 = por %p117, %p118
    %p120 = scmp.ne.s32.totalorder %s111, %s112
    %p121 = scmp.eq.s32.totalorder %s17, 0
    %p122 = por %p120, %p121
    %p123 = scmp.ne.s32.totalorder %s111, %s112
    %p124 = scmp.eq.s32.totalorder %s18, 1
    %p125 = por %p123, %p124
    %p127 = scmp.ne.s32.totalorder %s112, %s126
    %p128 = scmp.eq.s32.totalorder %s18, 0
    %p129 = por %p127, %p128
    %s131 = sadd.s32 %s130, 1
    %p134 = scmp.eq.s32.totalorder %s12, 1
    %p135 = scmp.ne.s32.totalorder %s130, %s132
    %p136 = scmp.eq.s32.totalorder %s12, 0
    %p137 = por %p135, %p136
    %p138 = scmp.ne.s32.totalorder %s130, %s132
    %p139 = scmp.eq.s32.totalorder %s17, 1
    %p140 = por %p138, %p139
    %p141 = scmp.ne.s32.totalorder %s132, %s133
    %p142 = scmp.eq.s32.totalorder %s17, 0
    %p143 = por %p141, %p142
    %p144 = scmp.ne.s32.totalorder %s132, %s133
    %p145 = scmp.eq.s32.totalorder %s18, 1
    %p146 = por %p144, %p145
    %p148 = scmp.ne.s32.totalorder %s133, %s147
    %p149 = scmp.eq.s32.totalorder %s18, 0
    %p150 = por %p148, %p149
    %s152 = sadd.s32 %s151, 1
    %p155 = scmp.eq.s32.totalorder %s12, 1
    %p156 = scmp.ne.s32.totalorder %s151, %s153
    %p157 = scmp.eq.s32.totalorder %s12, 0
    %p158 = por %p156, %p157
    %p159 = scmp.ne.s32.totalorder %s151, %s153
    %p160 = scmp.eq.s32.totalorder %s17, 1
    %p161 = por %p159, %p160
    %p162 = scmp.ne.s32.totalorder %s153, %s154
    %p163 = scmp.eq.s32.totalorder %s17, 0
    %p164 = por %p162, %p163
    %p165 = scmp.ne.s32.totalorder %s153, %s154
    %p166 = scmp.eq.s32.totalorder %s18, 1
    %p167 = por %p165, %p166
    %p169 = scmp.ne.s32.totalorder %s154, %s168
    %p170 = scmp.eq.s32.totalorder %s18, 0
    %p171 = por %p169, %p170
    %s172 = ssub.s32 %s19, %s31
    %p173 = scmp.eq.s32.totalorder %s172, 0
    %s175 = sadd.s32 %s174, 1
    %s176 = scalar_select %p173, %s174, %s175
    %p179 = pneg %p173
    %p180 = scmp.eq.s32.totalorder %s12, 1
    %p181 = por %p179, %p180
    %p182 = scmp.ne.s32.totalorder %s174, %s177
    %p183 = scmp.eq.s32.totalorder %s12, 0
    %p184 = por %p182, %p183
    %p185 = scmp.ne.s32.totalorder %s174, %s177
    %p186 = scmp.eq.s32.totalorder %s17, 1
    %p187 = por %p185, %p186
    %p188 = scmp.ne.s32.totalorder %s177, %s178
    %p189 = scmp.eq.s32.totalorder %s17, 0
    %p190 = por %p188, %p189
    %p191 = scmp.ne.s32.totalorder %s177, %s178
    %p192 = scmp.eq.s32.totalorder %s18, 1
    %p193 = por %p191, %p192
    %p195 = scmp.ne.s32.totalorder %s178, %s194
    %p196 = scmp.eq.s32.totalorder %s18, 0
    %p197 = por %p195, %p196
    %p198 = scmp.le.s32.totalorder 1, %s12
    %p199 = scmp.lt.s32.totalorder %s12, 3
    %p200 = pnand %p198, %p199
    %p201 = pneg %p200
    // Predicated region
    $region9: #{_forward_impl.4} parent=5 // pred_check
      _
    $region10: #{_forward_impl.4} parent=5 // pred_check_branch
      %203 = sbr.rel (%p200) target = $region12
    $region11: #{_forward_impl.4} parent=5 // pred_region
      %s204 = ssub.s32 %s12, 1
      // Predicated region
      $region13: #{_forward_impl.4} parent=11 // pred_check
        %p205 = pneg %p101
      $region14: #{_forward_impl.4} parent=11 // pred_check_branch
        %207 = sbr.rel (%p205) target = $region16
      $region15: #{_forward_impl.4} parent=11 // pred_region
        _
      $region16: #{_forward_impl.4} parent=11 // pred_fallthru
        _
      // Predicated region
      $region17: #{_forward_impl.4} parent=11 // pred_check
        %p208 = pneg %p122
      $region18: #{_forward_impl.4} parent=11 // pred_check_branch
        %210 = sbr.rel (%p208) target = $region20
      $region19: #{_forward_impl.4} parent=11 // pred_region
        _
      $region20: #{_forward_impl.4} parent=11 // pred_fallthru
        _
      // Predicated region
      $region21: #{_forward_impl.4} parent=11 // pred_check
        %p211 = pneg %p143
      $region22: #{_forward_impl.4} parent=11 // pred_check_branch
        %213 = sbr.rel (%p211) target = $region24
      $region23: #{_forward_impl.4} parent=11 // pred_region
        _
      $region24: #{_forward_impl.4} parent=11 // pred_fallthru
        _
      // Predicated region
      $region25: #{_forward_impl.4} parent=11 // pred_check
        %p214 = pneg %p164
      $region26: #{_forward_impl.4} parent=11 // pred_check_branch
        %216 = sbr.rel (%p214) target = $region28
      $region27: #{_forward_impl.4} parent=11 // pred_region
        _
      $region28: #{_forward_impl.4} parent=11 // pred_fallthru
        _
    $region12: #{_forward_impl.4} parent=5 // pred_fallthru
      _
    %p217 = scmp.lt.s32.totalorder %s12, 2
    // Predicated region
    $region29: #{_forward_impl.4} parent=5 // pred_check
      %p218 = pneg %p217
    $region30: #{_forward_impl.4} parent=5 // pred_check_branch
      %220 = sbr.rel (%p218) target = $region32
    $region31: #{_forward_impl.4} parent=5 // pred_region
      // Predicated region
      $region33: #{_forward_impl.4} parent=31 // pred_check
        %p221 = pneg %p46
      $region34: #{_forward_impl.4} parent=31 // pred_check_branch
        %223 = sbr.rel (%p221) target = $region36
      $region35: #{_forward_impl.4} parent=31 // pred_region
        %s224 = smul.u32 17, %s20
        %p225 = scmp.lt.s32.totalorder %s19, 1
        %s226 = scalar_select %p225, %s19, 1
        %p227 = scmp.lt.s32.totalorder %s224, 16
        %s228 = scalar_select %p227, %s224, 16
        %s229 = smul.addr %s228, 3
        %s230 = smul.addr %s226, 51
        %s231 = sadd.s32 %s229, %s230
        %s232 = smul.addr %s231, 4
        %s233 = scalar_lea.vmem %s0, %s232
        %s234 = smul.u32 17, %s20
      $region36: #{_forward_impl.4} parent=31 // pred_fallthru
        _
      // Predicated region
      $region37: #{_forward_impl.4} parent=31 // pred_check
        %p235 = pneg %p74
      $region38: #{_forward_impl.4} parent=31 // pred_check_branch
        %237 = sbr.rel (%p235) target = $region40
      $region39: #{_forward_impl.4} parent=31 // pred_region
        %s238 = smul.u32 17, %s20
        %p239 = scmp.lt.s32.totalorder %s19, 1
        %s240 = scalar_select %p239, %s19, 1
        %p241 = scmp.lt.s32.totalorder %s238, 16
        %s242 = scalar_select %p241, %s238, 16
        %s243 = smul.addr %s240, 17
        %s244 = sadd.s32 %s242, %s243
        %s245 = smul.addr %s244, 4
        %s246 = scalar_lea.vmem %s1, %s245
        %s247 = smul.u32 17, %s20
      $region40: #{_forward_impl.4} parent=31 // pred_fallthru
        _
    $region32: #{_forward_impl.4} parent=5 // pred_fallthru
      _
    %p248 = scmp.le.s32.totalorder 1, %s12
    %p249 = scmp.lt.s32.totalorder %s12, 3
    %p250 = pnand %p248, %p249
    %p251 = pneg %p250
    // Predicated region
    $region41: #{_forward_impl.4} parent=5 // pred_check
      _
    $region42: #{_forward_impl.4} parent=5 // pred_check_branch
      %253 = sbr.rel (%p250) target = $region44
    $region43: #{_forward_impl.4} parent=5 // pred_region
      %s254 = ssub.s32 %s12, 1
      %s255 = smul.u32 17, %s22
      %p256 = scmp.lt.s32.totalorder %s21, 1
      %s257 = scalar_select %p256, %s21, 1
      %p258 = scmp.lt.s32.totalorder %s255, 16
      %s259 = scalar_select %p258, %s255, 16
      %s260 = smul.addr %s259, 3
      %s261 = smul.addr %s257, 51
      %s262 = sadd.s32 %s260, %s261
      %s263 = smul.addr %s262, 4
      %s264 = scalar_lea.vmem %s0, %s263
      %p265 = pneg %p52
      %p266 = pneg %p49
      %s267 = smul.u32 17, %s22
      %p268 = scmp.lt.s32.totalorder %s21, 1
      %s269 = scalar_select %p268, %s21, 1
      %p270 = scmp.lt.s32.totalorder %s267, 16
      %s271 = scalar_select %p270, %s267, 16
      %s272 = smul.addr %s269, 17
      %s273 = sadd.s32 %s271, %s272
      %s274 = smul.addr %s273, 4
      %s275 = scalar_lea.vmem %s1, %s274
      %p276 = pneg %p80
      %p277 = pneg %p77
      %p278 = pneg %p101
      %p279 = pneg %p98
      %p280 = pneg %p122
      %p281 = pneg %p119
      %p282 = pneg %p143
      %p283 = pneg %p140
      %p284 = pneg %p164
      %p285 = pneg %p161
      %p286 = pneg %p190
      %p287 = pneg %p187
      %p288 = scmp.lt.s32.totalorder %s21, 1
      %s289 = scalar_select %p288, %s21, 1
      %s290 = smul.addr %s289, 3
      %s291 = smul.addr %s290, 8
      %s292 = scalar_lea.vmem %s6, %s291
      %s293 = smul.u32 17, %s22
      %p294 = scmp.lt.s32.totalorder %s21, 1
      %s295 = scalar_select %p294, %s21, 1
      %p296 = scmp.lt.s32.totalorder %s293, 16
      %s297 = scalar_select %p296, %s293, 16
      %s298 = smul.addr %s297, 3
      %s299 = smul.addr %s295, 51
      %s300 = sadd.s32 %s298, %s299
      %s301 = smul.addr %s300, 4
      %s302 = scalar_lea.vmem %s0, %s301
      %s303 = smul.u32 17, %s22
      %s304 = smul.u32 17, %s22
      %p305 = scmp.lt.s32.totalorder %s21, 1
      %s306 = scalar_select %p305, %s21, 1
      %p307 = scmp.lt.s32.totalorder %s304, 16
      %s308 = scalar_select %p307, %s304, 16
      %s309 = smul.addr %s306, 17
      %s310 = sadd.s32 %s308, %s309
      %s311 = smul.addr %s310, 4
      %s312 = scalar_lea.vmem %s1, %s311
      %s313 = smul.u32 17, %s22
      %p314 = scmp.lt.s32.totalorder %s21, 1
      %s315 = scalar_select %p314, %s21, 1
      %s316 = smul.addr %s315, 3
      %s317 = smul.addr %s316, 8
      %s318 = scalar_lea.vmem %s6, %s317
      %p320 = scmp.eq.s32.totalorder %s22, 0
      // Predicated region
      $region45: #{_forward_impl.4} parent=43 // pred_check
        %p321 = pneg %p320
      $region46: #{_forward_impl.4} parent=43 // pred_check_branch
        %323 = sbr.rel (%p321) target = $region48
      $region47: #{_forward_impl.4} parent=43 // pred_region
        %324 = vst [vmem:[%s318] sm:$0xff] 0.0
        %325 = vst [vmem:[%s318 + $0x8] sm:$0xff] 0.0
        %326 = vst [vmem:[%s318 + $0x10] sm:$0xff] 0.0
      $region48: #{_forward_impl.4} parent=43 // pred_fallthru
        _
      %v327 = vld [vmem:[%s302] sm:$0xff]
      %v328 = vld [vmem:[%s302 + $0x8] sm:$0xf]
      %v329 = vld [vmem:[%s302 + $0xc] sm:$0xff]
      %v330 = vld [vmem:[%s302 + $0x14] sm:$0xf]
      %v331 = vld [vmem:[%s302 + $0x18] sm:$0xff]
      %v332 = vld [vmem:[%s302 + $0x20] sm:$0xf]
      %v333 = vld [vmem:[%s302 + $0x24] sm:$0xff]
      %v334 = vld [vmem:[%s302 + $0x2c] sm:$0xf]
      %v335 = vld [vmem:[%s302 + $0x30] sm:$0xff]
      %v336 = vld [vmem:[%s302 + $0x38] sm:$0xf]
      %v337 = vld [vmem:[%s302 + $0x3c] sm:$0xff]
      %v338 = vld [vmem:[%s302 + $0x44] sm:$0xf]
      %v339 = vld [vmem:[%s302 + $0x48] sm:$0xff]
      %v340 = vld [vmem:[%s302 + $0x50] sm:$0xf]
      %v341 = vld [vmem:[%s302 + $0x54] sm:$0xff]
      %v342 = vld [vmem:[%s302 + $0x5c] sm:$0xf]
      %v343 = vld [vmem:[%s302 + $0x60] sm:$0xff]
      %v344 = vld [vmem:[%s302 + $0x68] sm:$0xf]
      %v345 = vld [vmem:[%s302 + $0x6c] sm:$0xff]
      %v346 = vld [vmem:[%s302 + $0x74] sm:$0xf]
      %v347 = vld [vmem:[%s302 + $0x78] sm:$0xff]
      %v348 = vld [vmem:[%s302 + $0x80] sm:$0xf]
      %v349 = vld [vmem:[%s302 + $0x84] sm:$0xff]
      %v350 = vld [vmem:[%s302 + $0x8c] sm:$0xf]
      %v351 = vld [vmem:[%s302 + $0x90] sm:$0xff]
      %v352 = vld [vmem:[%s302 + $0x98] sm:$0xf]
      %v353 = vld [vmem:[%s302 + $0x9c] sm:$0xff]
      %v354 = vld [vmem:[%s302 + $0xa4] sm:$0xf]
      %v355 = vld [vmem:[%s302 + $0xa8] sm:$0xff]
      %v356 = vld [vmem:[%s302 + $0xb0] sm:$0xf]
      %v357 = vld [vmem:[%s302 + $0xb4] sm:$0xff]
      %v358 = vld [vmem:[%s302 + $0xbc] sm:$0xf]
      %v359 = vld [vmem:[%s302 + $0xc0] sm:$0xff]
      %v360 = vld [vmem:[%s302 + $0xc8] sm:$0xf]
      %v361 = vld [vmem:[%s2] sm:$0xff]
      %v362 = vld [vmem:[%s2 + $0x8] sm:$0xff]
      %v363 = vld [vmem:[%s2 + $0x10] sm:$0xff]
      %v364 = vld [vmem:[%s2 + $0x18] sm:$0xff]
      %v365 = vld [vmem:[%s2 + $0x20] sm:$0xff]
      %v366 = vld [vmem:[%s2 + $0x28] sm:$0xff]
      %v367 = vld [vmem:[%s2 + $0x30] sm:$0xff]
      %v368 = vld [vmem:[%s2 + $0x38] sm:$0xff]
      %v369 = vld [vmem:[%s2 + $0x40] sm:$0xff]
      %v370 = vld [vmem:[%s2 + $0x48] sm:$0xff]
      %v371 = vld [vmem:[%s2 + $0x50] sm:$0xff]
      %v372 = vld [vmem:[%s2 + $0x58] sm:$0xff]
      %v373 = vld [vmem:[%s2 + $0x60] sm:$0xff]
      %v374 = vld [vmem:[%s2 + $0x68] sm:$0xff]
      %v375 = vld [vmem:[%s2 + $0x70] sm:$0xff]
      %v376 = vld [vmem:[%s2 + $0x78] sm:$0xff]
      %v377 = vld [vmem:[%s2 + $0x80] sm:$0xff]
      %v378 = vld [vmem:[%s2 + $0x88] sm:$0xff]
      %v379 = vld [vmem:[%s2 + $0x90] sm:$0xff]
      %v380 = vld [vmem:[%s2 + $0x98] sm:$0xff]
      %v381 = vld [vmem:[%s2 + $0xa0] sm:$0xff]
      %v382 = vld [vmem:[%s2 + $0xa8] sm:$0xff]
      %v383 = vld [vmem:[%s2 + $0xb0] sm:$0xff]
      %v384 = vld [vmem:[%s2 + $0xb8] sm:$0xff]
      %v385 = vld [vmem:[%s2 + $0xc0] sm:$0xff]
      %v386 = vld [vmem:[%s2 + $0xc8] sm:$0xff]
      %v387 = vld [vmem:[%s2 + $0xd0] sm:$0xff]
      %v388 = vld [vmem:[%s2 + $0xd8] sm:$0xff]
      %v389 = vld [vmem:[%s2 + $0xe0] sm:$0xff]
      %v390 = vld [vmem:[%s2 + $0xe8] sm:$0xff]
      %v391 = vld [vmem:[%s2 + $0xf0] sm:$0xff]
      %v392 = vld [vmem:[%s2 + $0xf8] sm:$0xff]
      %v393 = vld [vmem:[%s2 + $0x100] sm:$0x33]
      %v394 = vld [vmem:[%s3] sm:$0x3]
      %v396 = vlaneseq
      %v397 = vshrl.u32 %v396, 7
      %v398 = vsub.s32 0, %v397
      %v399 = vrot.slane %v394, %v398
      %v400 = vlaneseq
      %v401 = vshrl.u32 %v400, 7
      %v402 = vsub.s32 1, %v401
      %v403 = vrot.slane %v394, %v402
      %v440 = vunpack.c.l.b16 %v327
      %v441 = vunpack.c.h.b16 %v327
      %v442 = vunpack.c.l.b16 %v328
      %v443 = vunpack.c.l.b16 %v329
      %v444 = vunpack.c.h.b16 %v329
      %v445 = vunpack.c.l.b16 %v330
      %v446 = vunpack.c.l.b16 %v331
      %v447 = vunpack.c.h.b16 %v331
      %v448 = vunpack.c.l.b16 %v332
      %v449 = vunpack.c.l.b16 %v333
      %v450 = vunpack.c.h.b16 %v333
      %v451 = vunpack.c.l.b16 %v334
      %v452 = vunpack.c.l.b16 %v335
      %v453 = vunpack.c.h.b16 %v335
      %v454 = vunpack.c.l.b16 %v336
      %v455 = vunpack.c.l.b16 %v337
      %v456 = vunpack.c.h.b16 %v337
      %v457 = vunpack.c.l.b16 %v338
      %v458 = vunpack.c.l.b16 %v339
      %v459 = vunpack.c.h.b16 %v339
      %v460 = vunpack.c.l.b16 %v340
      %v461 = vunpack.c.l.b16 %v341
      %v462 = vunpack.c.h.b16 %v341
      %v463 = vunpack.c.l.b16 %v342
      %v464 = vunpack.c.l.b16 %v343
      %v465 = vunpack.c.h.b16 %v343
      %v466 = vunpack.c.l.b16 %v344
      %v467 = vunpack.c.l.b16 %v345
      %v468 = vunpack.c.h.b16 %v345
      %v469 = vunpack.c.l.b16 %v346
      %v470 = vunpack.c.l.b16 %v347
      %v471 = vunpack.c.h.b16 %v347
      %v472 = vunpack.c.l.b16 %v348
      %v473 = vunpack.c.l.b16 %v349
      %v474 = vunpack.c.h.b16 %v349
      %v475 = vunpack.c.l.b16 %v350
      %v476 = vunpack.c.l.b16 %v351
      %v477 = vunpack.c.h.b16 %v351
      %v478 = vunpack.c.l.b16 %v352
      %v479 = vunpack.c.l.b16 %v353
      %v480 = vunpack.c.h.b16 %v353
      %v481 = vunpack.c.l.b16 %v354
      %v482 = vunpack.c.l.b16 %v355
      %v483 = vunpack.c.h.b16 %v355
      %v484 = vunpack.c.l.b16 %v356
      %v485 = vunpack.c.l.b16 %v357
      %v486 = vunpack.c.h.b16 %v357
      %v487 = vunpack.c.l.b16 %v358
      %v488 = vunpack.c.l.b16 %v359
      %v489 = vunpack.c.h.b16 %v359
      %v490 = vunpack.c.l.b16 %v360
      %v491 = vpack.c.b16 %v443, %v440
      %v492 = vpack.c.b16 %v444, %v441
      %v493 = vpack.c.b16 %v445, %v442
      %v494 = vpack.c.b16 %v449, %v446
      %v495 = vpack.c.b16 %v450, %v447
      %v496 = vpack.c.b16 %v451, %v448
      %v497 = vpack.c.b16 %v455, %v452
      %v498 = vpack.c.b16 %v456, %v453
      %v499 = vpack.c.b16 %v457, %v454
      %v500 = vpack.c.b16 %v461, %v458
      %v501 = vpack.c.b16 %v462, %v459
      %v502 = vpack.c.b16 %v463, %v460
      %v503 = vpack.c.b16 %v467, %v464
      %v504 = vpack.c.b16 %v468, %v465
      %v505 = vpack.c.b16 %v469, %v466
      %v506 = vpack.c.b16 %v473, %v470
      %v507 = vpack.c.b16 %v474, %v471
      %v508 = vpack.c.b16 %v475, %v472
      %v509 = vpack.c.b16 %v479, %v476
      %v510 = vpack.c.b16 %v480, %v477
      %v511 = vpack.c.b16 %v481, %v478
      %v512 = vpack.c.b16 %v485, %v482
      %v513 = vpack.c.b16 %v486, %v483
      %v514 = vpack.c.b16 %v487, %v484
      %v515 = vpack.c.b16 %v488, %v488
      %v516 = vpack.c.b16 %v489, %v489
      %v517 = vpack.c.b16 %v490, %v490
      %v569 = vunpack.c.l.b16 %v361
      %v570 = vunpack.c.h.b16 %v361
      %v571 = vunpack.c.l.b16 %v362
      %v572 = vunpack.c.h.b16 %v362
      %v573 = vunpack.c.l.b16 %v363
      %v574 = vunpack.c.h.b16 %v363
      %v575 = vunpack.c.l.b16 %v364
      %v576 = vunpack.c.h.b16 %v364
      %v577 = vunpack.c.l.b16 %v365
      %v578 = vunpack.c.h.b16 %v365
      %v579 = vunpack.c.l.b16 %v366
      %v580 = vunpack.c.h.b16 %v366
      %v581 = vunpack.c.l.b16 %v367
      %v582 = vunpack.c.h.b16 %v367
      %v583 = vunpack.c.l.b16 %v368
      %v584 = vunpack.c.h.b16 %v368
      %v585 = vunpack.c.l.b16 %v369
      %v586 = vunpack.c.h.b16 %v369
      %v587 = vunpack.c.l.b16 %v370
      %v588 = vunpack.c.h.b16 %v370
      %v589 = vunpack.c.l.b16 %v371
      %v590 = vunpack.c.h.b16 %v371
      %v591 = vunpack.c.l.b16 %v372
      %v592 = vunpack.c.h.b16 %v372
      %v593 = vunpack.c.l.b16 %v373
      %v594 = vunpack.c.h.b16 %v373
      %v595 = vunpack.c.l.b16 %v374
      %v596 = vunpack.c.h.b16 %v374
      %v597 = vunpack.c.l.b16 %v375
      %v598 = vunpack.c.h.b16 %v375
      %v599 = vunpack.c.l.b16 %v376
      %v600 = vunpack.c.h.b16 %v376
      %v601 = vunpack.c.l.b16 %v377
      %v602 = vunpack.c.h.b16 %v377
      %v603 = vunpack.c.l.b16 %v378
      %v604 = vunpack.c.h.b16 %v378
      %v605 = vunpack.c.l.b16 %v379
      %v606 = vunpack.c.h.b16 %v379
      %v607 = vunpack.c.l.b16 %v380
      %v608 = vunpack.c.h.b16 %v380
      %v609 = vunpack.c.l.b16 %v381
      %v610 = vunpack.c.h.b16 %v381
      %v611 = vunpack.c.l.b16 %v382
      %v612 = vunpack.c.h.b16 %v382
      %v613 = vunpack.c.l.b16 %v383
      %v614 = vunpack.c.h.b16 %v383
      %v615 = vunpack.c.l.b16 %v384
      %v616 = vunpack.c.h.b16 %v384
      %v617 = vunpack.c.l.b16 %v385
      %v618 = vunpack.c.h.b16 %v385
      %v619 = vunpack.c.l.b16 %v386
      %v620 = vunpack.c.h.b16 %v386
      %v621 = vunpack.c.l.b16 %v387
      %v622 = vunpack.c.h.b16 %v387
      %v623 = vunpack.c.l.b16 %v388
      %v624 = vunpack.c.h.b16 %v388
      %v625 = vunpack.c.l.b16 %v389
      %v626 = vunpack.c.h.b16 %v389
      %v627 = vunpack.c.l.b16 %v390
      %v628 = vunpack.c.h.b16 %v390
      %v629 = vunpack.c.l.b16 %v391
      %v630 = vunpack.c.h.b16 %v391
      %v631 = vunpack.c.l.b16 %v392
      %v632 = vunpack.c.h.b16 %v392
      %v633 = vunpack.c.l.b16 %v393
      %v634 = vunpack.c.h.b16 %v393
      %v635 = vpack.c.b16 %v571, %v569
      %v636 = vpack.c.b16 %v572, %v570
      %v637 = vpack.c.b16 %v575, %v573
      %v638 = vpack.c.b16 %v576, %v574
      %v639 = vpack.c.b16 %v579, %v577
      %v640 = vpack.c.b16 %v580, %v578
      %v641 = vpack.c.b16 %v583, %v581
      %v642 = vpack.c.b16 %v584, %v582
      %v643 = vpack.c.b16 %v587, %v585
      %v644 = vpack.c.b16 %v588, %v586
      %v645 = vpack.c.b16 %v591, %v589
      %v646 = vpack.c.b16 %v592, %v590
      %v647 = vpack.c.b16 %v595, %v593
      %v648 = vpack.c.b16 %v596, %v594
      %v649 = vpack.c.b16 %v599, %v597
      %v650 = vpack.c.b16 %v600, %v598
      %v651 = vpack.c.b16 %v603, %v601
      %v652 = vpack.c.b16 %v604, %v602
      %v653 = vpack.c.b16 %v607, %v605
      %v654 = vpack.c.b16 %v608, %v606
      %v655 = vpack.c.b16 %v611, %v609
      %v656 = vpack.c.b16 %v612, %v610
      %v657 = vpack.c.b16 %v615, %v613
      %v658 = vpack.c.b16 %v616, %v614
      %v659 = vpack.c.b16 %v619, %v617
      %v660 = vpack.c.b16 %v620, %v618
      %v661 = vpack.c.b16 %v623, %v621
      %v662 = vpack.c.b16 %v624, %v622
      %v663 = vpack.c.b16 %v627, %v625
      %v664 = vpack.c.b16 %v628, %v626
      %v665 = vpack.c.b16 %v631, %v629
      %v666 = vpack.c.b16 %v632, %v630
      %v667 = vpack.c.b16 %v633, %v633
      %v668 = vpack.c.b16 %v634, %v634
      %vm701 = vcmask 23552
      %v703 = vsel %vm701, %v493, 0
      %v706 = vsel %vm701, %v496, 0
      %v709 = vsel %vm701, %v499, 0
      %v712 = vsel %vm701, %v502, 0
      %v715 = vsel %vm701, %v505, 0
      %v718 = vsel %vm701, %v508, 0
      %v721 = vsel %vm701, %v511, 0
      %v724 = vsel %vm701, %v514, 0
      %v727 = vsel %vm701, %v517, 0
      %vm729 = vcmask 1040384
      %vm730 = vcmask 1041408
      %v731 = vsel %vm729, 4294967295, 65535
      %v732 = vsel %vm730, %v731, 0
      %v734 = vand.u32 %v667, %v732
      %v737 = vand.u32 %v668, %v732
      %739 = vmatprep.subr.bf16.mxu0 %v650
      %740 = vmatpush1.bf16.msra.mxu0 %v649
      %741 = vmatprep.subr.bf16.mxu0 %v648
      %742 = vmatpush1.bf16.msra.mxu0 %v647
      %743 = vmatprep.subr.bf16.mxu0 %v646
      %744 = vmatpush1.bf16.msra.mxu0 %v645
      %745 = vmatprep.subr.bf16.mxu0 %v644
      %746 = vmatpush1.bf16.msra.mxu0 %v643
      %747 = vmatprep.subr.bf16.mxu0 %v642
      %748 = vmatpush1.bf16.msra.mxu0 %v641
      %749 = vmatprep.subr.bf16.mxu0 %v640
      %750 = vmatpush1.bf16.msra.mxu0 %v639
      %751 = vmatprep.subr.bf16.mxu0 %v638
      %752 = vmatpush1.bf16.msra.mxu0 %v637
      %753 = vmatprep.subr.bf16.mxu0 %v636
      %754 = vmatpush1.bf16.msra.mxu0 %v635
      %755 = vmatprep.subr.bf16.mxu0 %v666
      %756 = vmatpush2.bf16.msra.mxu0 %v665
      %757 = vmatprep.subr.bf16.mxu0 %v664
      %758 = vmatpush2.bf16.msra.mxu0 %v663
      %759 = vmatprep.subr.bf16.mxu0 %v662
      %760 = vmatpush2.bf16.msra.mxu0 %v661
      %761 = vmatprep.subr.bf16.mxu0 %v660
      %762 = vmatpush2.bf16.msra.mxu0 %v659
      %763 = vmatprep.subr.bf16.mxu0 %v658
      %764 = vmatpush2.bf16.msra.mxu0 %v657
      %765 = vmatprep.subr.bf16.mxu0 %v656
      %766 = vmatpush2.bf16.msra.mxu0 %v655
      %767 = vmatprep.subr.bf16.mxu0 %v654
      %768 = vmatpush2.bf16.msra.mxu0 %v653
      %769 = vmatprep.subr.bf16.mxu0 %v652
      %770 = vmatpush2.bf16.msra.mxu0 %v651
      %771 = vmatprep.mubr.bf16.mxu0 %v492
      %772 = vmatmul.mubr.bf16.gmra.mxu0 %v491
      %v773 = vpop.f32.mrf.mxu0
      %v774 = vadd.f32 %v399, %v773
      %v775 = vpop.f32.mrf.mxu0
      %v776 = vadd.f32 %v403, %v775
      %v777 = vpop.f32.mrf.mxu0
      %v778 = vadd.f32 %v399, %v777
      %v779 = vpop.f32.mrf.mxu0
      %v780 = vadd.f32 %v403, %v779
      %781 = vmatprep.mubr.bf16.mxu0 %v495
      %782 = vmatmul.mubr.bf16.gmra.mxu0 %v494
      %v783 = vpop.f32.mrf.mxu0
      %v784 = vadd.f32 %v399, %v783
      %v785 = vpop.f32.mrf.mxu0
      %v786 = vadd.f32 %v403, %v785
      %v787 = vpop.f32.mrf.mxu0
      %v788 = vadd.f32 %v399, %v787
      %v789 = vpop.f32.mrf.mxu0
      %v790 = vadd.f32 %v403, %v789
      %791 = vmatprep.mubr.bf16.mxu0 %v498
      %792 = vmatmul.mubr.bf16.gmra.mxu0 %v497
      %v793 = vpop.f32.mrf.mxu0
      %v794 = vadd.f32 %v399, %v793
      %v795 = vpop.f32.mrf.mxu0
      %v796 = vadd.f32 %v403, %v795
      %v797 = vpop.f32.mrf.mxu0
      %v798 = vadd.f32 %v399, %v797
      %v799 = vpop.f32.mrf.mxu0
      %v800 = vadd.f32 %v403, %v799
      %801 = vmatprep.mubr.bf16.mxu0 %v501
      %802 = vmatmul.mubr.bf16.gmra.mxu0 %v500
      %v803 = vpop.f32.mrf.mxu0
      %v804 = vadd.f32 %v399, %v803
      %v805 = vpop.f32.mrf.mxu0
      %v806 = vadd.f32 %v403, %v805
      %v807 = vpop.f32.mrf.mxu0
      %v808 = vadd.f32 %v399, %v807
      %v809 = vpop.f32.mrf.mxu0
      %v810 = vadd.f32 %v403, %v809
      %811 = vmatprep.mubr.bf16.mxu0 %v504
      %812 = vmatmul.mubr.bf16.gmra.mxu0 %v503
      %v813 = vpop.f32.mrf.mxu0
      %v814 = vadd.f32 %v399, %v813
      %v815 = vpop.f32.mrf.mxu0
      %v816 = vadd.f32 %v403, %v815
      %v817 = vpop.f32.mrf.mxu0
      %v818 = vadd.f32 %v399, %v817
      %v819 = vpop.f32.mrf.mxu0
      %v820 = vadd.f32 %v403, %v819
      %821 = vmatprep.mubr.bf16.mxu0 %v507
      %822 = vmatmul.mubr.bf16.gmra.mxu0 %v506
      %v823 = vpop.f32.mrf.mxu0
      %v824 = vadd.f32 %v399, %v823
      %v825 = vpop.f32.mrf.mxu0
      %v826 = vadd.f32 %v403, %v825
      %v827 = vpop.f32.mrf.mxu0
      %v828 = vadd.f32 %v399, %v827
      %v829 = vpop.f32.mrf.mxu0
      %v830 = vadd.f32 %v403, %v829
      %831 = vmatprep.mubr.bf16.mxu0 %v510
      %832 = vmatmul.mubr.bf16.gmra.mxu0 %v509
      %v833 = vpop.f32.mrf.mxu0
      %v834 = vadd.f32 %v399, %v833
      %v835 = vpop.f32.mrf.mxu0
      %v836 = vadd.f32 %v403, %v835
      %v837 = vpop.f32.mrf.mxu0
      %v838 = vadd.f32 %v399, %v837
      %v839 = vpop.f32.mrf.mxu0
      %v840 = vadd.f32 %v403, %v839
      %841 = vmatprep.mubr.bf16.mxu0 %v513
      %842 = vmatmul.mubr.bf16.gmra.mxu0 %v512
      %v843 = vpop.f32.mrf.mxu0
      %v844 = vadd.f32 %v399, %v843
      %v845 = vpop.f32.mrf.mxu0
      %v846 = vadd.f32 %v403, %v845
      %v847 = vpop.f32.mrf.mxu0
      %v848 = vadd.f32 %v399, %v847
      %v849 = vpop.f32.mrf.mxu0
      %v850 = vadd.f32 %v403, %v849
      %851 = vmatprep.mubr.bf16.mxu0 %v516
      %852 = vmatmul.mubr.bf16.gmra.mxu0 %v515
      %v853 = vpop.f32.mrf.mxu0
      %v854 = vadd.f32 %v399, %v853
      %v855 = vpop.f32.mrf.mxu0
      %v856 = vadd.f32 %v403, %v855
      %v857 = vpop.f32.mrf.mxu0
      %v858 = vpop.f32.mrf.mxu0
      %859 = vdwg.mxu0
      %860 = vmatprep.subr.bf16.mxu0 0
      %861 = vmatpush1.bf16.msra.mxu0 0
      %862 = vmatprep.subr.bf16.mxu0 0
      %863 = vmatpush1.bf16.msra.mxu0 0
      %864 = vmatprep.subr.bf16.mxu0 0
      %865 = vmatpush1.bf16.msra.mxu0 0
      %866 = vmatprep.subr.bf16.mxu0 0
      %867 = vmatpush1.bf16.msra.mxu0 0
      %868 = vmatprep.subr.bf16.mxu0 0
      %869 = vmatpush1.bf16.msra.mxu0 0
      %870 = vmatprep.subr.bf16.mxu0 0
      %871 = vmatpush1.bf16.msra.mxu0 0
      %872 = vmatprep.subr.bf16.mxu0 0
      %873 = vmatpush1.bf16.msra.mxu0 0
      %874 = vmatprep.subr.bf16.mxu0 %v737
      %875 = vmatpush1.bf16.msra.mxu0 %v734
      %876 = vmatprep.subr.bf16.mxu0 0
      %877 = vmatpush2.bf16.msra.mxu0 0
      %878 = vmatprep.subr.bf16.mxu0 0
      %879 = vmatpush2.bf16.msra.mxu0 0
      %880 = vmatprep.subr.bf16.mxu0 0
      %881 = vmatpush2.bf16.msra.mxu0 0
      %882 = vmatprep.subr.bf16.mxu0 0
      %883 = vmatpush2.bf16.msra.mxu0 0
      %884 = vmatprep.subr.bf16.mxu0 0
      %885 = vmatpush2.bf16.msra.mxu0 0
      %886 = vmatprep.subr.bf16.mxu0 0
      %887 = vmatpush2.bf16.msra.mxu0 0
      %888 = vmatprep.subr.bf16.mxu0 0
      %889 = vmatpush2.bf16.msra.mxu0 0
      %890 = vmatprep.subr.bf16.mxu0 0
      %891 = vmatpush2.bf16.msra.mxu0 0
      %892 = vmatprep.mubr.bf16.mxu0 0
      %893 = vmatmul.mubr.bf16.gmra.mxu0 %v703
      %v894 = vpop.f32.mrf.mxu0
      %v895 = vadd.f32 %v774, %v894
      %v896 = vpop.f32.mrf.mxu0
      %v897 = vadd.f32 %v776, %v896
      %v898 = vpop.f32.mrf.mxu0
      %v899 = vadd.f32 %v778, %v898
      %v900 = vpop.f32.mrf.mxu0
      %v901 = vadd.f32 %v780, %v900
      %902 = vmatprep.mubr.bf16.mxu0 0
      %903 = vmatmul.mubr.bf16.gmra.mxu0 %v706
      %v904 = vpop.f32.mrf.mxu0
      %v905 = vadd.f32 %v784, %v904
      %v906 = vpop.f32.mrf.mxu0
      %v907 = vadd.f32 %v786, %v906
      %v908 = vpop.f32.mrf.mxu0
      %v909 = vadd.f32 %v788, %v908
      %v910 = vpop.f32.mrf.mxu0
      %v911 = vadd.f32 %v790, %v910
      %912 = vmatprep.mubr.bf16.mxu0 0
      %913 = vmatmul.mubr.bf16.gmra.mxu0 %v709
      %v914 = vpop.f32.mrf.mxu0
      %v915 = vadd.f32 %v794, %v914
      %v916 = vpop.f32.mrf.mxu0
      %v917 = vadd.f32 %v796, %v916
      %v918 = vpop.f32.mrf.mxu0
      %v919 = vadd.f32 %v798, %v918
      %v920 = vpop.f32.mrf.mxu0
      %v921 = vadd.f32 %v800, %v920
      %922 = vmatprep.mubr.bf16.mxu0 0
      %923 = vmatmul.mubr.bf16.gmra.mxu0 %v712
      %v924 = vpop.f32.mrf.mxu0
      %v925 = vadd.f32 %v804, %v924
      %v926 = vpop.f32.mrf.mxu0
      %v927 = vadd.f32 %v806, %v926
      %v928 = vpop.f32.mrf.mxu0
      %v929 = vadd.f32 %v808, %v928
      %v930 = vpop.f32.mrf.mxu0
      %v931 = vadd.f32 %v810, %v930
      %932 = vmatprep.mubr.bf16.mxu0 0
      %933 = vmatmul.mubr.bf16.gmra.mxu0 %v715
      %v934 = vpop.f32.mrf.mxu0
      %v935 = vadd.f32 %v814, %v934
      %v936 = vpop.f32.mrf.mxu0
      %v937 = vadd.f32 %v816, %v936
      %v938 = vpop.f32.mrf.mxu0
      %v939 = vadd.f32 %v818, %v938
      %v940 = vpop.f32.mrf.mxu0
      %v941 = vadd.f32 %v820, %v940
      %942 = vmatprep.mubr.bf16.mxu0 0
      %943 = vmatmul.mubr.bf16.gmra.mxu0 %v718
      %v944 = vpop.f32.mrf.mxu0
      %v945 = vadd.f32 %v824, %v944
      %v946 = vpop.f32.mrf.mxu0
      %v947 = vadd.f32 %v826, %v946
      %v948 = vpop.f32.mrf.mxu0
      %v949 = vadd.f32 %v828, %v948
      %v950 = vpop.f32.mrf.mxu0
      %v951 = vadd.f32 %v830, %v950
      %952 = vmatprep.mubr.bf16.mxu0 0
      %953 = vmatmul.mubr.bf16.gmra.mxu0 %v721
      %v954 = vpop.f32.mrf.mxu0
      %v955 = vadd.f32 %v834, %v954
      %v956 = vpop.f32.mrf.mxu0
      %v957 = vadd.f32 %v836, %v956
      %v958 = vpop.f32.mrf.mxu0
      %v959 = vadd.f32 %v838, %v958
      %v960 = vpop.f32.mrf.mxu0
      %v961 = vadd.f32 %v840, %v960
      %962 = vmatprep.mubr.bf16.mxu0 0
      %963 = vmatmul.mubr.bf16.gmra.mxu0 %v724
      %v964 = vpop.f32.mrf.mxu0
      %v965 = vadd.f32 %v844, %v964
      %v966 = vpop.f32.mrf.mxu0
      %v967 = vadd.f32 %v846, %v966
      %v968 = vpop.f32.mrf.mxu0
      %v969 = vadd.f32 %v848, %v968
      %v970 = vpop.f32.mrf.mxu0
      %v971 = vadd.f32 %v850, %v970
      %972 = vmatprep.mubr.bf16.mxu0 0
      %973 = vmatmul.mubr.bf16.gmra.mxu0 %v727
      %v974 = vpop.f32.mrf.mxu0
      %v975 = vadd.f32 %v854, %v974
      %v976 = vpop.f32.mrf.mxu0
      %v977 = vadd.f32 %v856, %v976
      %v978 = vpop.f32.mrf.mxu0
      %v979 = vpop.f32.mrf.mxu0
      %980 = vdwg.mxu0
      %v981 = vmax.f32 %v895, 0.0
      %v982 = vmax.f32 %v897, 0.0
      %v983 = vmax.f32 %v899, 0.0
      %v984 = vmax.f32 %v901, 0.0
      %v985 = vmax.f32 %v905, 0.0
      %v986 = vmax.f32 %v907, 0.0
      %v987 = vmax.f32 %v909, 0.0
      %v988 = vmax.f32 %v911, 0.0
      %v989 = vmax.f32 %v915, 0.0
      %v990 = vmax.f32 %v917, 0.0
      %v991 = vmax.f32 %v919, 0.0
      %v992 = vmax.f32 %v921, 0.0
      %v993 = vmax.f32 %v925, 0.0
      %v994 = vmax.f32 %v927, 0.0
      %v995 = vmax.f32 %v929, 0.0
      %v996 = vmax.f32 %v931, 0.0
      %v997 = vmax.f32 %v935, 0.0
      %v998 = vmax.f32 %v937, 0.0
      %v999 = vmax.f32 %v939, 0.0
      %v1000 = vmax.f32 %v941, 0.0
      %v1001 = vmax.f32 %v945, 0.0
      %v1002 = vmax.f32 %v947, 0.0
      %v1003 = vmax.f32 %v949, 0.0
      %v1004 = vmax.f32 %v951, 0.0
      %v1005 = vmax.f32 %v955, 0.0
      %v1006 = vmax.f32 %v957, 0.0
      %v1007 = vmax.f32 %v959, 0.0
      %v1008 = vmax.f32 %v961, 0.0
      %v1009 = vmax.f32 %v965, 0.0
      %v1010 = vmax.f32 %v967, 0.0
      %v1011 = vmax.f32 %v969, 0.0
      %v1012 = vmax.f32 %v971, 0.0
      %v1013 = vmax.f32 %v975, 0.0
      %v1014 = vmax.f32 %v977, 0.0
      %v1015 = vpack.c.bf16 %v983, %v981
      %v1016 = vpack.c.bf16 %v984, %v982
      %v1017 = vpack.c.bf16 %v987, %v985
      %v1018 = vpack.c.bf16 %v988, %v986
      %v1019 = vpack.c.bf16 %v991, %v989
      %v1020 = vpack.c.bf16 %v992, %v990
      %v1021 = vpack.c.bf16 %v995, %v993
      %v1022 = vpack.c.bf16 %v996, %v994
      %v1023 = vpack.c.bf16 %v999, %v997
      %v1024 = vpack.c.bf16 %v1000, %v998
      %v1025 = vpack.c.bf16 %v1003, %v1001
      %v1026 = vpack.c.bf16 %v1004, %v1002
      %v1027 = vpack.c.bf16 %v1007, %v1005
      %v1028 = vpack.c.bf16 %v1008, %v1006
      %v1029 = vpack.c.bf16 %v1011, %v1009
      %v1030 = vpack.c.bf16 %v1012, %v1010
      %v1031 = vpack.c.bf16 %v1013, %v1013
      %v1032 = vpack.c.bf16 %v1014, %v1014
      %v1033 = vld [vmem:[%s4] sm:$0xff]
      %v1034 = vld [vmem:[%s4 + $0x8] sm:$0xf]
      %v1035 = vld [vmem:[%s4 + $0xc] sm:$0xff]
      %v1036 = vld [vmem:[%s4 + $0x14] sm:$0xf]
      %v1037 = vld [vmem:[%s4 + $0x18] sm:$0xff]
      %v1038 = vld [vmem:[%s4 + $0x20] sm:$0xf]
      %v1039 = vld [vmem:[%s4 + $0x24] sm:$0xff]
      %v1040 = vld [vmem:[%s4 + $0x2c] sm:$0xf]
      %v1041 = vld [vmem:[%s4 + $0x30] sm:$0xff]
      %v1042 = vld [vmem:[%s4 + $0x38] sm:$0xf]
      %v1043 = vld [vmem:[%s4 + $0x3c] sm:$0xff]
      %v1044 = vld [vmem:[%s4 + $0x44] sm:$0xf]
      %v1045 = vld [vmem:[%s4 + $0x48] sm:$0xff]
      %v1046 = vld [vmem:[%s4 + $0x50] sm:$0xf]
      %v1047 = vld [vmem:[%s4 + $0x54] sm:$0xff]
      %v1048 = vld [vmem:[%s4 + $0x5c] sm:$0xf]
      %v1049 = vld [vmem:[%s4 + $0x60] sm:$0xff]
      %v1050 = vld [vmem:[%s4 + $0x68] sm:$0xf]
      %v1051 = vld [vmem:[%s4 + $0x6c] sm:$0xff]
      %v1052 = vld [vmem:[%s4 + $0x74] sm:$0xf]
      %v1053 = vld [vmem:[%s4 + $0x78] sm:$0xff]
      %v1054 = vld [vmem:[%s4 + $0x80] sm:$0xf]
      %v1055 = vld [vmem:[%s4 + $0x84] sm:$0xff]
      %v1056 = vld [vmem:[%s4 + $0x8c] sm:$0xf]
      %v1057 = vld [vmem:[%s4 + $0x90] sm:$0xff]
      %v1058 = vld [vmem:[%s4 + $0x98] sm:$0xf]
      %v1059 = vld [vmem:[%s4 + $0x9c] sm:$0xff]
      %v1060 = vld [vmem:[%s4 + $0xa4] sm:$0xf]
      %v1061 = vld [vmem:[%s4 + $0xa8] sm:$0xff]
      %v1062 = vld [vmem:[%s4 + $0xb0] sm:$0xf]
      %v1063 = vld [vmem:[%s4 + $0xb4] sm:$0xff]
      %v1064 = vld [vmem:[%s4 + $0xbc] sm:$0xf]
      %v1065 = vld [vmem:[%s4 + $0xc0] sm:$0xff]
      %v1066 = vld [vmem:[%s4 + $0xc8] sm:$0xf]
      %v1067 = vld [vmem:[%s4 + $0xcc] sm:$0xff]
      %v1068 = vld [vmem:[%s4 + $0xd4] sm:$0xf]
      %v1069 = vld [vmem:[%s4 + $0xd8] sm:$0xff]
      %v1070 = vld [vmem:[%s4 + $0xe0] sm:$0xf]
      %v1071 = vld [vmem:[%s4 + $0xe4] sm:$0xff]
      %v1072 = vld [vmem:[%s4 + $0xec] sm:$0xf]
      %v1073 = vld [vmem:[%s4 + $0xf0] sm:$0xff]
      %v1074 = vld [vmem:[%s4 + $0xf8] sm:$0xf]
      %v1075 = vld [vmem:[%s4 + $0xfc] sm:$0xff]
      %v1076 = vld [vmem:[%s4 + $0x104] sm:$0xf]
      %v1077 = vld [vmem:[%s4 + $0x108] sm:$0xff]
      %v1078 = vld [vmem:[%s4 + $0x110] sm:$0xf]
      %v1079 = vld [vmem:[%s4 + $0x114] sm:$0xff]
      %v1080 = vld [vmem:[%s4 + $0x11c] sm:$0xf]
      %v1081 = vld [vmem:[%s4 + $0x120] sm:$0xff]
      %v1082 = vld [vmem:[%s4 + $0x128] sm:$0xf]
      %v1083 = vld [vmem:[%s4 + $0x12c] sm:$0xff]
      %v1084 = vld [vmem:[%s4 + $0x134] sm:$0xf]
      %v1085 = vld [vmem:[%s4 + $0x138] sm:$0xff]
      %v1086 = vld [vmem:[%s4 + $0x140] sm:$0xf]
      %v1087 = vld [vmem:[%s4 + $0x144] sm:$0xff]
      %v1088 = vld [vmem:[%s4 + $0x14c] sm:$0xf]
      %v1089 = vld [vmem:[%s4 + $0x150] sm:$0xff]
      %v1090 = vld [vmem:[%s4 + $0x158] sm:$0xf]
      %v1091 = vld [vmem:[%s4 + $0x15c] sm:$0xff]
      %v1092 = vld [vmem:[%s4 + $0x164] sm:$0xf]
      %v1093 = vld [vmem:[%s4 + $0x168] sm:$0xff]
      %v1094 = vld [vmem:[%s4 + $0x170] sm:$0xf]
      %v1095 = vld [vmem:[%s4 + $0x174] sm:$0xff]
      %v1096 = vld [vmem:[%s4 + $0x17c] sm:$0xf]
      %v1097 = vld [vmem:[%s5] sm:$0x7]
      %v1099 = vlaneseq
      %v1100 = vshrl.u32 %v1099, 7
      %v1101 = vsub.s32 0, %v1100
      %v1102 = vrot.slane %v1097, %v1101
      %v1103 = vlaneseq
      %v1104 = vshrl.u32 %v1103, 7
      %v1105 = vsub.s32 1, %v1104
      %v1106 = vrot.slane %v1097, %v1105
      %v1107 = vlaneseq
      %v1108 = vshrl.u32 %v1107, 7
      %v1109 = vsub.s32 2, %v1108
      %v1110 = vrot.slane %v1097, %v1109
      %v1178 = vunpack.c.l.b16 %v1033
      %v1179 = vunpack.c.h.b16 %v1033
      %v1180 = vunpack.c.l.b16 %v1034
      %v1181 = vunpack.c.l.b16 %v1035
      %v1182 = vunpack.c.h.b16 %v1035
      %v1183 = vunpack.c.l.b16 %v1036
      %v1184 = vunpack.c.l.b16 %v1037
      %v1185 = vunpack.c.h.b16 %v1037
      %v1186 = vunpack.c.l.b16 %v1038
      %v1187 = vunpack.c.l.b16 %v1039
      %v1188 = vunpack.c.h.b16 %v1039
      %v1189 = vunpack.c.l.b16 %v1040
      %v1190 = vunpack.c.l.b16 %v1041
      %v1191 = vunpack.c.h.b16 %v1041
      %v1192 = vunpack.c.l.b16 %v1042
      %v1193 = vunpack.c.l.b16 %v1043
      %v1194 = vunpack.c.h.b16 %v1043
      %v1195 = vunpack.c.l.b16 %v1044
      %v1196 = vunpack.c.l.b16 %v1045
      %v1197 = vunpack.c.h.b16 %v1045
      %v1198 = vunpack.c.l.b16 %v1046
      %v1199 = vunpack.c.l.b16 %v1047
      %v1200 = vunpack.c.h.b16 %v1047
      %v1201 = vunpack.c.l.b16 %v1048
      %v1202 = vunpack.c.l.b16 %v1049
      %v1203 = vunpack.c.h.b16 %v1049
      %v1204 = vunpack.c.l.b16 %v1050
      %v1205 = vunpack.c.l.b16 %v1051
      %v1206 = vunpack.c.h.b16 %v1051
      %v1207 = vunpack.c.l.b16 %v1052
      %v1208 = vunpack.c.l.b16 %v1053
      %v1209 = vunpack.c.h.b16 %v1053
      %v1210 = vunpack.c.l.b16 %v1054
      %v1211 = vunpack.c.l.b16 %v1055
      %v1212 = vunpack.c.h.b16 %v1055
      %v1213 = vunpack.c.l.b16 %v1056
      %v1214 = vunpack.c.l.b16 %v1057
      %v1215 = vunpack.c.h.b16 %v1057
      %v1216 = vunpack.c.l.b16 %v1058
      %v1217 = vunpack.c.l.b16 %v1059
      %v1218 = vunpack.c.h.b16 %v1059
      %v1219 = vunpack.c.l.b16 %v1060
      %v1220 = vunpack.c.l.b16 %v1061
      %v1221 = vunpack.c.h.b16 %v1061
      %v1222 = vunpack.c.l.b16 %v1062
      %v1223 = vunpack.c.l.b16 %v1063
      %v1224 = vunpack.c.h.b16 %v1063
      %v1225 = vunpack.c.l.b16 %v1064
      %v1226 = vunpack.c.l.b16 %v1065
      %v1227 = vunpack.c.h.b16 %v1065
      %v1228 = vunpack.c.l.b16 %v1066
      %v1229 = vunpack.c.l.b16 %v1067
      %v1230 = vunpack.c.h.b16 %v1067
      %v1231 = vunpack.c.l.b16 %v1068
      %v1232 = vunpack.c.l.b16 %v1069
      %v1233 = vunpack.c.h.b16 %v1069
      %v1234 = vunpack.c.l.b16 %v1070
      %v1235 = vunpack.c.l.b16 %v1071
      %v1236 = vunpack.c.h.b16 %v1071
      %v1237 = vunpack.c.l.b16 %v1072
      %v1238 = vunpack.c.l.b16 %v1073
      %v1239 = vunpack.c.h.b16 %v1073
      %v1240 = vunpack.c.l.b16 %v1074
      %v1241 = vunpack.c.l.b16 %v1075
      %v1242 = vunpack.c.h.b16 %v1075
      %v1243 = vunpack.c.l.b16 %v1076
      %v1244 = vunpack.c.l.b16 %v1077
      %v1245 = vunpack.c.h.b16 %v1077
      %v1246 = vunpack.c.l.b16 %v1078
      %v1247 = vunpack.c.l.b16 %v1079
      %v1248 = vunpack.c.h.b16 %v1079
      %v1249 = vunpack.c.l.b16 %v1080
      %v1250 = vunpack.c.l.b16 %v1081
      %v1251 = vunpack.c.h.b16 %v1081
      %v1252 = vunpack.c.l.b16 %v1082
      %v1253 = vunpack.c.l.b16 %v1083
      %v1254 = vunpack.c.h.b16 %v1083
      %v1255 = vunpack.c.l.b16 %v1084
      %v1256 = vunpack.c.l.b16 %v1085
      %v1257 = vunpack.c.h.b16 %v1085
      %v1258 = vunpack.c.l.b16 %v1086
      %v1259 = vunpack.c.l.b16 %v1087
      %v1260 = vunpack.c.h.b16 %v1087
      %v1261 = vunpack.c.l.b16 %v1088
      %v1262 = vunpack.c.l.b16 %v1089
      %v1263 = vunpack.c.h.b16 %v1089
      %v1264 = vunpack.c.l.b16 %v1090
      %v1265 = vunpack.c.l.b16 %v1091
      %v1266 = vunpack.c.h.b16 %v1091
      %v1267 = vunpack.c.l.b16 %v1092
      %v1268 = vunpack.c.l.b16 %v1093
      %v1269 = vunpack.c.h.b16 %v1093
      %v1270 = vunpack.c.l.b16 %v1094
      %v1271 = vunpack.c.l.b16 %v1095
      %v1272 = vunpack.c.h.b16 %v1095
      %v1273 = vunpack.c.l.b16 %v1096
      %v1274 = vpack.c.b16 %v1181, %v1178
      %v1275 = vpack.c.b16 %v1182, %v1179
      %v1276 = vpack.c.b16 %v1183, %v1180
      %v1277 = vpack.c.b16 %v1187, %v1184
      %v1278 = vpack.c.b16 %v1188, %v1185
      %v1279 = vpack.c.b16 %v1189, %v1186
      %v1280 = vpack.c.b16 %v1193, %v1190
      %v1281 = vpack.c.b16 %v1194, %v1191
      %v1282 = vpack.c.b16 %v1195, %v1192
      %v1283 = vpack.c.b16 %v1199, %v1196
      %v1284 = vpack.c.b16 %v1200, %v1197
      %v1285 = vpack.c.b16 %v1201, %v1198
      %v1286 = vpack.c.b16 %v1205, %v1202
      %v1287 = vpack.c.b16 %v1206, %v1203
      %v1288 = vpack.c.b16 %v1207, %v1204
      %v1289 = vpack.c.b16 %v1211, %v1208
      %v1290 = vpack.c.b16 %v1212, %v1209
      %v1291 = vpack.c.b16 %v1213, %v1210
      %v1292 = vpack.c.b16 %v1217, %v1214
      %v1293 = vpack.c.b16 %v1218, %v1215
      %v1294 = vpack.c.b16 %v1219, %v1216
      %v1295 = vpack.c.b16 %v1223, %v1220
      %v1296 = vpack.c.b16 %v1224, %v1221
      %v1297 = vpack.c.b16 %v1225, %v1222
      %v1298 = vpack.c.b16 %v1229, %v1226
      %v1299 = vpack.c.b16 %v1230, %v1227
      %v1300 = vpack.c.b16 %v1231, %v1228
      %v1301 = vpack.c.b16 %v1235, %v1232
      %v1302 = vpack.c.b16 %v1236, %v1233
      %v1303 = vpack.c.b16 %v1237, %v1234
      %v1304 = vpack.c.b16 %v1241, %v1238
      %v1305 = vpack.c.b16 %v1242, %v1239
      %v1306 = vpack.c.b16 %v1243, %v1240
      %v1307 = vpack.c.b16 %v1247, %v1244
      %v1308 = vpack.c.b16 %v1248, %v1245
      %v1309 = vpack.c.b16 %v1249, %v1246
      %v1310 = vpack.c.b16 %v1253, %v1250
      %v1311 = vpack.c.b16 %v1254, %v1251
      %v1312 = vpack.c.b16 %v1255, %v1252
      %v1313 = vpack.c.b16 %v1259, %v1256
      %v1314 = vpack.c.b16 %v1260, %v1257
      %v1315 = vpack.c.b16 %v1261, %v1258
      %v1316 = vpack.c.b16 %v1265, %v1262
      %v1317 = vpack.c.b16 %v1266, %v1263
      %v1318 = vpack.c.b16 %v1267, %v1264
      %v1319 = vpack.c.b16 %v1271, %v1268
      %v1320 = vpack.c.b16 %v1272, %v1269
      %v1321 = vpack.c.b16 %v1273, %v1270
      %1370 = vmatprep.subr.bf16.mxu0 %v1296
      %1371 = vmatpush1.bf16.msra.mxu0 %v1295
      %1372 = vmatprep.subr.bf16.mxu0 %v1293
      %1373 = vmatpush1.bf16.msra.mxu0 %v1292
      %1374 = vmatprep.subr.bf16.mxu0 %v1290
      %1375 = vmatpush1.bf16.msra.mxu0 %v1289
      %1376 = vmatprep.subr.bf16.mxu0 %v1287
      %1377 = vmatpush1.bf16.msra.mxu0 %v1286
      %1378 = vmatprep.subr.bf16.mxu0 %v1284
      %1379 = vmatpush1.bf16.msra.mxu0 %v1283
      %1380 = vmatprep.subr.bf16.mxu0 %v1281
      %1381 = vmatpush1.bf16.msra.mxu0 %v1280
      %1382 = vmatprep.subr.bf16.mxu0 %v1278
      %1383 = vmatpush1.bf16.msra.mxu0 %v1277
      %1384 = vmatprep.subr.bf16.mxu0 %v1275
      %1385 = vmatpush1.bf16.msra.mxu0 %v1274
      %1386 = vmatprep.subr.bf16.mxu0 %v1320
      %1387 = vmatpush2.bf16.msra.mxu0 %v1319
      %1388 = vmatprep.subr.bf16.mxu0 %v1317
      %1389 = vmatpush2.bf16.msra.mxu0 %v1316
      %1390 = vmatprep.subr.bf16.mxu0 %v1314
      %1391 = vmatpush2.bf16.msra.mxu0 %v1313
      %1392 = vmatprep.subr.bf16.mxu0 %v1311
      %1393 = vmatpush2.bf16.msra.mxu0 %v1310
      %1394 = vmatprep.subr.bf16.mxu0 %v1308
      %1395 = vmatpush2.bf16.msra.mxu0 %v1307
      %1396 = vmatprep.subr.bf16.mxu0 %v1305
      %1397 = vmatpush2.bf16.msra.mxu0 %v1304
      %1398 = vmatprep.subr.bf16.mxu0 %v1302
      %1399 = vmatpush2.bf16.msra.mxu0 %v1301
      %1400 = vmatprep.subr.bf16.mxu0 %v1299
      %1401 = vmatpush2.bf16.msra.mxu0 %v1298
      %1402 = vmatprep.mubr.bf16.mxu0 %v1016
      %1403 = vmatmul.mubr.bf16.gmra.mxu0 %v1015
      %v1404 = vpop.f32.mrf.mxu0
      %v1405 = vadd.f32 %v1102, %v1404
      %v1406 = vpop.f32.mrf.mxu0
      %v1407 = vadd.f32 %v1106, %v1406
      %v1408 = vpop.f32.mrf.mxu0
      %v1409 = vadd.f32 %v1102, %v1408
      %v1410 = vpop.f32.mrf.mxu0
      %v1411 = vadd.f32 %v1106, %v1410
      %1412 = vmatprep.mubr.bf16.mxu0 %v1018
      %1413 = vmatmul.mubr.bf16.gmra.mxu0 %v1017
      %v1414 = vpop.f32.mrf.mxu0
      %v1415 = vadd.f32 %v1102, %v1414
      %v1416 = vpop.f32.mrf.mxu0
      %v1417 = vadd.f32 %v1106, %v1416
      %v1418 = vpop.f32.mrf.mxu0
      %v1419 = vadd.f32 %v1102, %v1418
      %v1420 = vpop.f32.mrf.mxu0
      %v1421 = vadd.f32 %v1106, %v1420
      %1422 = vmatprep.mubr.bf16.mxu0 %v1020
      %1423 = vmatmul.mubr.bf16.gmra.mxu0 %v1019
      %v1424 = vpop.f32.mrf.mxu0
      %v1425 = vadd.f32 %v1102, %v1424
      %v1426 = vpop.f32.mrf.mxu0
      %v1427 = vadd.f32 %v1106, %v1426
      %v1428 = vpop.f32.mrf.mxu0
      %v1429 = vadd.f32 %v1102, %v1428
      %v1430 = vpop.f32.mrf.mxu0
      %v1431 = vadd.f32 %v1106, %v1430
      %1432 = vmatprep.mubr.bf16.mxu0 %v1022
      %1433 = vmatmul.mubr.bf16.gmra.mxu0 %v1021
      %v1434 = vpop.f32.mrf.mxu0
      %v1435 = vadd.f32 %v1102, %v1434
      %v1436 = vpop.f32.mrf.mxu0
      %v1437 = vadd.f32 %v1106, %v1436
      %v1438 = vpop.f32.mrf.mxu0
      %v1439 = vadd.f32 %v1102, %v1438
      %v1440 = vpop.f32.mrf.mxu0
      %v1441 = vadd.f32 %v1106, %v1440
      %1442 = vmatprep.mubr.bf16.mxu0 %v1024
      %1443 = vmatmul.mubr.bf16.gmra.mxu0 %v1023
      %v1444 = vpop.f32.mrf.mxu0
      %v1445 = vadd.f32 %v1102, %v1444
      %v1446 = vpop.f32.mrf.mxu0
      %v1447 = vadd.f32 %v1106, %v1446
      %v1448 = vpop.f32.mrf.mxu0
      %v1449 = vadd.f32 %v1102, %v1448
      %v1450 = vpop.f32.mrf.mxu0
      %v1451 = vadd.f32 %v1106, %v1450
      %1452 = vmatprep.mubr.bf16.mxu0 %v1026
      %1453 = vmatmul.mubr.bf16.gmra.mxu0 %v1025
      %v1454 = vpop.f32.mrf.mxu0
      %v1455 = vadd.f32 %v1102, %v1454
      %v1456 = vpop.f32.mrf.mxu0
      %v1457 = vadd.f32 %v1106, %v1456
      %v1458 = vpop.f32.mrf.mxu0
      %v1459 = vadd.f32 %v1102, %v1458
      %v1460 = vpop.f32.mrf.mxu0
      %v1461 = vadd.f32 %v1106, %v1460
      %1462 = vmatprep.mubr.bf16.mxu0 %v1028
      %1463 = vmatmul.mubr.bf16.gmra.mxu0 %v1027
      %v1464 = vpop.f32.mrf.mxu0
      %v1465 = vadd.f32 %v1102, %v1464
      %v1466 = vpop.f32.mrf.mxu0
      %v1467 = vadd.f32 %v1106, %v1466
      %v1468 = vpop.f32.mrf.mxu0
      %v1469 = vadd.f32 %v1102, %v1468
      %v1470 = vpop.f32.mrf.mxu0
      %v1471 = vadd.f32 %v1106, %v1470
      %1472 = vmatprep.mubr.bf16.mxu0 %v1030
      %1473 = vmatmul.mubr.bf16.gmra.mxu0 %v1029
      %v1474 = vpop.f32.mrf.mxu0
      %v1475 = vadd.f32 %v1102, %v1474
      %v1476 = vpop.f32.mrf.mxu0
      %v1477 = vadd.f32 %v1106, %v1476
      %v1478 = vpop.f32.mrf.mxu0
      %v1479 = vadd.f32 %v1102, %v1478
      %v1480 = vpop.f32.mrf.mxu0
      %v1481 = vadd.f32 %v1106, %v1480
      %1482 = vmatprep.mubr.bf16.mxu0 %v1032
      %1483 = vmatmul.mubr.bf16.gmra.mxu0 %v1031
      %v1484 = vpop.f32.mrf.mxu0
      %v1485 = vadd.f32 %v1102, %v1484
      %v1486 = vpop.f32.mrf.mxu0
      %v1487 = vadd.f32 %v1106, %v1486
      %v1488 = vpop.f32.mrf.mxu0
      %v1489 = vpop.f32.mrf.mxu0
      %1490 = vdwg.mxu0
      %1491 = vmatprep.subr.bf16.mxu0 0
      %1492 = vmatpush1.bf16.msra.mxu0 %v1297
      %1493 = vmatprep.subr.bf16.mxu0 0
      %1494 = vmatpush1.bf16.msra.mxu0 %v1294
      %1495 = vmatprep.subr.bf16.mxu0 0
      %1496 = vmatpush1.bf16.msra.mxu0 %v1291
      %1497 = vmatprep.subr.bf16.mxu0 0
      %1498 = vmatpush1.bf16.msra.mxu0 %v1288
      %1499 = vmatprep.subr.bf16.mxu0 0
      %1500 = vmatpush1.bf16.msra.mxu0 %v1285
      %1501 = vmatprep.subr.bf16.mxu0 0
      %1502 = vmatpush1.bf16.msra.mxu0 %v1282
      %1503 = vmatprep.subr.bf16.mxu0 0
      %1504 = vmatpush1.bf16.msra.mxu0 %v1279
      %1505 = vmatprep.subr.bf16.mxu0 0
      %1506 = vmatpush1.bf16.msra.mxu0 %v1276
      %1507 = vmatprep.subr.bf16.mxu0 0
      %1508 = vmatpush2.bf16.msra.mxu0 %v1321
      %1509 = vmatprep.subr.bf16.mxu0 0
      %1510 = vmatpush2.bf16.msra.mxu0 %v1318
      %1511 = vmatprep.subr.bf16.mxu0 0
      %1512 = vmatpush2.bf16.msra.mxu0 %v1315
      %1513 = vmatprep.subr.bf16.mxu0 0
      %1514 = vmatpush2.bf16.msra.mxu0 %v1312
      %1515 = vmatprep.subr.bf16.mxu0 0
      %1516 = vmatpush2.bf16.msra.mxu0 %v1309
      %1517 = vmatprep.subr.bf16.mxu0 0
      %1518 = vmatpush2.bf16.msra.mxu0 %v1306
      %1519 = vmatprep.subr.bf16.mxu0 0
      %1520 = vmatpush2.bf16.msra.mxu0 %v1303
      %1521 = vmatprep.subr.bf16.mxu0 0
      %1522 = vmatpush2.bf16.msra.mxu0 %v1300
      %1523 = vmatprep.mubr.bf16.mxu0 %v1016
      %1524 = vmatmul.mubr.bf16.gmra.mxu0 %v1015
      %v1525 = vpop.f32.mrf.mxu0
      %v1526 = vadd.f32 %v1110, %v1525
      %v1527 = vpop.f32.mrf.mxu0
      %v1528 = vpop.f32.mrf.mxu0
      %v1529 = vadd.f32 %v1110, %v1528
      %v1530 = vpop.f32.mrf.mxu0
      %1531 = vmatprep.mubr.bf16.mxu0 %v1018
      %1532 = vmatmul.mubr.bf16.gmra.mxu0 %v1017
      %v1533 = vpop.f32.mrf.mxu0
      %v1534 = vadd.f32 %v1110, %v1533
      %v1535 = vpop.f32.mrf.mxu0
      %v1536 = vpop.f32.mrf.mxu0
      %v1537 = vadd.f32 %v1110, %v1536
      %v1538 = vpop.f32.mrf.mxu0
      %1539 = vmatprep.mubr.bf16.mxu0 %v1020
      %1540 = vmatmul.mubr.bf16.gmra.mxu0 %v1019
      %v1541 = vpop.f32.mrf.mxu0
      %v1542 = vadd.f32 %v1110, %v1541
      %v1543 = vpop.f32.mrf.mxu0
      %v1544 = vpop.f32.mrf.mxu0
      %v1545 = vadd.f32 %v1110, %v1544
      %v1546 = vpop.f32.mrf.mxu0
      %1547 = vmatprep.mubr.bf16.mxu0 %v1022
      %1548 = vmatmul.mubr.bf16.gmra.mxu0 %v1021
      %v1549 = vpop.f32.mrf.mxu0
      %v1550 = vadd.f32 %v1110, %v1549
      %v1551 = vpop.f32.mrf.mxu0
      %v1552 = vpop.f32.mrf.mxu0
      %v1553 = vadd.f32 %v1110, %v1552
      %v1554 = vpop.f32.mrf.mxu0
      %1555 = vmatprep.mubr.bf16.mxu0 %v1024
      %1556 = vmatmul.mubr.bf16.gmra.mxu0 %v1023
      %v1557 = vpop.f32.mrf.mxu0
      %v1558 = vadd.f32 %v1110, %v1557
      %v1559 = vpop.f32.mrf.mxu0
      %v1560 = vpop.f32.mrf.mxu0
      %v1561 = vadd.f32 %v1110, %v1560
      %v1562 = vpop.f32.mrf.mxu0
      %1563 = vmatprep.mubr.bf16.mxu0 %v1026
      %1564 = vmatmul.mubr.bf16.gmra.mxu0 %v1025
      %v1565 = vpop.f32.mrf.mxu0
      %v1566 = vadd.f32 %v1110, %v1565
      %v1567 = vpop.f32.mrf.mxu0
      %v1568 = vpop.f32.mrf.mxu0
      %v1569 = vadd.f32 %v1110, %v1568
      %v1570 = vpop.f32.mrf.mxu0
      %1571 = vmatprep.mubr.bf16.mxu0 %v1028
      %1572 = vmatmul.mubr.bf16.gmra.mxu0 %v1027
      %v1573 = vpop.f32.mrf.mxu0
      %v1574 = vadd.f32 %v1110, %v1573
      %v1575 = vpop.f32.mrf.mxu0
      %v1576 = vpop.f32.mrf.mxu0
      %v1577 = vadd.f32 %v1110, %v1576
      %v1578 = vpop.f32.mrf.mxu0
      %1579 = vmatprep.mubr.bf16.mxu0 %v1030
      %1580 = vmatmul.mubr.bf16.gmra.mxu0 %v1029
      %v1581 = vpop.f32.mrf.mxu0
      %v1582 = vadd.f32 %v1110, %v1581
      %v1583 = vpop.f32.mrf.mxu0
      %v1584 = vpop.f32.mrf.mxu0
      %v1585 = vadd.f32 %v1110, %v1584
      %v1586 = vpop.f32.mrf.mxu0
      %1587 = vmatprep.mubr.bf16.mxu0 %v1032
      %1588 = vmatmul.mubr.bf16.gmra.mxu0 %v1031
      %v1589 = vpop.f32.mrf.mxu0
      %v1590 = vadd.f32 %v1110, %v1589
      %v1591 = vpop.f32.mrf.mxu0
      %v1592 = vpop.f32.mrf.mxu0
      %v1593 = vpop.f32.mrf.mxu0
      %1594 = vdwg.mxu0
      %v1595 = vmax.f32 %v1405, 0.0
      %v1596 = vmax.f32 %v1407, 0.0
      %v1597 = vmax.f32 %v1526, 0.0
      %v1598 = vmax.f32 %v1409, 0.0
      %v1599 = vmax.f32 %v1411, 0.0
      %v1600 = vmax.f32 %v1529, 0.0
      %v1601 = vmax.f32 %v1415, 0.0
      %v1602 = vmax.f32 %v1417, 0.0
      %v1603 = vmax.f32 %v1534, 0.0
      %v1604 = vmax.f32 %v1419, 0.0
      %v1605 = vmax.f32 %v1421, 0.0
      %v1606 = vmax.f32 %v1537, 0.0
      %v1607 = vmax.f32 %v1425, 0.0
      %v1608 = vmax.f32 %v1427, 0.0
      %v1609 = vmax.f32 %v1542, 0.0
      %v1610 = vmax.f32 %v1429, 0.0
      %v1611 = vmax.f32 %v1431, 0.0
      %v1612 = vmax.f32 %v1545, 0.0
      %v1613 = vmax.f32 %v1435, 0.0
      %v1614 = vmax.f32 %v1437, 0.0
      %v1615 = vmax.f32 %v1550, 0.0
      %v1616 = vmax.f32 %v1439, 0.0
      %v1617 = vmax.f32 %v1441, 0.0
      %v1618 = vmax.f32 %v1553, 0.0
      %v1619 = vmax.f32 %v1445, 0.0
      %v1620 = vmax.f32 %v1447, 0.0
      %v1621 = vmax.f32 %v1558, 0.0
      %v1622 = vmax.f32 %v1449, 0.0
      %v1623 = vmax.f32 %v1451, 0.0
      %v1624 = vmax.f32 %v1561, 0.0
      %v1625 = vmax.f32 %v1455, 0.0
      %v1626 = vmax.f32 %v1457, 0.0
      %v1627 = vmax.f32 %v1566, 0.0
      %v1628 = vmax.f32 %v1459, 0.0
      %v1629 = vmax.f32 %v1461, 0.0
      %v1630 = vmax.f32 %v1569, 0.0
      %v1631 = vmax.f32 %v1465, 0.0
      %v1632 = vmax.f32 %v1467, 0.0
      %v1633 = vmax.f32 %v1574, 0.0
      %v1634 = vmax.f32 %v1469, 0.0
      %v1635 = vmax.f32 %v1471, 0.0
      %v1636 = vmax.f32 %v1577, 0.0
      %v1637 = vmax.f32 %v1475, 0.0
      %v1638 = vmax.f32 %v1477, 0.0
      %v1639 = vmax.f32 %v1582, 0.0
      %v1640 = vmax.f32 %v1479, 0.0
      %v1641 = vmax.f32 %v1481, 0.0
      %v1642 = vmax.f32 %v1585, 0.0
      %v1643 = vmax.f32 %v1485, 0.0
      %v1644 = vmax.f32 %v1487, 0.0
      %v1645 = vmax.f32 %v1590, 0.0
      %v1646 = vld [vmem:[%s312] sm:$0xf]
      %v1647 = vld [vmem:[%s312 + $0x4] sm:$0xf]
      %v1648 = vld [vmem:[%s312 + $0x8] sm:$0xf]
      %v1649 = vld [vmem:[%s312 + $0xc] sm:$0xf]
      %v1650 = vld [vmem:[%s312 + $0x10] sm:$0xf]
      %v1651 = vld [vmem:[%s312 + $0x14] sm:$0xf]
      %v1652 = vld [vmem:[%s312 + $0x18] sm:$0xf]
      %v1653 = vld [vmem:[%s312 + $0x1c] sm:$0xf]
      %v1654 = vld [vmem:[%s312 + $0x20] sm:$0xf]
      %v1655 = vld [vmem:[%s312 + $0x24] sm:$0xf]
      %v1656 = vld [vmem:[%s312 + $0x28] sm:$0xf]
      %v1657 = vld [vmem:[%s312 + $0x2c] sm:$0xf]
      %v1658 = vld [vmem:[%s312 + $0x30] sm:$0xf]
      %v1659 = vld [vmem:[%s312 + $0x34] sm:$0xf]
      %v1660 = vld [vmem:[%s312 + $0x38] sm:$0xf]
      %v1661 = vld [vmem:[%s312 + $0x3c] sm:$0xf]
      %v1662 = vld [vmem:[%s312 + $0x40] sm:$0xf]
      %v1663 = vunpack.c.l.bf16 %v1646
      %v1664 = vunpack.c.l.bf16 %v1647
      %v1665 = vunpack.c.l.bf16 %v1648
      %v1666 = vunpack.c.l.bf16 %v1649
      %v1667 = vunpack.c.l.bf16 %v1650
      %v1668 = vunpack.c.l.bf16 %v1651
      %v1669 = vunpack.c.l.bf16 %v1652
      %v1670 = vunpack.c.l.bf16 %v1653
      %v1671 = vunpack.c.l.bf16 %v1654
      %v1672 = vunpack.c.l.bf16 %v1655
      %v1673 = vunpack.c.l.bf16 %v1656
      %v1674 = vunpack.c.l.bf16 %v1657
      %v1675 = vunpack.c.l.bf16 %v1658
      %v1676 = vunpack.c.l.bf16 %v1659
      %v1677 = vunpack.c.l.bf16 %v1660
      %v1678 = vunpack.c.l.bf16 %v1661
      %v1679 = vunpack.c.l.bf16 %v1662
      %1681 = vset.pattern.permute.xlu0 0
      %1682 = vperm.xlu0 %1681, %v1663
      %v1683 = vpop.permute.xlu0 %1682
      %1686 = vset.pattern.permute.xlu0 0
      %1687 = vperm.xlu0 %1686, %v1664
      %v1688 = vpop.permute.xlu0 %1687
      %1691 = vset.pattern.permute.xlu0 0
      %1692 = vperm.xlu0 %1691, %v1665
      %v1693 = vpop.permute.xlu0 %1692
      %1696 = vset.pattern.permute.xlu0 0
      %1697 = vperm.xlu0 %1696, %v1666
      %v1698 = vpop.permute.xlu0 %1697
      %1701 = vset.pattern.permute.xlu0 0
      %1702 = vperm.xlu0 %1701, %v1667
      %v1703 = vpop.permute.xlu0 %1702
      %1706 = vset.pattern.permute.xlu0 0
      %1707 = vperm.xlu0 %1706, %v1668
      %v1708 = vpop.permute.xlu0 %1707
      %1711 = vset.pattern.permute.xlu0 0
      %1712 = vperm.xlu0 %1711, %v1669
      %v1713 = vpop.permute.xlu0 %1712
      %1716 = vset.pattern.permute.xlu0 0
      %1717 = vperm.xlu0 %1716, %v1670
      %v1718 = vpop.permute.xlu0 %1717
      %1721 = vset.pattern.permute.xlu0 0
      %1722 = vperm.xlu0 %1721, %v1671
      %v1723 = vpop.permute.xlu0 %1722
      %1726 = vset.pattern.permute.xlu0 0
      %1727 = vperm.xlu0 %1726, %v1672
      %v1728 = vpop.permute.xlu0 %1727
      %1731 = vset.pattern.permute.xlu0 0
      %1732 = vperm.xlu0 %1731, %v1673
      %v1733 = vpop.permute.xlu0 %1732
      %1736 = vset.pattern.permute.xlu0 0
      %1737 = vperm.xlu0 %1736, %v1674
      %v1738 = vpop.permute.xlu0 %1737
      %1741 = vset.pattern.permute.xlu0 0
      %1742 = vperm.xlu0 %1741, %v1675
      %v1743 = vpop.permute.xlu0 %1742
      %1746 = vset.pattern.permute.xlu0 0
      %1747 = vperm.xlu0 %1746, %v1676
      %v1748 = vpop.permute.xlu0 %1747
      %1751 = vset.pattern.permute.xlu0 0
      %1752 = vperm.xlu0 %1751, %v1677
      %v1753 = vpop.permute.xlu0 %1752
      %1756 = vset.pattern.permute.xlu0 0
      %1757 = vperm.xlu0 %1756, %v1678
      %v1758 = vpop.permute.xlu0 %1757
      %1761 = vset.pattern.permute.xlu0 0
      %1762 = vperm.xlu0 %1761, %v1679
      %v1763 = vpop.permute.xlu0 %1762
      %v1765 = vmul.f32 %v1595, %v1683
      %v1766 = vmul.f32 %v1596, %v1683
      %v1767 = vmul.f32 %v1597, %v1683
      %v1768 = vmul.f32 %v1598, %v1688
      %v1769 = vmul.f32 %v1599, %v1688
      %v1770 = vmul.f32 %v1600, %v1688
      %v1771 = vmul.f32 %v1601, %v1693
      %v1772 = vmul.f32 %v1602, %v1693
      %v1773 = vmul.f32 %v1603, %v1693
      %v1774 = vmul.f32 %v1604, %v1698
      %v1775 = vmul.f32 %v1605, %v1698
      %v1776 = vmul.f32 %v1606, %v1698
      %v1777 = vmul.f32 %v1607, %v1703
      %v1778 = vmul.f32 %v1608, %v1703
      %v1779 = vmul.f32 %v1609, %v1703
      %v1780 = vmul.f32 %v1610, %v1708
      %v1781 = vmul.f32 %v1611, %v1708
      %v1782 = vmul.f32 %v1612, %v1708
      %v1783 = vmul.f32 %v1613, %v1713
      %v1784 = vmul.f32 %v1614, %v1713
      %v1785 = vmul.f32 %v1615, %v1713
      %v1786 = vmul.f32 %v1616, %v1718
      %v1787 = vmul.f32 %v1617, %v1718
      %v1788 = vmul.f32 %v1618, %v1718
      %v1789 = vmul.f32 %v1619, %v1723
      %v1790 = vmul.f32 %v1620, %v1723
      %v1791 = vmul.f32 %v1621, %v1723
      %v1792 = vmul.f32 %v1622, %v1728
      %v1793 = vmul.f32 %v1623, %v1728
      %v1794 = vmul.f32 %v1624, %v1728
      %v1795 = vmul.f32 %v1625, %v1733
      %v1796 = vmul.f32 %v1626, %v1733
      %v1797 = vmul.f32 %v1627, %v1733
      %v1798 = vmul.f32 %v1628, %v1738
      %v1799 = vmul.f32 %v1629, %v1738
      %v1800 = vmul.f32 %v1630, %v1738
      %v1801 = vmul.f32 %v1631, %v1743
      %v1802 = vmul.f32 %v1632, %v1743
      %v1803 = vmul.f32 %v1633, %v1743
      %v1804 = vmul.f32 %v1634, %v1748
      %v1805 = vmul.f32 %v1635, %v1748
      %v1806 = vmul.f32 %v1636, %v1748
      %v1807 = vmul.f32 %v1637, %v1753
      %v1808 = vmul.f32 %v1638, %v1753
      %v1809 = vmul.f32 %v1639, %v1753
      %v1810 = vmul.f32 %v1640, %v1758
      %v1811 = vmul.f32 %v1641, %v1758
      %v1812 = vmul.f32 %v1642, %v1758
      %v1813 = vmul.f32 %v1643, %v1763
      %v1814 = vmul.f32 %v1644, %v1763
      %v1815 = vmul.f32 %v1645, %v1763
      %v1816 = vmax.f32 %v1765, %v1771
      %v1817 = vmax.f32 %v1768, %v1774
      %v1818 = vmax.f32 %v1816, %v1777
      %v1819 = vmax.f32 %v1817, %v1780
      %v1820 = vmax.f32 %v1818, %v1783
      %v1821 = vmax.f32 %v1819, %v1786
      %v1822 = vmax.f32 %v1820, %v1789
      %v1823 = vmax.f32 %v1821, %v1792
      %v1824 = vmax.f32 %v1822, %v1795
      %v1825 = vmax.f32 %v1823, %v1798
      %v1826 = vmax.f32 %v1824, %v1801
      %v1827 = vmax.f32 %v1825, %v1804
      %v1828 = vmax.f32 %v1826, %v1807
      %v1829 = vmax.f32 %v1827, %v1810
      %v1830 = vmax.f32 %v1828, %v1813
      %v1831 = vmax.f32 %v1830, %v1829
      %v1832 = vmax.f32 %v1766, %v1772
      %v1833 = vmax.f32 %v1769, %v1775
      %v1834 = vmax.f32 %v1832, %v1778
      %v1835 = vmax.f32 %v1833, %v1781
      %v1836 = vmax.f32 %v1834, %v1784
      %v1837 = vmax.f32 %v1835, %v1787
      %v1838 = vmax.f32 %v1836, %v1790
      %v1839 = vmax.f32 %v1837, %v1793
      %v1840 = vmax.f32 %v1838, %v1796
      %v1841 = vmax.f32 %v1839, %v1799
      %v1842 = vmax.f32 %v1840, %v1802
      %v1843 = vmax.f32 %v1841, %v1805
      %v1844 = vmax.f32 %v1842, %v1808
      %v1845 = vmax.f32 %v1843, %v1811
      %v1846 = vmax.f32 %v1844, %v1814
      %v1847 = vmax.f32 %v1846, %v1845
      %v1848 = vmax.f32 %v1767, %v1773
      %v1849 = vmax.f32 %v1770, %v1776
      %v1850 = vmax.f32 %v1848, %v1779
      %v1851 = vmax.f32 %v1849, %v1782
      %v1852 = vmax.f32 %v1850, %v1785
      %v1853 = vmax.f32 %v1851, %v1788
      %v1854 = vmax.f32 %v1852, %v1791
      %v1855 = vmax.f32 %v1853, %v1794
      %v1856 = vmax.f32 %v1854, %v1797
      %v1857 = vmax.f32 %v1855, %v1800
      %v1858 = vmax.f32 %v1856, %v1803
      %v1859 = vmax.f32 %v1857, %v1806
      %v1860 = vmax.f32 %v1858, %v1809
      %v1861 = vmax.f32 %v1859, %v1812
      %v1862 = vmax.f32 %v1860, %v1815
      %v1863 = vmax.f32 %v1862, %v1861
      %v1864 = vld [vmem:[%s318] sm:$0xff]
      %v1865 = vld [vmem:[%s318 + $0x8] sm:$0xff]
      %v1866 = vld [vmem:[%s318 + $0x10] sm:$0xff]
      %v1867 = vmax.f32 %v1864, %v1831
      %v1868 = vmax.f32 %v1865, %v1847
      %v1869 = vmax.f32 %v1866, %v1863
      %1870 = vst [vmem:[%s318] sm:$0xff] %v1867
      %1871 = vst [vmem:[%s318 + $0x8] sm:$0xff] %v1868
      %1872 = vst [vmem:[%s318 + $0x10] sm:$0xff] %v1869
      %p1873 = scmp.lt.s32.totalorder %s21, 1
      %s1874 = scalar_select %p1873, %s21, 1
      %s1875 = smul.addr %s1874, 3
      %s1876 = smul.addr %s1875, 8
      %s1877 = scalar_lea.vmem %s6, %s1876
      // Predicated region
      $region49: #{_forward_impl.4} parent=43 // pred_check
        %p1878 = pneg %p187
      $region50: #{_forward_impl.4} parent=43 // pred_check_branch
        %1880 = sbr.rel (%p1878) target = $region52
      $region51: #{_forward_impl.4} parent=43 // pred_region
        _
      $region52: #{_forward_impl.4} parent=43 // pred_fallthru
        _
    $region44: #{_forward_impl.4} parent=5 // pred_fallthru
      _
    %p1881 = scmp.le.s32.totalorder 2, %s12
    // Predicated region
    $region53: #{_forward_impl.4} parent=5 // pred_check
      %p1882 = pneg %p1881
    $region54: #{_forward_impl.4} parent=5 // pred_check_branch
      %1884 = sbr.rel (%p1882) target = $region56
    $region55: #{_forward_impl.4} parent=5 // pred_region
      %s1885 = ssub.s32 %s12, 2
      // Predicated region
      $region57: #{_forward_impl.4} parent=55 // pred_check
        %p1886 = pneg %p193
      $region58: #{_forward_impl.4} parent=55 // pred_check_branch
        %1888 = sbr.rel (%p1886) target = $region60
      $region59: #{_forward_impl.4} parent=55 // pred_region
        %p1889 = scmp.lt.s32.totalorder %s23, 1
        %s1890 = scalar_select %p1889, %s23, 1
        %s1891 = smul.addr %s1890, 3
        %s1892 = smul.addr %s1891, 8
        %s1893 = scalar_lea.vmem %s6, %s1892
      $region60: #{_forward_impl.4} parent=55 // pred_fallthru
        _
    $region56: #{_forward_impl.4} parent=5 // pred_fallthru
      _
  $region6: #{_forward_impl.4} parent=0 // loop_footer
    %s16 = sadd.s32 1, %s12
  $region7: #{_forward_impl.4} parent=0 // loop_footer_branch
    %11 = sbr.rel target = $region3
  $region8: #{_forward_impl.4} parent=0 // loop_exit
    _

// kernel: _forward_impl.5
$region0: #{_forward_impl.5}
  #allocation0 [shape = 'u32[]', space=smem, size = 0x4, offset = 0x4, fixed_abs, tag = 'smem constant byte address 0x4 - core index']
  #allocation1 [shape = 'u32[144,128]{1,0:T(1,128)}', space=vmem, size = 0x12000, scoped, tag = 'internal scratch']
  %s0 = inlined_call_operand.vmem [shape: bf16[2,4,387], index: 0, kind: input, shape index: {}]
  %s1 = inlined_call_operand.vmem [shape: bf16[2,4,1], index: 1, kind: input, shape index: {}]
  %s2 = inlined_call_operand.vmem [shape: bf16[387,384], index: 2, kind: input, shape index: {}]
  %s3 = inlined_call_operand.vmem [shape: f32[1,384], index: 3, kind: input, shape index: {}]
  %s4 = inlined_call_operand.vmem [shape: bf16[384,512], index: 4, kind: input, shape index: {}]
  %s5 = inlined_call_operand.vmem [shape: f32[1,512], index: 5, kind: input, shape index: {}]
  %s6 = inlined_call_operand.vmem [shape: f32[2,1,512], index: 6, kind: output, shape index: {}]
  %s7 = sld [smem:[#allocation0]]
  $region61: #{_forward_impl.5} parent=0
    _
  %s9 = ssub.s32 1, %s7
  %s10 = scalar_select 0, %s9, %s7
  loop: start=0, step=1, limit=4
  $region2: #{_forward_impl.5} parent=0 // loop_pre_header
    _
  $region3: #{_forward_impl.5} parent=0 // loop_header
    %s12 = sphi 0, %s16
    %p13 = scmp.ge.s32.totalorder %s12, 4
    %s19 = sphi 0, %s31
    %s20 = sphi 0, %s27
    %s21 = sphi 0, %s19
    %s22 = sphi 0, %s20
    %s23 = sphi 0, %s21
    %s24 = sphi 0, %s22
    %s36 = sphi 0, %s38
    %s39 = sphi 0, %s36
    %s40 = sphi 0, %s39
    %s56 = sphi 0, %s40
    %s64 = sphi 0, %s66
    %s67 = sphi 0, %s64
    %s68 = sphi 0, %s67
    %s84 = sphi 0, %s68
    %s88 = sphi 0, %s88
    %s90 = sphi 0, %s88
    %s91 = sphi 0, %s90
    %s105 = sphi 0, %s91
    %s109 = sphi 0, %s109
    %s111 = sphi 0, %s109
    %s112 = sphi 0, %s111
    %s126 = sphi 0, %s112
    %s130 = sphi 0, %s130
    %s132 = sphi 0, %s130
    %s133 = sphi 0, %s132
    %s147 = sphi 0, %s133
    %s151 = sphi 0, %s151
    %s153 = sphi 0, %s151
    %s154 = sphi 0, %s153
    %s168 = sphi 0, %s154
    %s174 = sphi 0, %s176
    %s177 = sphi 0, %s174
    %s178 = sphi 0, %s177
    %s194 = sphi 0, %s178
  $region4: #{_forward_impl.5} parent=0 // loop_header_branch
    %15 = sbr.rel (%p13) target = $region8
  $region5: #{_forward_impl.5} parent=0 // loop_body
    %s17 = ssub.s32 %s12, 1
    %s18 = ssub.s32 %s12, 2
    %s25 = sadd.s32 1, %s20
    %p26 = scmp.ge.s32.totalorder %s25, 1
    %s27 = scalar_select %p26, 0, %s25
    %s28 = sadd.s32 1, %s19
    %s29 = scalar_select %p26, %s28, %s19
    %p30 = scmp.ge.s32.totalorder %s29, 2
    %s31 = scalar_select %p30, 0, %s29
    %s32 = ssub.s32 %s19, %s31
    %s33 = ssub.s32 %s20, %s27
    %s34 = sor.u32 %s32, %s33
    %p35 = scmp.eq.s32.totalorder %s34, 0
    %s37 = sadd.s32 %s36, 1
    %s38 = scalar_select %p35, %s36, %s37
    %p41 = pneg %p35
    %p42 = scmp.eq.s32.totalorder %s12, 1
    %p43 = por %p41, %p42
    %p44 = scmp.ne.s32.totalorder %s36, %s39
    %p45 = scmp.eq.s32.totalorder %s12, 0
    %p46 = por %p44, %p45
    %p47 = scmp.ne.s32.totalorder %s36, %s39
    %p48 = scmp.eq.s32.totalorder %s17, 1
    %p49 = por %p47, %p48
    %p50 = scmp.ne.s32.totalorder %s39, %s40
    %p51 = scmp.eq.s32.totalorder %s17, 0
    %p52 = por %p50, %p51
    %p53 = scmp.ne.s32.totalorder %s39, %s40
    %p54 = scmp.eq.s32.totalorder %s18, 1
    %p55 = por %p53, %p54
    %p57 = scmp.ne.s32.totalorder %s40, %s56
    %p58 = scmp.eq.s32.totalorder %s18, 0
    %p59 = por %p57, %p58
    %s60 = ssub.s32 %s19, %s31
    %s61 = ssub.s32 %s20, %s27
    %s62 = sor.u32 %s60, %s61
    %p63 = scmp.eq.s32.totalorder %s62, 0
    %s65 = sadd.s32 %s64, 1
    %s66 = scalar_select %p63, %s64, %s65
    %p69 = pneg %p63
    %p70 = scmp.eq.s32.totalorder %s12, 1
    %p71 = por %p69, %p70
    %p72 = scmp.ne.s32.totalorder %s64, %s67
    %p73 = scmp.eq.s32.totalorder %s12, 0
    %p74 = por %p72, %p73
    %p75 = scmp.ne.s32.totalorder %s64, %s67
    %p76 = scmp.eq.s32.totalorder %s17, 1
    %p77 = por %p75, %p76
    %p78 = scmp.ne.s32.totalorder %s67, %s68
    %p79 = scmp.eq.s32.totalorder %s17, 0
    %p80 = por %p78, %p79
    %p81 = scmp.ne.s32.totalorder %s67, %s68
    %p82 = scmp.eq.s32.totalorder %s18, 1
    %p83 = por %p81, %p82
    %p85 = scmp.ne.s32.totalorder %s68, %s84
    %p86 = scmp.eq.s32.totalorder %s18, 0
    %p87 = por %p85, %p86
    %s89 = sadd.s32 %s88, 1
    %p92 = scmp.eq.s32.totalorder %s12, 1
    %p93 = scmp.ne.s32.totalorder %s88, %s90
    %p94 = scmp.eq.s32.totalorder %s12, 0
    %p95 = por %p93, %p94
    %p96 = scmp.ne.s32.totalorder %s88, %s90
    %p97 = scmp.eq.s32.totalorder %s17, 1
    %p98 = por %p96, %p97
    %p99 = scmp.ne.s32.totalorder %s90, %s91
    %p100 = scmp.eq.s32.totalorder %s17, 0
    %p101 = por %p99, %p100
    %p102 = scmp.ne.s32.totalorder %s90, %s91
    %p103 = scmp.eq.s32.totalorder %s18, 1
    %p104 = por %p102, %p103
    %p106 = scmp.ne.s32.totalorder %s91, %s105
    %p107 = scmp.eq.s32.totalorder %s18, 0
    %p108 = por %p106, %p107
    %s110 = sadd.s32 %s109, 1
    %p113 = scmp.eq.s32.totalorder %s12, 1
    %p114 = scmp.ne.s32.totalorder %s109, %s111
    %p115 = scmp.eq.s32.totalorder %s12, 0
    %p116 = por %p114, %p115
    %p117 = scmp.ne.s32.totalorder %s109, %s111
    %p118 = scmp.eq.s32.totalorder %s17, 1
    %p119 = por %p117, %p118
    %p120 = scmp.ne.s32.totalorder %s111, %s112
    %p121 = scmp.eq.s32.totalorder %s17, 0
    %p122 = por %p120, %p121
    %p123 = scmp.ne.s32.totalorder %s111, %s112
    %p124 = scmp.eq.s32.totalorder %s18, 1
    %p125 = por %p123, %p124
    %p127 = scmp.ne.s32.totalorder %s112, %s126
    %p128 = scmp.eq.s32.totalorder %s18, 0
    %p129 = por %p127, %p128
    %s131 = sadd.s32 %s130, 1
    %p134 = scmp.eq.s32.totalorder %s12, 1
    %p135 = scmp.ne.s32.totalorder %s130, %s132
    %p136 = scmp.eq.s32.totalorder %s12, 0
    %p137 = por %p135, %p136
    %p138 = scmp.ne.s32.totalorder %s130, %s132
    %p139 = scmp.eq.s32.totalorder %s17, 1
    %p140 = por %p138, %p139
    %p141 = scmp.ne.s32.totalorder %s132, %s133
    %p142 = scmp.eq.s32.totalorder %s17, 0
    %p143 = por %p141, %p142
    %p144 = scmp.ne.s32.totalorder %s132, %s133
    %p145 = scmp.eq.s32.totalorder %s18, 1
    %p146 = por %p144, %p145
    %p148 = scmp.ne.s32.totalorder %s133, %s147
    %p149 = scmp.eq.s32.totalorder %s18, 0
    %p150 = por %p148, %p149
    %s152 = sadd.s32 %s151, 1
    %p155 = scmp.eq.s32.totalorder %s12, 1
    %p156 = scmp.ne.s32.totalorder %s151, %s153
    %p157 = scmp.eq.s32.totalorder %s12, 0
    %p158 = por %p156, %p157
    %p159 = scmp.ne.s32.totalorder %s151, %s153
    %p160 = scmp.eq.s32.totalorder %s17, 1
    %p161 = por %p159, %p160
    %p162 = scmp.ne.s32.totalorder %s153, %s154
    %p163 = scmp.eq.s32.totalorder %s17, 0
    %p164 = por %p162, %p163
    %p165 = scmp.ne.s32.totalorder %s153, %s154
    %p166 = scmp.eq.s32.totalorder %s18, 1
    %p167 = por %p165, %p166
    %p169 = scmp.ne.s32.totalorder %s154, %s168
    %p170 = scmp.eq.s32.totalorder %s18, 0
    %p171 = por %p169, %p170
    %s172 = ssub.s32 %s19, %s31
    %p173 = scmp.eq.s32.totalorder %s172, 0
    %s175 = sadd.s32 %s174, 1
    %s176 = scalar_select %p173, %s174, %s175
    %p179 = pneg %p173
    %p180 = scmp.eq.s32.totalorder %s12, 1
    %p181 = por %p179, %p180
    %p182 = scmp.ne.s32.totalorder %s174, %s177
    %p183 = scmp.eq.s32.totalorder %s12, 0
    %p184 = por %p182, %p183
    %p185 = scmp.ne.s32.totalorder %s174, %s177
    %p186 = scmp.eq.s32.totalorder %s17, 1
    %p187 = por %p185, %p186
    %p188 = scmp.ne.s32.totalorder %s177, %s178
    %p189 = scmp.eq.s32.totalorder %s17, 0
    %p190 = por %p188, %p189
    %p191 = scmp.ne.s32.totalorder %s177, %s178
    %p192 = scmp.eq.s32.totalorder %s18, 1
    %p193 = por %p191, %p192
    %p195 = scmp.ne.s32.totalorder %s178, %s194
    %p196 = scmp.eq.s32.totalorder %s18, 0
    %p197 = por %p195, %p196
    %p198 = scmp.le.s32.totalorder 1, %s12
    %p199 = scmp.lt.s32.totalorder %s12, 3
    %p200 = pnand %p198, %p199
    %p201 = pneg %p200
    // Predicated region
    $region9: #{_forward_impl.5} parent=5 // pred_check
      _
    $region10: #{_forward_impl.5} parent=5 // pred_check_branch
      %203 = sbr.rel (%p200) target = $region12
    $region11: #{_forward_impl.5} parent=5 // pred_region
      %s204 = ssub.s32 %s12, 1
      // Predicated region
      $region13: #{_forward_impl.5} parent=11 // pred_check
        %p205 = pneg %p101
      $region14: #{_forward_impl.5} parent=11 // pred_check_branch
        %207 = sbr.rel (%p205) target = $region16
      $region15: #{_forward_impl.5} parent=11 // pred_region
        _
      $region16: #{_forward_impl.5} parent=11 // pred_fallthru
        _
      // Predicated region
      $region17: #{_forward_impl.5} parent=11 // pred_check
        %p208 = pneg %p122
      $region18: #{_forward_impl.5} parent=11 // pred_check_branch
        %210 = sbr.rel (%p208) target = $region20
      $region19: #{_forward_impl.5} parent=11 // pred_region
        _
      $region20: #{_forward_impl.5} parent=11 // pred_fallthru
        _
      // Predicated region
      $region21: #{_forward_impl.5} parent=11 // pred_check
        %p211 = pneg %p143
      $region22: #{_forward_impl.5} parent=11 // pred_check_branch
        %213 = sbr.rel (%p211) target = $region24
      $region23: #{_forward_impl.5} parent=11 // pred_region
        _
      $region24: #{_forward_impl.5} parent=11 // pred_fallthru
        _
      // Predicated region
      $region25: #{_forward_impl.5} parent=11 // pred_check
        %p214 = pneg %p164
      $region26: #{_forward_impl.5} parent=11 // pred_check_branch
        %216 = sbr.rel (%p214) target = $region28
      $region27: #{_forward_impl.5} parent=11 // pred_region
        _
      $region28: #{_forward_impl.5} parent=11 // pred_fallthru
        _
    $region12: #{_forward_impl.5} parent=5 // pred_fallthru
      _
    %p217 = scmp.lt.s32.totalorder %s12, 2
    // Predicated region
    $region29: #{_forward_impl.5} parent=5 // pred_check
      %p218 = pneg %p217
    $region30: #{_forward_impl.5} parent=5 // pred_check_branch
      %220 = sbr.rel (%p218) target = $region32
    $region31: #{_forward_impl.5} parent=5 // pred_region
      // Predicated region
      $region33: #{_forward_impl.5} parent=31 // pred_check
        %p221 = pneg %p46
      $region34: #{_forward_impl.5} parent=31 // pred_check_branch
        %223 = sbr.rel (%p221) target = $region36
      $region35: #{_forward_impl.5} parent=31 // pred_region
        %p224 = scmp.lt.s32.totalorder %s19, 1
        %s225 = scalar_select %p224, %s19, 1
        %p226 = scmp.lt.s32.totalorder %s20, 0
        %s227 = scalar_select %p226, %s20, 0
        %s228 = smul.addr %s227, 4
        %s229 = smul.addr %s225, 4
        %s230 = sadd.s32 %s228, %s229
        %s231 = smul.addr %s230, 2
        %s232 = scalar_lea.vmem %s0, %s231
      $region36: #{_forward_impl.5} parent=31 // pred_fallthru
        _
      // Predicated region
      $region37: #{_forward_impl.5} parent=31 // pred_check
        %p233 = pneg %p74
      $region38: #{_forward_impl.5} parent=31 // pred_check_branch
        %235 = sbr.rel (%p233) target = $region40
      $region39: #{_forward_impl.5} parent=31 // pred_region
        %p236 = scmp.lt.s32.totalorder %s19, 1
        %s237 = scalar_select %p236, %s19, 1
        %p238 = scmp.lt.s32.totalorder %s20, 0
        %s239 = scalar_select %p238, %s20, 0
        %s240 = sadd.s32 %s239, %s237
        %s241 = smul.addr %s240, 2
        %s242 = scalar_lea.vmem %s1, %s241
      $region40: #{_forward_impl.5} parent=31 // pred_fallthru
        _
    $region32: #{_forward_impl.5} parent=5 // pred_fallthru
      _
    %p243 = scmp.le.s32.totalorder 1, %s12
    %p244 = scmp.lt.s32.totalorder %s12, 3
    %p245 = pnand %p243, %p244
    %p246 = pneg %p245
    // Predicated region
    $region41: #{_forward_impl.5} parent=5 // pred_check
      _
    $region42: #{_forward_impl.5} parent=5 // pred_check_branch
      %248 = sbr.rel (%p245) target = $region44
    $region43: #{_forward_impl.5} parent=5 // pred_region
      %s249 = ssub.s32 %s12, 1
      %p250 = scmp.lt.s32.totalorder %s21, 1
      %s251 = scalar_select %p250, %s21, 1
      %p252 = scmp.lt.s32.totalorder %s22, 0
      %s253 = scalar_select %p252, %s22, 0
      %s254 = smul.addr %s253, 4
      %s255 = smul.addr %s251, 4
      %s256 = sadd.s32 %s254, %s255
      %s257 = smul.addr %s256, 2
      %s258 = scalar_lea.vmem %s0, %s257
      %p259 = pneg %p52
      %p260 = pneg %p49
      %p261 = scmp.lt.s32.totalorder %s21, 1
      %s262 = scalar_select %p261, %s21, 1
      %p263 = scmp.lt.s32.totalorder %s22, 0
      %s264 = scalar_select %p263, %s22, 0
      %s265 = sadd.s32 %s264, %s262
      %s266 = smul.addr %s265, 2
      %s267 = scalar_lea.vmem %s1, %s266
      %p268 = pneg %p80
      %p269 = pneg %p77
      %p270 = pneg %p101
      %p271 = pneg %p98
      %p272 = pneg %p122
      %p273 = pneg %p119
      %p274 = pneg %p143
      %p275 = pneg %p140
      %p276 = pneg %p164
      %p277 = pneg %p161
      %p278 = pneg %p190
      %p279 = pneg %p187
      %p280 = scmp.lt.s32.totalorder %s21, 1
      %s281 = scalar_select %p280, %s21, 1
      %s282 = smul.addr %s281, 4
      %s283 = scalar_lea.vmem %s6, %s282
      %p284 = scmp.lt.s32.totalorder %s21, 1
      %s285 = scalar_select %p284, %s21, 1
      %p286 = scmp.lt.s32.totalorder %s22, 0
      %s287 = scalar_select %p286, %s22, 0
      %s288 = smul.addr %s287, 4
      %s289 = smul.addr %s285, 4
      %s290 = sadd.s32 %s288, %s289
      %s291 = smul.addr %s290, 2
      %s292 = scalar_lea.vmem %s0, %s291
      %p293 = scmp.lt.s32.totalorder %s21, 1
      %s294 = scalar_select %p293, %s21, 1
      %p295 = scmp.lt.s32.totalorder %s22, 0
      %s296 = scalar_select %p295, %s22, 0
      %s297 = sadd.s32 %s296, %s294
      %s298 = smul.addr %s297, 2
      %s299 = scalar_lea.vmem %s1, %s298
      %p300 = scmp.lt.s32.totalorder %s21, 1
      %s301 = scalar_select %p300, %s21, 1
      %s302 = smul.addr %s301, 4
      %s303 = scalar_lea.vmem %s6, %s302
      %p305 = scmp.eq.s32.totalorder %s22, 0
      // Predicated region
      $region45: #{_forward_impl.5} parent=43 // pred_check
        %p306 = pneg %p305
      $region46: #{_forward_impl.5} parent=43 // pred_check_branch
        %308 = sbr.rel (%p306) target = $region48
      $region47: #{_forward_impl.5} parent=43 // pred_region
        %v309 = vlaneseq
        %vm310 = vcmp.ge.s32.totalorder %v309, 0
        %vm311 = vcmp.lt.s32.totalorder %v309, 512
        %vm312 = vmand %vm310, %vm311
        %313 = vst.msk [vmem:[%s303] sm:$0xf] %vm312, 0.0
      $region48: #{_forward_impl.5} parent=43 // pred_fallthru
        _
      %v314 = vld [vmem:[%s292] sm:$0xff]
      %v315 = vld [vmem:[%s2] sm:$0xff]
      %v316 = vld [vmem:[%s2 + $0x8] sm:$0xf]
      %v317 = vld [vmem:[%s2 + $0xc] sm:$0xff]
      %v318 = vld [vmem:[%s2 + $0x14] sm:$0xf]
      %v319 = vld [vmem:[%s2 + $0x18] sm:$0xff]
      %v320 = vld [vmem:[%s2 + $0x20] sm:$0xf]
      %v321 = vld [vmem:[%s2 + $0x24] sm:$0xff]
      %v322 = vld [vmem:[%s2 + $0x2c] sm:$0xf]
      %v323 = vld [vmem:[%s2 + $0x30] sm:$0xff]
      %v324 = vld [vmem:[%s2 + $0x38] sm:$0xf]
      %v325 = vld [vmem:[%s2 + $0x3c] sm:$0xff]
      %v326 = vld [vmem:[%s2 + $0x44] sm:$0xf]
      %v327 = vld [vmem:[%s2 + $0x48] sm:$0xff]
      %v328 = vld [vmem:[%s2 + $0x50] sm:$0xf]
      %v329 = vld [vmem:[%s2 + $0x54] sm:$0xff]
      %v330 = vld [vmem:[%s2 + $0x5c] sm:$0xf]
      %v331 = vld [vmem:[%s2 + $0x60] sm:$0xff]
      %v332 = vld [vmem:[%s2 + $0x68] sm:$0xf]
      %v333 = vld [vmem:[%s2 + $0x6c] sm:$0xff]
      %v334 = vld [vmem:[%s2 + $0x74] sm:$0xf]
      %v335 = vld [vmem:[%s2 + $0x78] sm:$0xff]
      %v336 = vld [vmem:[%s2 + $0x80] sm:$0xf]
      %v337 = vld [vmem:[%s2 + $0x84] sm:$0xff]
      %v338 = vld [vmem:[%s2 + $0x8c] sm:$0xf]
      %v339 = vld [vmem:[%s2 + $0x90] sm:$0xff]
      %v340 = vld [vmem:[%s2 + $0x98] sm:$0xf]
      %v341 = vld [vmem:[%s2 + $0x9c] sm:$0xff]
      %v342 = vld [vmem:[%s2 + $0xa4] sm:$0xf]
      %v343 = vld [vmem:[%s2 + $0xa8] sm:$0xff]
      %v344 = vld [vmem:[%s2 + $0xb0] sm:$0xf]
      %v345 = vld [vmem:[%s2 + $0xb4] sm:$0xff]
      %v346 = vld [vmem:[%s2 + $0xbc] sm:$0xf]
      %v347 = vld [vmem:[%s2 + $0xc0] sm:$0xff]
      %v348 = vld [vmem:[%s2 + $0xc8] sm:$0xf]
      %v349 = vld [vmem:[%s2 + $0xcc] sm:$0xff]
      %v350 = vld [vmem:[%s2 + $0xd4] sm:$0xf]
      %v351 = vld [vmem:[%s2 + $0xd8] sm:$0xff]
      %v352 = vld [vmem:[%s2 + $0xe0] sm:$0xf]
      %v353 = vld [vmem:[%s2 + $0xe4] sm:$0xff]
      %v354 = vld [vmem:[%s2 + $0xec] sm:$0xf]
      %v355 = vld [vmem:[%s2 + $0xf0] sm:$0xff]
      %v356 = vld [vmem:[%s2 + $0xf8] sm:$0xf]
      %v357 = vld [vmem:[%s2 + $0xfc] sm:$0xff]
      %v358 = vld [vmem:[%s2 + $0x104] sm:$0xf]
      %v359 = vld [vmem:[%s2 + $0x108] sm:$0xff]
      %v360 = vld [vmem:[%s2 + $0x110] sm:$0xf]
      %v361 = vld [vmem:[%s2 + $0x114] sm:$0xff]
      %v362 = vld [vmem:[%s2 + $0x11c] sm:$0xf]
      %v363 = vld [vmem:[%s2 + $0x120] sm:$0xff]
      %v364 = vld [vmem:[%s2 + $0x128] sm:$0xf]
      %v365 = vld [vmem:[%s2 + $0x12c] sm:$0xff]
      %v366 = vld [vmem:[%s2 + $0x134] sm:$0xf]
      %v367 = vld [vmem:[%s2 + $0x138] sm:$0xff]
      %v368 = vld [vmem:[%s2 + $0x140] sm:$0xf]
      %v369 = vld [vmem:[%s2 + $0x144] sm:$0xff]
      %v370 = vld [vmem:[%s2 + $0x14c] sm:$0xf]
      %v371 = vld [vmem:[%s2 + $0x150] sm:$0xff]
      %v372 = vld [vmem:[%s2 + $0x158] sm:$0xf]
      %v373 = vld [vmem:[%s2 + $0x15c] sm:$0xff]
      %v374 = vld [vmem:[%s2 + $0x164] sm:$0xf]
      %v375 = vld [vmem:[%s2 + $0x168] sm:$0xff]
      %v376 = vld [vmem:[%s2 + $0x170] sm:$0xf]
      %v377 = vld [vmem:[%s2 + $0x174] sm:$0xff]
      %v378 = vld [vmem:[%s2 + $0x17c] sm:$0xf]
      %v379 = vld [vmem:[%s2 + $0x180] sm:$0xff]
      %v380 = vld [vmem:[%s2 + $0x188] sm:$0xf]
      %v381 = vld [vmem:[%s2 + $0x18c] sm:$0xff]
      %v382 = vld [vmem:[%s2 + $0x194] sm:$0xf]
      %v383 = vld [vmem:[%s2 + $0x198] sm:$0xff]
      %v384 = vld [vmem:[%s2 + $0x1a0] sm:$0xf]
      %v385 = vld [vmem:[%s2 + $0x1a4] sm:$0xff]
      %v386 = vld [vmem:[%s2 + $0x1ac] sm:$0xf]
      %v387 = vld [vmem:[%s2 + $0x1b0] sm:$0xff]
      %v388 = vld [vmem:[%s2 + $0x1b8] sm:$0xf]
      %v389 = vld [vmem:[%s2 + $0x1bc] sm:$0xff]
      %v390 = vld [vmem:[%s2 + $0x1c4] sm:$0xf]
      %v391 = vld [vmem:[%s2 + $0x1c8] sm:$0xff]
      %v392 = vld [vmem:[%s2 + $0x1d0] sm:$0xf]
      %v393 = vld [vmem:[%s2 + $0x1d4] sm:$0xff]
      %v394 = vld [vmem:[%s2 + $0x1dc] sm:$0xf]
      %v395 = vld [vmem:[%s2 + $0x1e0] sm:$0xff]
      %v396 = vld [vmem:[%s2 + $0x1e8] sm:$0xf]
      %v397 = vld [vmem:[%s2 + $0x1ec] sm:$0xff]
      %v398 = vld [vmem:[%s2 + $0x1f4] sm:$0xf]
      %v399 = vld [vmem:[%s2 + $0x1f8] sm:$0xff]
      %v400 = vld [vmem:[%s2 + $0x200] sm:$0xf]
      %v401 = vld [vmem:[%s2 + $0x204] sm:$0xff]
      %v402 = vld [vmem:[%s2 + $0x20c] sm:$0xf]
      %v403 = vld [vmem:[%s2 + $0x210] sm:$0xff]
      %v404 = vld [vmem:[%s2 + $0x218] sm:$0xf]
      %v405 = vld [vmem:[%s2 + $0x21c] sm:$0xff]
      %v406 = vld [vmem:[%s2 + $0x224] sm:$0xf]
      %v407 = vld [vmem:[%s2 + $0x228] sm:$0xff]
      %v408 = vld [vmem:[%s2 + $0x230] sm:$0xf]
      %v409 = vld [vmem:[%s2 + $0x234] sm:$0xff]
      %v410 = vld [vmem:[%s2 + $0x23c] sm:$0xf]
      %v411 = vld [vmem:[%s2 + $0x240] sm:$0x33]
      %v412 = vld [vmem:[%s2 + $0x248] sm:$0x3]
      %v413 = vld [vmem:[%s3] sm:$0x7]
      %v415 = vlaneseq
      %v416 = vshrl.u32 %v415, 7
      %v417 = vsub.s32 0, %v416
      %v418 = vrot.slane %v413, %v417
      %v419 = vlaneseq
      %v420 = vshrl.u32 %v419, 7
      %v421 = vsub.s32 1, %v420
      %v422 = vrot.slane %v413, %v421
      %v423 = vlaneseq
      %v424 = vshrl.u32 %v423, 7
      %v425 = vsub.s32 2, %v424
      %v426 = vrot.slane %v413, %v425
      %v431 = vcombine.high %v314, %v314
      %v433 = vunpack.c.l.s4 1983009808
      %v434 = vunpack.c.0.s8 %v433
      %v435 = vlaneseq
      %v436 = vshrl.u32 %v435, 7
      %v437 = vsub.s32 %v434, %v436
      %v438 = vrot.slane %v314, %v437
      %v440 = vunpack.c.l.s4 1983009808
      %v441 = vunpack.c.0.s8 %v440
      %v442 = vlaneseq
      %v443 = vshrl.u32 %v442, 7
      %v444 = vsub.s32 %v441, %v443
      %v445 = vrot.slane %v431, %v444
      %v446 = vcombine.high %v438, %v438
      %v447 = vcombine.high %v445, %v445
      %v549 = vunpack.c.l.b16 %v315
      %v550 = vunpack.c.h.b16 %v315
      %v551 = vunpack.c.l.b16 %v316
      %v552 = vunpack.c.l.b16 %v317
      %v553 = vunpack.c.h.b16 %v317
      %v554 = vunpack.c.l.b16 %v318
      %v555 = vunpack.c.l.b16 %v319
      %v556 = vunpack.c.h.b16 %v319
      %v557 = vunpack.c.l.b16 %v320
      %v558 = vunpack.c.l.b16 %v321
      %v559 = vunpack.c.h.b16 %v321
      %v560 = vunpack.c.l.b16 %v322
      %v561 = vunpack.c.l.b16 %v323
      %v562 = vunpack.c.h.b16 %v323
      %v563 = vunpack.c.l.b16 %v324
      %v564 = vunpack.c.l.b16 %v325
      %v565 = vunpack.c.h.b16 %v325
      %v566 = vunpack.c.l.b16 %v326
      %v567 = vunpack.c.l.b16 %v327
      %v568 = vunpack.c.h.b16 %v327
      %v569 = vunpack.c.l.b16 %v328
      %v570 = vunpack.c.l.b16 %v329
      %v571 = vunpack.c.h.b16 %v329
      %v572 = vunpack.c.l.b16 %v330
      %v573 = vunpack.c.l.b16 %v331
      %v574 = vunpack.c.h.b16 %v331
      %v575 = vunpack.c.l.b16 %v332
      %v576 = vunpack.c.l.b16 %v333
      %v577 = vunpack.c.h.b16 %v333
      %v578 = vunpack.c.l.b16 %v334
      %v579 = vunpack.c.l.b16 %v335
      %v580 = vunpack.c.h.b16 %v335
      %v581 = vunpack.c.l.b16 %v336
      %v582 = vunpack.c.l.b16 %v337
      %v583 = vunpack.c.h.b16 %v337
      %v584 = vunpack.c.l.b16 %v338
      %v585 = vunpack.c.l.b16 %v339
      %v586 = vunpack.c.h.b16 %v339
      %v587 = vunpack.c.l.b16 %v340
      %v588 = vunpack.c.l.b16 %v341
      %v589 = vunpack.c.h.b16 %v341
      %v590 = vunpack.c.l.b16 %v342
      %v591 = vunpack.c.l.b16 %v343
      %v592 = vunpack.c.h.b16 %v343
      %v593 = vunpack.c.l.b16 %v344
      %v594 = vunpack.c.l.b16 %v345
      %v595 = vunpack.c.h.b16 %v345
      %v596 = vunpack.c.l.b16 %v346
      %v597 = vunpack.c.l.b16 %v347
      %v598 = vunpack.c.h.b16 %v347
      %v599 = vunpack.c.l.b16 %v348
      %v600 = vunpack.c.l.b16 %v349
      %v601 = vunpack.c.h.b16 %v349
      %v602 = vunpack.c.l.b16 %v350
      %v603 = vunpack.c.l.b16 %v351
      %v604 = vunpack.c.h.b16 %v351
      %v605 = vunpack.c.l.b16 %v352
      %v606 = vunpack.c.l.b16 %v353
      %v607 = vunpack.c.h.b16 %v353
      %v608 = vunpack.c.l.b16 %v354
      %v609 = vunpack.c.l.b16 %v355
      %v610 = vunpack.c.h.b16 %v355
      %v611 = vunpack.c.l.b16 %v356
      %v612 = vunpack.c.l.b16 %v357
      %v613 = vunpack.c.h.b16 %v357
      %v614 = vunpack.c.l.b16 %v358
      %v615 = vunpack.c.l.b16 %v359
      %v616 = vunpack.c.h.b16 %v359
      %v617 = vunpack.c.l.b16 %v360
      %v618 = vunpack.c.l.b16 %v361
      %v619 = vunpack.c.h.b16 %v361
      %v620 = vunpack.c.l.b16 %v362
      %v621 = vunpack.c.l.b16 %v363
      %v622 = vunpack.c.h.b16 %v363
      %v623 = vunpack.c.l.b16 %v364
      %v624 = vunpack.c.l.b16 %v365
      %v625 = vunpack.c.h.b16 %v365
      %v626 = vunpack.c.l.b16 %v366
      %v627 = vunpack.c.l.b16 %v367
      %v628 = vunpack.c.h.b16 %v367
      %v629 = vunpack.c.l.b16 %v368
      %v630 = vunpack.c.l.b16 %v369
      %v631 = vunpack.c.h.b16 %v369
      %v632 = vunpack.c.l.b16 %v370
      %v633 = vunpack.c.l.b16 %v371
      %v634 = vunpack.c.h.b16 %v371
      %v635 = vunpack.c.l.b16 %v372
      %v636 = vunpack.c.l.b16 %v373
      %v637 = vunpack.c.h.b16 %v373
      %v638 = vunpack.c.l.b16 %v374
      %v639 = vunpack.c.l.b16 %v375
      %v640 = vunpack.c.h.b16 %v375
      %v641 = vunpack.c.l.b16 %v376
      %v642 = vunpack.c.l.b16 %v377
      %v643 = vunpack.c.h.b16 %v377
      %v644 = vunpack.c.l.b16 %v378
      %v645 = vunpack.c.l.b16 %v379
      %v646 = vunpack.c.h.b16 %v379
      %v647 = vunpack.c.l.b16 %v380
      %v648 = vunpack.c.l.b16 %v381
      %v649 = vunpack.c.h.b16 %v381
      %v650 = vunpack.c.l.b16 %v382
      %v651 = vunpack.c.l.b16 %v383
      %v652 = vunpack.c.h.b16 %v383
      %v653 = vunpack.c.l.b16 %v384
      %v654 = vunpack.c.l.b16 %v385
      %v655 = vunpack.c.h.b16 %v385
      %v656 = vunpack.c.l.b16 %v386
      %v657 = vunpack.c.l.b16 %v387
      %v658 = vunpack.c.h.b16 %v387
      %v659 = vunpack.c.l.b16 %v388
      %v660 = vunpack.c.l.b16 %v389
      %v661 = vunpack.c.h.b16 %v389
      %v662 = vunpack.c.l.b16 %v390
      %v663 = vunpack.c.l.b16 %v391
      %v664 = vunpack.c.h.b16 %v391
      %v665 = vunpack.c.l.b16 %v392
      %v666 = vunpack.c.l.b16 %v393
      %v667 = vunpack.c.h.b16 %v393
      %v668 = vunpack.c.l.b16 %v394
      %v669 = vunpack.c.l.b16 %v395
      %v670 = vunpack.c.h.b16 %v395
      %v671 = vunpack.c.l.b16 %v396
      %v672 = vunpack.c.l.b16 %v397
      %v673 = vunpack.c.h.b16 %v397
      %v674 = vunpack.c.l.b16 %v398
      %v675 = vunpack.c.l.b16 %v399
      %v676 = vunpack.c.h.b16 %v399
      %v677 = vunpack.c.l.b16 %v400
      %v678 = vunpack.c.l.b16 %v401
      %v679 = vunpack.c.h.b16 %v401
      %v680 = vunpack.c.l.b16 %v402
      %v681 = vunpack.c.l.b16 %v403
      %v682 = vunpack.c.h.b16 %v403
      %v683 = vunpack.c.l.b16 %v404
      %v684 = vunpack.c.l.b16 %v405
      %v685 = vunpack.c.h.b16 %v405
      %v686 = vunpack.c.l.b16 %v406
      %v687 = vunpack.c.l.b16 %v407
      %v688 = vunpack.c.h.b16 %v407
      %v689 = vunpack.c.l.b16 %v408
      %v690 = vunpack.c.l.b16 %v409
      %v691 = vunpack.c.h.b16 %v409
      %v692 = vunpack.c.l.b16 %v410
      %v693 = vunpack.c.l.b16 %v411
      %v694 = vunpack.c.h.b16 %v411
      %v695 = vunpack.c.l.b16 %v412
      %v696 = vpack.c.b16 %v552, %v549
      %v697 = vpack.c.b16 %v553, %v550
      %v698 = vpack.c.b16 %v554, %v551
      %v699 = vpack.c.b16 %v558, %v555
      %v700 = vpack.c.b16 %v559, %v556
      %v701 = vpack.c.b16 %v560, %v557
      %v702 = vpack.c.b16 %v564, %v561
      %v703 = vpack.c.b16 %v565, %v562
      %v704 = vpack.c.b16 %v566, %v563
      %v705 = vpack.c.b16 %v570, %v567
      %v706 = vpack.c.b16 %v571, %v568
      %v707 = vpack.c.b16 %v572, %v569
      %v708 = vpack.c.b16 %v576, %v573
      %v709 = vpack.c.b16 %v577, %v574
      %v710 = vpack.c.b16 %v578, %v575
      %v711 = vpack.c.b16 %v582, %v579
      %v712 = vpack.c.b16 %v583, %v580
      %v713 = vpack.c.b16 %v584, %v581
      %v714 = vpack.c.b16 %v588, %v585
      %v715 = vpack.c.b16 %v589, %v586
      %v716 = vpack.c.b16 %v590, %v587
      %v717 = vpack.c.b16 %v594, %v591
      %v718 = vpack.c.b16 %v595, %v592
      %v719 = vpack.c.b16 %v596, %v593
      %v720 = vpack.c.b16 %v600, %v597
      %v721 = vpack.c.b16 %v601, %v598
      %v722 = vpack.c.b16 %v602, %v599
      %v723 = vpack.c.b16 %v606, %v603
      %v724 = vpack.c.b16 %v607, %v604
      %v725 = vpack.c.b16 %v608, %v605
      %v726 = vpack.c.b16 %v612, %v609
      %v727 = vpack.c.b16 %v613, %v610
      %v728 = vpack.c.b16 %v614, %v611
      %v729 = vpack.c.b16 %v618, %v615
      %v730 = vpack.c.b16 %v619, %v616
      %v731 = vpack.c.b16 %v620, %v617
      %v732 = vpack.c.b16 %v624, %v621
      %v733 = vpack.c.b16 %v625, %v622
      %v734 = vpack.c.b16 %v626, %v623
      %v735 = vpack.c.b16 %v630, %v627
      %v736 = vpack.c.b16 %v631, %v628
      %v737 = vpack.c.b16 %v632, %v629
      %v738 = vpack.c.b16 %v636, %v633
      %v739 = vpack.c.b16 %v637, %v634
      %v740 = vpack.c.b16 %v638, %v635
      %v741 = vpack.c.b16 %v642, %v639
      %v742 = vpack.c.b16 %v643, %v640
      %v743 = vpack.c.b16 %v644, %v641
      %v744 = vpack.c.b16 %v648, %v645
      %v745 = vpack.c.b16 %v649, %v646
      %v746 = vpack.c.b16 %v650, %v647
      %v747 = vpack.c.b16 %v654, %v651
      %v748 = vpack.c.b16 %v655, %v652
      %v749 = vpack.c.b16 %v656, %v653
      %v750 = vpack.c.b16 %v660, %v657
      %v751 = vpack.c.b16 %v661, %v658
      %v752 = vpack.c.b16 %v662, %v659
      %v753 = vpack.c.b16 %v666, %v663
      %v754 = vpack.c.b16 %v667, %v664
      %v755 = vpack.c.b16 %v668, %v665
      %v756 = vpack.c.b16 %v672, %v669
      %v757 = vpack.c.b16 %v673, %v670
      %v758 = vpack.c.b16 %v674, %v671
      %v759 = vpack.c.b16 %v678, %v675
      %v760 = vpack.c.b16 %v679, %v676
      %v761 = vpack.c.b16 %v680, %v677
      %v762 = vpack.c.b16 %v684, %v681
      %v763 = vpack.c.b16 %v685, %v682
      %v764 = vpack.c.b16 %v686, %v683
      %v765 = vpack.c.b16 %v690, %v687
      %v766 = vpack.c.b16 %v691, %v688
      %v767 = vpack.c.b16 %v692, %v689
      %v768 = vpack.c.b16 %v693, %v693
      %v769 = vpack.c.b16 %v694, %v694
      %v770 = vpack.c.b16 %v695, %v695
      %vm843 = vcmask 23552
      %v845 = vsel %vm843, %v447, 0
      %vm847 = vcmask 1040384
      %vm848 = vcmask 1041408
      %v849 = vsel %vm847, 4294967295, 65535
      %v850 = vsel %vm848, %v849, 0
      %v852 = vand.u32 %v768, %v850
      %v855 = vand.u32 %v769, %v850
      %v858 = vand.u32 %v770, %v850
      %860 = vmatprep.subr.bf16.mxu0 %v718
      %861 = vmatpush1.bf16.msra.mxu0 %v717
      %862 = vmatprep.subr.bf16.mxu0 %v715
      %863 = vmatpush1.bf16.msra.mxu0 %v714
      %864 = vmatprep.subr.bf16.mxu0 %v712
      %865 = vmatpush1.bf16.msra.mxu0 %v711
      %866 = vmatprep.subr.bf16.mxu0 %v709
      %867 = vmatpush1.bf16.msra.mxu0 %v708
      %868 = vmatprep.subr.bf16.mxu0 %v706
      %869 = vmatpush1.bf16.msra.mxu0 %v705
      %870 = vmatprep.subr.bf16.mxu0 %v703
      %871 = vmatpush1.bf16.msra.mxu0 %v702
      %872 = vmatprep.subr.bf16.mxu0 %v700
      %873 = vmatpush1.bf16.msra.mxu0 %v699
      %874 = vmatprep.subr.bf16.mxu0 %v697
      %875 = vmatpush1.bf16.msra.mxu0 %v696
      %876 = vmatprep.subr.bf16.mxu0 %v742
      %877 = vmatpush2.bf16.msra.mxu0 %v741
      %878 = vmatprep.subr.bf16.mxu0 %v739
      %879 = vmatpush2.bf16.msra.mxu0 %v738
      %880 = vmatprep.subr.bf16.mxu0 %v736
      %881 = vmatpush2.bf16.msra.mxu0 %v735
      %882 = vmatprep.subr.bf16.mxu0 %v733
      %883 = vmatpush2.bf16.msra.mxu0 %v732
      %884 = vmatprep.subr.bf16.mxu0 %v730
      %885 = vmatpush2.bf16.msra.mxu0 %v729
      %886 = vmatprep.subr.bf16.mxu0 %v727
      %887 = vmatpush2.bf16.msra.mxu0 %v726
      %888 = vmatprep.subr.bf16.mxu0 %v724
      %889 = vmatpush2.bf16.msra.mxu0 %v723
      %890 = vmatprep.subr.bf16.mxu0 %v721
      %891 = vmatpush2.bf16.msra.mxu0 %v720
      %892 = vmatprep.mubr.bf16.mxu0 %v446
      %893 = vmatmul.mubr.bf16.gmra.mxu0 %v438
      %v894 = vpop.f32.mrf.mxu0
      %v895 = vadd.f32 %v418, %v894
      %v896 = vpop.f32.mrf.mxu0
      %v897 = vadd.f32 %v422, %v896
      %v898 = vpop.f32.mrf.mxu0
      %v899 = vpop.f32.mrf.mxu0
      %900 = vdwg.mxu0
      %901 = vmatprep.subr.bf16.mxu0 %v766
      %902 = vmatpush1.bf16.msra.mxu0 %v765
      %903 = vmatprep.subr.bf16.mxu0 %v763
      %904 = vmatpush1.bf16.msra.mxu0 %v762
      %905 = vmatprep.subr.bf16.mxu0 %v760
      %906 = vmatpush1.bf16.msra.mxu0 %v759
      %907 = vmatprep.subr.bf16.mxu0 %v757
      %908 = vmatpush1.bf16.msra.mxu0 %v756
      %909 = vmatprep.subr.bf16.mxu0 %v754
      %910 = vmatpush1.bf16.msra.mxu0 %v753
      %911 = vmatprep.subr.bf16.mxu0 %v751
      %912 = vmatpush1.bf16.msra.mxu0 %v750
      %913 = vmatprep.subr.bf16.mxu0 %v748
      %914 = vmatpush1.bf16.msra.mxu0 %v747
      %915 = vmatprep.subr.bf16.mxu0 %v745
      %916 = vmatpush1.bf16.msra.mxu0 %v744
      %917 = vmatprep.subr.bf16.mxu0 0
      %918 = vmatpush2.bf16.msra.mxu0 0
      %919 = vmatprep.subr.bf16.mxu0 0
      %920 = vmatpush2.bf16.msra.mxu0 0
      %921 = vmatprep.subr.bf16.mxu0 0
      %922 = vmatpush2.bf16.msra.mxu0 0
      %923 = vmatprep.subr.bf16.mxu0 0
      %924 = vmatpush2.bf16.msra.mxu0 0
      %925 = vmatprep.subr.bf16.mxu0 0
      %926 = vmatpush2.bf16.msra.mxu0 0
      %927 = vmatprep.subr.bf16.mxu0 0
      %928 = vmatpush2.bf16.msra.mxu0 0
      %929 = vmatprep.subr.bf16.mxu0 0
      %930 = vmatpush2.bf16.msra.mxu0 0
      %931 = vmatprep.subr.bf16.mxu0 %v855
      %932 = vmatpush2.bf16.msra.mxu0 %v852
      %933 = vmatprep.mubr.bf16.mxu0 %v845
      %934 = vmatmul.mubr.bf16.gmra.mxu0 %v445
      %v935 = vpop.f32.mrf.mxu0
      %v936 = vadd.f32 %v895, %v935
      %v937 = vpop.f32.mrf.mxu0
      %v938 = vadd.f32 %v897, %v937
      %v939 = vpop.f32.mrf.mxu0
      %v940 = vpop.f32.mrf.mxu0
      %941 = vdwg.mxu0
      %942 = vmatprep.subr.bf16.mxu0 0
      %943 = vmatpush1.bf16.msra.mxu0 %v719
      %944 = vmatprep.subr.bf16.mxu0 0
      %945 = vmatpush1.bf16.msra.mxu0 %v716
      %946 = vmatprep.subr.bf16.mxu0 0
      %947 = vmatpush1.bf16.msra.mxu0 %v713
      %948 = vmatprep.subr.bf16.mxu0 0
      %949 = vmatpush1.bf16.msra.mxu0 %v710
      %950 = vmatprep.subr.bf16.mxu0 0
      %951 = vmatpush1.bf16.msra.mxu0 %v707
      %952 = vmatprep.subr.bf16.mxu0 0
      %953 = vmatpush1.bf16.msra.mxu0 %v704
      %954 = vmatprep.subr.bf16.mxu0 0
      %955 = vmatpush1.bf16.msra.mxu0 %v701
      %956 = vmatprep.subr.bf16.mxu0 0
      %957 = vmatpush1.bf16.msra.mxu0 %v698
      %958 = vmatprep.subr.bf16.mxu0 0
      %959 = vmatpush2.bf16.msra.mxu0 %v743
      %960 = vmatprep.subr.bf16.mxu0 0
      %961 = vmatpush2.bf16.msra.mxu0 %v740
      %962 = vmatprep.subr.bf16.mxu0 0
      %963 = vmatpush2.bf16.msra.mxu0 %v737
      %964 = vmatprep.subr.bf16.mxu0 0
      %965 = vmatpush2.bf16.msra.mxu0 %v734
      %966 = vmatprep.subr.bf16.mxu0 0
      %967 = vmatpush2.bf16.msra.mxu0 %v731
      %968 = vmatprep.subr.bf16.mxu0 0
      %969 = vmatpush2.bf16.msra.mxu0 %v728
      %970 = vmatprep.subr.bf16.mxu0 0
      %971 = vmatpush2.bf16.msra.mxu0 %v725
      %972 = vmatprep.subr.bf16.mxu0 0
      %973 = vmatpush2.bf16.msra.mxu0 %v722
      %974 = vmatprep.mubr.bf16.mxu0 %v446
      %975 = vmatmul.mubr.bf16.gmra.mxu0 %v438
      %v976 = vpop.f32.mrf.mxu0
      %v977 = vadd.f32 %v426, %v976
      %v978 = vpop.f32.mrf.mxu0
      %v979 = vpop.f32.mrf.mxu0
      %v980 = vpop.f32.mrf.mxu0
      %981 = vdwg.mxu0
      %982 = vmatprep.subr.bf16.mxu0 0
      %983 = vmatpush1.bf16.msra.mxu0 %v767
      %984 = vmatprep.subr.bf16.mxu0 0
      %985 = vmatpush1.bf16.msra.mxu0 %v764
      %986 = vmatprep.subr.bf16.mxu0 0
      %987 = vmatpush1.bf16.msra.mxu0 %v761
      %988 = vmatprep.subr.bf16.mxu0 0
      %989 = vmatpush1.bf16.msra.mxu0 %v758
      %990 = vmatprep.subr.bf16.mxu0 0
      %991 = vmatpush1.bf16.msra.mxu0 %v755
      %992 = vmatprep.subr.bf16.mxu0 0
      %993 = vmatpush1.bf16.msra.mxu0 %v752
      %994 = vmatprep.subr.bf16.mxu0 0
      %995 = vmatpush1.bf16.msra.mxu0 %v749
      %996 = vmatprep.subr.bf16.mxu0 0
      %997 = vmatpush1.bf16.msra.mxu0 %v746
      %998 = vmatprep.subr.bf16.mxu0 0
      %999 = vmatpush2.bf16.msra.mxu0 0
      %1000 = vmatprep.subr.bf16.mxu0 0
      %1001 = vmatpush2.bf16.msra.mxu0 0
      %1002 = vmatprep.subr.bf16.mxu0 0
      %1003 = vmatpush2.bf16.msra.mxu0 0
      %1004 = vmatprep.subr.bf16.mxu0 0
      %1005 = vmatpush2.bf16.msra.mxu0 0
      %1006 = vmatprep.subr.bf16.mxu0 0
      %1007 = vmatpush2.bf16.msra.mxu0 0
      %1008 = vmatprep.subr.bf16.mxu0 0
      %1009 = vmatpush2.bf16.msra.mxu0 0
      %1010 = vmatprep.subr.bf16.mxu0 0
      %1011 = vmatpush2.bf16.msra.mxu0 0
      %1012 = vmatprep.subr.bf16.mxu0 0
      %1013 = vmatpush2.bf16.msra.mxu0 %v858
      %1014 = vmatprep.mubr.bf16.mxu0 %v845
      %1015 = vmatmul.mubr.bf16.gmra.mxu0 %v445
      %v1016 = vpop.f32.mrf.mxu0
      %v1017 = vadd.f32 %v977, %v1016
      %v1018 = vpop.f32.mrf.mxu0
      %v1019 = vpop.f32.mrf.mxu0
      %v1020 = vpop.f32.mrf.mxu0
      %1021 = vdwg.mxu0
      %v1022 = vmax.f32 %v936, 0.0
      %v1023 = vmax.f32 %v938, 0.0
      %v1024 = vmax.f32 %v1017, 0.0
      %v1025 = vpack.c.bf16 %v1022, %v1022
      %v1026 = vpack.c.bf16 %v1023, %v1023
      %v1027 = vpack.c.bf16 %v1024, %v1024
      %v1028 = vld [vmem:[%s4] sm:$0xff]
      %v1029 = vld [vmem:[%s4 + $0x8] sm:$0xff]
      %v1030 = vld [vmem:[%s4 + $0x10] sm:$0xff]
      %v1031 = vld [vmem:[%s4 + $0x18] sm:$0xff]
      %v1032 = vld [vmem:[%s4 + $0x20] sm:$0xff]
      %v1033 = vld [vmem:[%s4 + $0x28] sm:$0xff]
      %v1034 = vld [vmem:[%s4 + $0x30] sm:$0xff]
      %v1035 = vld [vmem:[%s4 + $0x38] sm:$0xff]
      %v1036 = vld [vmem:[%s4 + $0x40] sm:$0xff]
      %v1037 = vld [vmem:[%s4 + $0x48] sm:$0xff]
      %v1038 = vld [vmem:[%s4 + $0x50] sm:$0xff]
      %v1039 = vld [vmem:[%s4 + $0x58] sm:$0xff]
      %v1040 = vld [vmem:[%s4 + $0x60] sm:$0xff]
      %v1041 = vld [vmem:[%s4 + $0x68] sm:$0xff]
      %v1042 = vld [vmem:[%s4 + $0x70] sm:$0xff]
      %v1043 = vld [vmem:[%s4 + $0x78] sm:$0xff]
      %v1044 = vld [vmem:[%s4 + $0x80] sm:$0xff]
      %v1045 = vld [vmem:[%s4 + $0x88] sm:$0xff]
      %v1046 = vld [vmem:[%s4 + $0x90] sm:$0xff]
      %v1047 = vld [vmem:[%s4 + $0x98] sm:$0xff]
      %v1048 = vld [vmem:[%s4 + $0xa0] sm:$0xff]
      %v1049 = vld [vmem:[%s4 + $0xa8] sm:$0xff]
      %v1050 = vld [vmem:[%s4 + $0xb0] sm:$0xff]
      %v1051 = vld [vmem:[%s4 + $0xb8] sm:$0xff]
      %v1052 = vld [vmem:[%s4 + $0xc0] sm:$0xff]
      %v1053 = vld [vmem:[%s4 + $0xc8] sm:$0xff]
      %v1054 = vld [vmem:[%s4 + $0xd0] sm:$0xff]
      %v1055 = vld [vmem:[%s4 + $0xd8] sm:$0xff]
      %v1056 = vld [vmem:[%s4 + $0xe0] sm:$0xff]
      %v1057 = vld [vmem:[%s4 + $0xe8] sm:$0xff]
      %v1058 = vld [vmem:[%s4 + $0xf0] sm:$0xff]
      %v1059 = vld [vmem:[%s4 + $0xf8] sm:$0xff]
      %v1060 = vld [vmem:[%s4 + $0x100] sm:$0xff]
      %v1061 = vld [vmem:[%s4 + $0x108] sm:$0xff]
      %v1062 = vld [vmem:[%s4 + $0x110] sm:$0xff]
      %v1063 = vld [vmem:[%s4 + $0x118] sm:$0xff]
      %v1064 = vld [vmem:[%s4 + $0x120] sm:$0xff]
      %v1065 = vld [vmem:[%s4 + $0x128] sm:$0xff]
      %v1066 = vld [vmem:[%s4 + $0x130] sm:$0xff]
      %v1067 = vld [vmem:[%s4 + $0x138] sm:$0xff]
      %v1068 = vld [vmem:[%s4 + $0x140] sm:$0xff]
      %v1069 = vld [vmem:[%s4 + $0x148] sm:$0xff]
      %v1070 = vld [vmem:[%s4 + $0x150] sm:$0xff]
      %v1071 = vld [vmem:[%s4 + $0x158] sm:$0xff]
      %v1072 = vld [vmem:[%s4 + $0x160] sm:$0xff]
      %v1073 = vld [vmem:[%s4 + $0x168] sm:$0xff]
      %v1074 = vld [vmem:[%s4 + $0x170] sm:$0xff]
      %v1075 = vld [vmem:[%s4 + $0x178] sm:$0xff]
      %v1076 = vld [vmem:[%s4 + $0x180] sm:$0xff]
      %v1077 = vld [vmem:[%s4 + $0x188] sm:$0xff]
      %v1078 = vld [vmem:[%s4 + $0x190] sm:$0xff]
      %v1079 = vld [vmem:[%s4 + $0x198] sm:$0xff]
      %v1080 = vld [vmem:[%s4 + $0x1a0] sm:$0xff]
      %v1081 = vld [vmem:[%s4 + $0x1a8] sm:$0xff]
      %v1082 = vld [vmem:[%s4 + $0x1b0] sm:$0xff]
      %v1083 = vld [vmem:[%s4 + $0x1b8] sm:$0xff]
      %v1084 = vld [vmem:[%s4 + $0x1c0] sm:$0xff]
      %v1085 = vld [vmem:[%s4 + $0x1c8] sm:$0xff]
      %v1086 = vld [vmem:[%s4 + $0x1d0] sm:$0xff]
      %v1087 = vld [vmem:[%s4 + $0x1d8] sm:$0xff]
      %v1088 = vld [vmem:[%s4 + $0x1e0] sm:$0xff]
      %v1089 = vld [vmem:[%s4 + $0x1e8] sm:$0xff]
      %v1090 = vld [vmem:[%s4 + $0x1f0] sm:$0xff]
      %v1091 = vld [vmem:[%s4 + $0x1f8] sm:$0xff]
      %v1092 = vld [vmem:[%s4 + $0x200] sm:$0xff]
      %v1093 = vld [vmem:[%s4 + $0x208] sm:$0xff]
      %v1094 = vld [vmem:[%s4 + $0x210] sm:$0xff]
      %v1095 = vld [vmem:[%s4 + $0x218] sm:$0xff]
      %v1096 = vld [vmem:[%s4 + $0x220] sm:$0xff]
      %v1097 = vld [vmem:[%s4 + $0x228] sm:$0xff]
      %v1098 = vld [vmem:[%s4 + $0x230] sm:$0xff]
      %v1099 = vld [vmem:[%s4 + $0x238] sm:$0xff]
      %v1100 = vld [vmem:[%s4 + $0x240] sm:$0xff]
      %v1101 = vld [vmem:[%s4 + $0x248] sm:$0xff]
      %v1102 = vld [vmem:[%s4 + $0x250] sm:$0xff]
      %v1103 = vld [vmem:[%s4 + $0x258] sm:$0xff]
      %v1104 = vld [vmem:[%s4 + $0x260] sm:$0xff]
      %v1105 = vld [vmem:[%s4 + $0x268] sm:$0xff]
      %v1106 = vld [vmem:[%s4 + $0x270] sm:$0xff]
      %v1107 = vld [vmem:[%s4 + $0x278] sm:$0xff]
      %v1108 = vld [vmem:[%s4 + $0x280] sm:$0xff]
      %v1109 = vld [vmem:[%s4 + $0x288] sm:$0xff]
      %v1110 = vld [vmem:[%s4 + $0x290] sm:$0xff]
      %v1111 = vld [vmem:[%s4 + $0x298] sm:$0xff]
      %v1112 = vld [vmem:[%s4 + $0x2a0] sm:$0xff]
      %v1113 = vld [vmem:[%s4 + $0x2a8] sm:$0xff]
      %v1114 = vld [vmem:[%s4 + $0x2b0] sm:$0xff]
      %v1115 = vld [vmem:[%s4 + $0x2b8] sm:$0xff]
      %v1116 = vld [vmem:[%s4 + $0x2c0] sm:$0xff]
      %v1117 = vld [vmem:[%s4 + $0x2c8] sm:$0xff]
      %v1118 = vld [vmem:[%s4 + $0x2d0] sm:$0xff]
      %v1119 = vld [vmem:[%s4 + $0x2d8] sm:$0xff]
      %v1120 = vld [vmem:[%s4 + $0x2e0] sm:$0xff]
      %v1121 = vld [vmem:[%s4 + $0x2e8] sm:$0xff]
      %v1122 = vld [vmem:[%s4 + $0x2f0] sm:$0xff]
      %v1123 = vld [vmem:[%s4 + $0x2f8] sm:$0xff]
      %v1124 = vld [vmem:[%s5] sm:$0xf]
      %v1126 = vlaneseq
      %v1127 = vshrl.u32 %v1126, 7
      %v1128 = vsub.s32 0, %v1127
      %v1129 = vrot.slane %v1124, %v1128
      %v1130 = vlaneseq
      %v1131 = vshrl.u32 %v1130, 7
      %v1132 = vsub.s32 1, %v1131
      %v1133 = vrot.slane %v1124, %v1132
      %v1134 = vlaneseq
      %v1135 = vshrl.u32 %v1134, 7
      %v1136 = vsub.s32 2, %v1135
      %v1137 = vrot.slane %v1124, %v1136
      %v1138 = vlaneseq
      %v1139 = vshrl.u32 %v1138, 7
      %v1140 = vsub.s32 3, %v1139
      %v1141 = vrot.slane %v1124, %v1140
      %v1242 = vunpack.c.l.b16 %v1028
      %v1243 = vunpack.c.h.b16 %v1028
      %v1244 = vunpack.c.l.b16 %v1029
      %v1245 = vunpack.c.h.b16 %v1029
      %v1246 = vunpack.c.l.b16 %v1030
      %v1247 = vunpack.c.h.b16 %v1030
      %v1248 = vunpack.c.l.b16 %v1031
      %v1249 = vunpack.c.h.b16 %v1031
      %v1250 = vunpack.c.l.b16 %v1032
      %v1251 = vunpack.c.h.b16 %v1032
      %v1252 = vunpack.c.l.b16 %v1033
      %v1253 = vunpack.c.h.b16 %v1033
      %v1254 = vunpack.c.l.b16 %v1034
      %v1255 = vunpack.c.h.b16 %v1034
      %v1256 = vunpack.c.l.b16 %v1035
      %v1257 = vunpack.c.h.b16 %v1035
      %v1258 = vunpack.c.l.b16 %v1036
      %v1259 = vunpack.c.h.b16 %v1036
      %v1260 = vunpack.c.l.b16 %v1037
      %v1261 = vunpack.c.h.b16 %v1037
      %v1262 = vunpack.c.l.b16 %v1038
      %v1263 = vunpack.c.h.b16 %v1038
      %v1264 = vunpack.c.l.b16 %v1039
      %v1265 = vunpack.c.h.b16 %v1039
      %v1266 = vunpack.c.l.b16 %v1040
      %v1267 = vunpack.c.h.b16 %v1040
      %v1268 = vunpack.c.l.b16 %v1041
      %v1269 = vunpack.c.h.b16 %v1041
      %v1270 = vunpack.c.l.b16 %v1042
      %v1271 = vunpack.c.h.b16 %v1042
      %v1272 = vunpack.c.l.b16 %v1043
      %v1273 = vunpack.c.h.b16 %v1043
      %v1274 = vunpack.c.l.b16 %v1044
      %v1275 = vunpack.c.h.b16 %v1044
      %v1276 = vunpack.c.l.b16 %v1045
      %v1277 = vunpack.c.h.b16 %v1045
      %v1278 = vunpack.c.l.b16 %v1046
      %v1279 = vunpack.c.h.b16 %v1046
      %v1280 = vunpack.c.l.b16 %v1047
      %v1281 = vunpack.c.h.b16 %v1047
      %v1282 = vunpack.c.l.b16 %v1048
      %v1283 = vunpack.c.h.b16 %v1048
      %v1284 = vunpack.c.l.b16 %v1049
      %v1285 = vunpack.c.h.b16 %v1049
      %v1286 = vunpack.c.l.b16 %v1050
      %v1287 = vunpack.c.h.b16 %v1050
      %v1288 = vunpack.c.l.b16 %v1051
      %v1289 = vunpack.c.h.b16 %v1051
      %v1290 = vunpack.c.l.b16 %v1052
      %v1291 = vunpack.c.h.b16 %v1052
      %v1292 = vunpack.c.l.b16 %v1053
      %v1293 = vunpack.c.h.b16 %v1053
      %v1294 = vunpack.c.l.b16 %v1054
      %v1295 = vunpack.c.h.b16 %v1054
      %v1296 = vunpack.c.l.b16 %v1055
      %v1297 = vunpack.c.h.b16 %v1055
      %v1298 = vunpack.c.l.b16 %v1056
      %v1299 = vunpack.c.h.b16 %v1056
      %v1300 = vunpack.c.l.b16 %v1057
      %v1301 = vunpack.c.h.b16 %v1057
      %v1302 = vunpack.c.l.b16 %v1058
      %v1303 = vunpack.c.h.b16 %v1058
      %v1304 = vunpack.c.l.b16 %v1059
      %v1305 = vunpack.c.h.b16 %v1059
      %v1306 = vunpack.c.l.b16 %v1060
      %v1307 = vunpack.c.h.b16 %v1060
      %v1308 = vunpack.c.l.b16 %v1061
      %v1309 = vunpack.c.h.b16 %v1061
      %v1310 = vunpack.c.l.b16 %v1062
      %v1311 = vunpack.c.h.b16 %v1062
      %v1312 = vunpack.c.l.b16 %v1063
      %v1313 = vunpack.c.h.b16 %v1063
      %v1314 = vunpack.c.l.b16 %v1064
      %v1315 = vunpack.c.h.b16 %v1064
      %v1316 = vunpack.c.l.b16 %v1065
      %v1317 = vunpack.c.h.b16 %v1065
      %v1318 = vunpack.c.l.b16 %v1066
      %v1319 = vunpack.c.h.b16 %v1066
      %v1320 = vunpack.c.l.b16 %v1067
      %v1321 = vunpack.c.h.b16 %v1067
      %v1322 = vunpack.c.l.b16 %v1068
      %v1323 = vunpack.c.h.b16 %v1068
      %v1324 = vunpack.c.l.b16 %v1069
      %v1325 = vunpack.c.h.b16 %v1069
      %v1326 = vunpack.c.l.b16 %v1070
      %v1327 = vunpack.c.h.b16 %v1070
      %v1328 = vunpack.c.l.b16 %v1071
      %v1329 = vunpack.c.h.b16 %v1071
      %v1330 = vunpack.c.l.b16 %v1072
      %v1331 = vunpack.c.h.b16 %v1072
      %v1332 = vunpack.c.l.b16 %v1073
      %v1333 = vunpack.c.h.b16 %v1073
      %v1334 = vunpack.c.l.b16 %v1074
      %v1335 = vunpack.c.h.b16 %v1074
      %v1336 = vunpack.c.l.b16 %v1075
      %v1337 = vunpack.c.h.b16 %v1075
      %v1338 = vunpack.c.l.b16 %v1076
      %v1339 = vunpack.c.h.b16 %v1076
      %v1340 = vunpack.c.l.b16 %v1077
      %v1341 = vunpack.c.h.b16 %v1077
      %v1342 = vunpack.c.l.b16 %v1078
      %v1343 = vunpack.c.h.b16 %v1078
      %v1344 = vunpack.c.l.b16 %v1079
      %v1345 = vunpack.c.h.b16 %v1079
      %v1346 = vunpack.c.l.b16 %v1080
      %v1347 = vunpack.c.h.b16 %v1080
      %v1348 = vunpack.c.l.b16 %v1081
      %v1349 = vunpack.c.h.b16 %v1081
      %v1350 = vunpack.c.l.b16 %v1082
      %v1351 = vunpack.c.h.b16 %v1082
      %v1352 = vunpack.c.l.b16 %v1083
      %v1353 = vunpack.c.h.b16 %v1083
      %v1354 = vunpack.c.l.b16 %v1084
      %v1355 = vunpack.c.h.b16 %v1084
      %v1356 = vunpack.c.l.b16 %v1085
      %v1357 = vunpack.c.h.b16 %v1085
      %v1358 = vunpack.c.l.b16 %v1086
      %v1359 = vunpack.c.h.b16 %v1086
      %v1360 = vunpack.c.l.b16 %v1087
      %v1361 = vunpack.c.h.b16 %v1087
      %v1362 = vunpack.c.l.b16 %v1088
      %v1363 = vunpack.c.h.b16 %v1088
      %v1364 = vunpack.c.l.b16 %v1089
      %v1365 = vunpack.c.h.b16 %v1089
      %v1366 = vunpack.c.l.b16 %v1090
      %v1367 = vunpack.c.h.b16 %v1090
      %v1368 = vunpack.c.l.b16 %v1091
      %v1369 = vunpack.c.h.b16 %v1091
      %v1370 = vunpack.c.l.b16 %v1092
      %v1371 = vunpack.c.h.b16 %v1092
      %v1372 = vunpack.c.l.b16 %v1093
      %v1373 = vunpack.c.h.b16 %v1093
      %v1374 = vunpack.c.l.b16 %v1094
      %v1375 = vunpack.c.h.b16 %v1094
      %v1376 = vunpack.c.l.b16 %v1095
      %v1377 = vunpack.c.h.b16 %v1095
      %v1378 = vunpack.c.l.b16 %v1096
      %v1379 = vunpack.c.h.b16 %v1096
      %v1380 = vunpack.c.l.b16 %v1097
      %v1381 = vunpack.c.h.b16 %v1097
      %v1382 = vunpack.c.l.b16 %v1098
      %v1383 = vunpack.c.h.b16 %v1098
      %v1384 = vunpack.c.l.b16 %v1099
      %v1385 = vunpack.c.h.b16 %v1099
      %v1386 = vunpack.c.l.b16 %v1100
      %v1387 = vunpack.c.h.b16 %v1100
      %v1388 = vunpack.c.l.b16 %v1101
      %v1389 = vunpack.c.h.b16 %v1101
      %v1390 = vunpack.c.l.b16 %v1102
      %v1391 = vunpack.c.h.b16 %v1102
      %v1392 = vunpack.c.l.b16 %v1103
      %v1393 = vunpack.c.h.b16 %v1103
      %v1394 = vunpack.c.l.b16 %v1104
      %v1395 = vunpack.c.h.b16 %v1104
      %v1396 = vunpack.c.l.b16 %v1105
      %v1397 = vunpack.c.h.b16 %v1105
      %v1398 = vunpack.c.l.b16 %v1106
      %v1399 = vunpack.c.h.b16 %v1106
      %v1400 = vunpack.c.l.b16 %v1107
      %v1401 = vunpack.c.h.b16 %v1107
      %v1402 = vunpack.c.l.b16 %v1108
      %v1403 = vunpack.c.h.b16 %v1108
      %v1404 = vunpack.c.l.b16 %v1109
      %v1405 = vunpack.c.h.b16 %v1109
      %v1406 = vunpack.c.l.b16 %v1110
      %v1407 = vunpack.c.h.b16 %v1110
      %v1408 = vunpack.c.l.b16 %v1111
      %v1409 = vunpack.c.h.b16 %v1111
      %v1410 = vunpack.c.l.b16 %v1112
      %v1411 = vunpack.c.h.b16 %v1112
      %v1412 = vunpack.c.l.b16 %v1113
      %v1413 = vunpack.c.h.b16 %v1113
      %v1414 = vunpack.c.l.b16 %v1114
      %v1415 = vunpack.c.h.b16 %v1114
      %v1416 = vunpack.c.l.b16 %v1115
      %v1417 = vunpack.c.h.b16 %v1115
      %v1418 = vunpack.c.l.b16 %v1116
      %v1419 = vunpack.c.h.b16 %v1116
      %v1420 = vunpack.c.l.b16 %v1117
      %v1421 = vunpack.c.h.b16 %v1117
      %v1422 = vunpack.c.l.b16 %v1118
      %v1423 = vunpack.c.h.b16 %v1118
      %v1424 = vunpack.c.l.b16 %v1119
      %v1425 = vunpack.c.h.b16 %v1119
      %v1426 = vunpack.c.l.b16 %v1120
      %v1427 = vunpack.c.h.b16 %v1120
      %v1428 = vunpack.c.l.b16 %v1121
      %v1429 = vunpack.c.h.b16 %v1121
      %v1430 = vunpack.c.l.b16 %v1122
      %v1431 = vunpack.c.h.b16 %v1122
      %v1432 = vunpack.c.l.b16 %v1123
      %v1433 = vunpack.c.h.b16 %v1123
      %v1434 = vpack.c.b16 %v1246, %v1242
      %v1435 = vpack.c.b16 %v1247, %v1243
      %v1436 = vpack.c.b16 %v1248, %v1244
      %v1437 = vpack.c.b16 %v1249, %v1245
      %v1438 = vpack.c.b16 %v1254, %v1250
      %v1439 = vpack.c.b16 %v1255, %v1251
      %v1440 = vpack.c.b16 %v1256, %v1252
      %v1441 = vpack.c.b16 %v1257, %v1253
      %v1442 = vpack.c.b16 %v1262, %v1258
      %v1443 = vpack.c.b16 %v1263, %v1259
      %v1444 = vpack.c.b16 %v1264, %v1260
      %v1445 = vpack.c.b16 %v1265, %v1261
      %v1446 = vpack.c.b16 %v1270, %v1266
      %v1447 = vpack.c.b16 %v1271, %v1267
      %v1448 = vpack.c.b16 %v1272, %v1268
      %v1449 = vpack.c.b16 %v1273, %v1269
      %v1450 = vpack.c.b16 %v1278, %v1274
      %v1451 = vpack.c.b16 %v1279, %v1275
      %v1452 = vpack.c.b16 %v1280, %v1276
      %v1453 = vpack.c.b16 %v1281, %v1277
      %v1454 = vpack.c.b16 %v1286, %v1282
      %v1455 = vpack.c.b16 %v1287, %v1283
      %v1456 = vpack.c.b16 %v1288, %v1284
      %v1457 = vpack.c.b16 %v1289, %v1285
      %v1458 = vpack.c.b16 %v1294, %v1290
      %v1459 = vpack.c.b16 %v1295, %v1291
      %v1460 = vpack.c.b16 %v1296, %v1292
      %v1461 = vpack.c.b16 %v1297, %v1293
      %v1462 = vpack.c.b16 %v1302, %v1298
      %v1463 = vpack.c.b16 %v1303, %v1299
      %v1464 = vpack.c.b16 %v1304, %v1300
      %v1465 = vpack.c.b16 %v1305, %v1301
      %v1466 = vpack.c.b16 %v1310, %v1306
      %v1467 = vpack.c.b16 %v1311, %v1307
      %v1468 = vpack.c.b16 %v1312, %v1308
      %v1469 = vpack.c.b16 %v1313, %v1309
      %v1470 = vpack.c.b16 %v1318, %v1314
      %v1471 = vpack.c.b16 %v1319, %v1315
      %v1472 = vpack.c.b16 %v1320, %v1316
      %v1473 = vpack.c.b16 %v1321, %v1317
      %v1474 = vpack.c.b16 %v1326, %v1322
      %v1475 = vpack.c.b16 %v1327, %v1323
      %v1476 = vpack.c.b16 %v1328, %v1324
      %v1477 = vpack.c.b16 %v1329, %v1325
      %v1478 = vpack.c.b16 %v1334, %v1330
      %v1479 = vpack.c.b16 %v1335, %v1331
      %v1480 = vpack.c.b16 %v1336, %v1332
      %v1481 = vpack.c.b16 %v1337, %v1333
      %v1482 = vpack.c.b16 %v1342, %v1338
      %v1483 = vpack.c.b16 %v1343, %v1339
      %v1484 = vpack.c.b16 %v1344, %v1340
      %v1485 = vpack.c.b16 %v1345, %v1341
      %v1486 = vpack.c.b16 %v1350, %v1346
      %v1487 = vpack.c.b16 %v1351, %v1347
      %v1488 = vpack.c.b16 %v1352, %v1348
      %v1489 = vpack.c.b16 %v1353, %v1349
      %v1490 = vpack.c.b16 %v1358, %v1354
      %v1491 = vpack.c.b16 %v1359, %v1355
      %v1492 = vpack.c.b16 %v1360, %v1356
      %v1493 = vpack.c.b16 %v1361, %v1357
      %v1494 = vpack.c.b16 %v1366, %v1362
      %v1495 = vpack.c.b16 %v1367, %v1363
      %v1496 = vpack.c.b16 %v1368, %v1364
      %v1497 = vpack.c.b16 %v1369, %v1365
      %v1498 = vpack.c.b16 %v1374, %v1370
      %v1499 = vpack.c.b16 %v1375, %v1371
      %v1500 = vpack.c.b16 %v1376, %v1372
      %v1501 = vpack.c.b16 %v1377, %v1373
      %v1502 = vpack.c.b16 %v1382, %v1378
      %v1503 = vpack.c.b16 %v1383, %v1379
      %v1504 = vpack.c.b16 %v1384, %v1380
      %v1505 = vpack.c.b16 %v1385, %v1381
      %v1506 = vpack.c.b16 %v1390, %v1386
      %v1507 = vpack.c.b16 %v1391, %v1387
      %v1508 = vpack.c.b16 %v1392, %v1388
      %v1509 = vpack.c.b16 %v1393, %v1389
      %v1510 = vpack.c.b16 %v1398, %v1394
      %v1511 = vpack.c.b16 %v1399, %v1395
      %v1512 = vpack.c.b16 %v1400, %v1396
      %v1513 = vpack.c.b16 %v1401, %v1397
      %v1514 = vpack.c.b16 %v1406, %v1402
      %v1515 = vpack.c.b16 %v1407, %v1403
      %v1516 = vpack.c.b16 %v1408, %v1404
      %v1517 = vpack.c.b16 %v1409, %v1405
      %v1518 = vpack.c.b16 %v1414, %v1410
      %v1519 = vpack.c.b16 %v1415, %v1411
      %v1520 = vpack.c.b16 %v1416, %v1412
      %v1521 = vpack.c.b16 %v1417, %v1413
      %v1522 = vpack.c.b16 %v1422, %v1418
      %v1523 = vpack.c.b16 %v1423, %v1419
      %v1524 = vpack.c.b16 %v1424, %v1420
      %v1525 = vpack.c.b16 %v1425, %v1421
      %v1526 = vpack.c.b16 %v1430, %v1426
      %v1527 = vpack.c.b16 %v1431, %v1427
      %v1528 = vpack.c.b16 %v1432, %v1428
      %v1529 = vpack.c.b16 %v1433, %v1429
      %1626 = vmatprep.subr.bf16.mxu0 %v1463
      %1627 = vmatpush1.bf16.msra.mxu0 %v1462
      %1628 = vmatprep.subr.bf16.mxu0 %v1459
      %1629 = vmatpush1.bf16.msra.mxu0 %v1458
      %1630 = vmatprep.subr.bf16.mxu0 %v1455
      %1631 = vmatpush1.bf16.msra.mxu0 %v1454
      %1632 = vmatprep.subr.bf16.mxu0 %v1451
      %1633 = vmatpush1.bf16.msra.mxu0 %v1450
      %1634 = vmatprep.subr.bf16.mxu0 %v1447
      %1635 = vmatpush1.bf16.msra.mxu0 %v1446
      %1636 = vmatprep.subr.bf16.mxu0 %v1443
      %1637 = vmatpush1.bf16.msra.mxu0 %v1442
      %1638 = vmatprep.subr.bf16.mxu0 %v1439
      %1639 = vmatpush1.bf16.msra.mxu0 %v1438
      %1640 = vmatprep.subr.bf16.mxu0 %v1435
      %1641 = vmatpush1.bf16.msra.mxu0 %v1434
      %1642 = vmatprep.subr.bf16.mxu0 %v1495
      %1643 = vmatpush2.bf16.msra.mxu0 %v1494
      %1644 = vmatprep.subr.bf16.mxu0 %v1491
      %1645 = vmatpush2.bf16.msra.mxu0 %v1490
      %1646 = vmatprep.subr.bf16.mxu0 %v1487
      %1647 = vmatpush2.bf16.msra.mxu0 %v1486
      %1648 = vmatprep.subr.bf16.mxu0 %v1483
      %1649 = vmatpush2.bf16.msra.mxu0 %v1482
      %1650 = vmatprep.subr.bf16.mxu0 %v1479
      %1651 = vmatpush2.bf16.msra.mxu0 %v1478
      %1652 = vmatprep.subr.bf16.mxu0 %v1475
      %1653 = vmatpush2.bf16.msra.mxu0 %v1474
      %1654 = vmatprep.subr.bf16.mxu0 %v1471
      %1655 = vmatpush2.bf16.msra.mxu0 %v1470
      %1656 = vmatprep.subr.bf16.mxu0 %v1467
      %1657 = vmatpush2.bf16.msra.mxu0 %v1466
      %1658 = vmatprep.mubr.bf16.mxu0 %v1026
      %1659 = vmatmul.mubr.bf16.gmra.mxu0 %v1025
      %v1660 = vpop.f32.mrf.mxu0
      %v1661 = vadd.f32 %v1129, %v1660
      %v1662 = vpop.f32.mrf.mxu0
      %v1663 = vadd.f32 %v1133, %v1662
      %v1664 = vpop.f32.mrf.mxu0
      %v1665 = vpop.f32.mrf.mxu0
      %1666 = vdwg.mxu0
      %1667 = vmatprep.subr.bf16.mxu0 %v1527
      %1668 = vmatpush1.bf16.msra.mxu0 %v1526
      %1669 = vmatprep.subr.bf16.mxu0 %v1523
      %1670 = vmatpush1.bf16.msra.mxu0 %v1522
      %1671 = vmatprep.subr.bf16.mxu0 %v1519
      %1672 = vmatpush1.bf16.msra.mxu0 %v1518
      %1673 = vmatprep.subr.bf16.mxu0 %v1515
      %1674 = vmatpush1.bf16.msra.mxu0 %v1514
      %1675 = vmatprep.subr.bf16.mxu0 %v1511
      %1676 = vmatpush1.bf16.msra.mxu0 %v1510
      %1677 = vmatprep.subr.bf16.mxu0 %v1507
      %1678 = vmatpush1.bf16.msra.mxu0 %v1506
      %1679 = vmatprep.subr.bf16.mxu0 %v1503
      %1680 = vmatpush1.bf16.msra.mxu0 %v1502
      %1681 = vmatprep.subr.bf16.mxu0 %v1499
      %1682 = vmatpush1.bf16.msra.mxu0 %v1498
      %1683 = vmatprep.subr.bf16.mxu0 0
      %1684 = vmatpush2.bf16.msra.mxu0 0
      %1685 = vmatprep.subr.bf16.mxu0 0
      %1686 = vmatpush2.bf16.msra.mxu0 0
      %1687 = vmatprep.subr.bf16.mxu0 0
      %1688 = vmatpush2.bf16.msra.mxu0 0
      %1689 = vmatprep.subr.bf16.mxu0 0
      %1690 = vmatpush2.bf16.msra.mxu0 0
      %1691 = vmatprep.subr.bf16.mxu0 0
      %1692 = vmatpush2.bf16.msra.mxu0 0
      %1693 = vmatprep.subr.bf16.mxu0 0
      %1694 = vmatpush2.bf16.msra.mxu0 0
      %1695 = vmatprep.subr.bf16.mxu0 0
      %1696 = vmatpush2.bf16.msra.mxu0 0
      %1697 = vmatprep.subr.bf16.mxu0 0
      %1698 = vmatpush2.bf16.msra.mxu0 0
      %1699 = vmatprep.mubr.bf16.mxu0 0
      %1700 = vmatmul.mubr.bf16.gmra.mxu0 %v1027
      %v1701 = vpop.f32.mrf.mxu0
      %v1702 = vadd.f32 %v1661, %v1701
      %v1703 = vpop.f32.mrf.mxu0
      %v1704 = vadd.f32 %v1663, %v1703
      %v1705 = vpop.f32.mrf.mxu0
      %v1706 = vpop.f32.mrf.mxu0
      %1707 = vdwg.mxu0
      %1708 = vmatprep.subr.bf16.mxu0 %v1465
      %1709 = vmatpush1.bf16.msra.mxu0 %v1464
      %1710 = vmatprep.subr.bf16.mxu0 %v1461
      %1711 = vmatpush1.bf16.msra.mxu0 %v1460
      %1712 = vmatprep.subr.bf16.mxu0 %v1457
      %1713 = vmatpush1.bf16.msra.mxu0 %v1456
      %1714 = vmatprep.subr.bf16.mxu0 %v1453
      %1715 = vmatpush1.bf16.msra.mxu0 %v1452
      %1716 = vmatprep.subr.bf16.mxu0 %v1449
      %1717 = vmatpush1.bf16.msra.mxu0 %v1448
      %1718 = vmatprep.subr.bf16.mxu0 %v1445
      %1719 = vmatpush1.bf16.msra.mxu0 %v1444
      %1720 = vmatprep.subr.bf16.mxu0 %v1441
      %1721 = vmatpush1.bf16.msra.mxu0 %v1440
      %1722 = vmatprep.subr.bf16.mxu0 %v1437
      %1723 = vmatpush1.bf16.msra.mxu0 %v1436
      %1724 = vmatprep.subr.bf16.mxu0 %v1497
      %1725 = vmatpush2.bf16.msra.mxu0 %v1496
      %1726 = vmatprep.subr.bf16.mxu0 %v1493
      %1727 = vmatpush2.bf16.msra.mxu0 %v1492
      %1728 = vmatprep.subr.bf16.mxu0 %v1489
      %1729 = vmatpush2.bf16.msra.mxu0 %v1488
      %1730 = vmatprep.subr.bf16.mxu0 %v1485
      %1731 = vmatpush2.bf16.msra.mxu0 %v1484
      %1732 = vmatprep.subr.bf16.mxu0 %v1481
      %1733 = vmatpush2.bf16.msra.mxu0 %v1480
      %1734 = vmatprep.subr.bf16.mxu0 %v1477
      %1735 = vmatpush2.bf16.msra.mxu0 %v1476
      %1736 = vmatprep.subr.bf16.mxu0 %v1473
      %1737 = vmatpush2.bf16.msra.mxu0 %v1472
      %1738 = vmatprep.subr.bf16.mxu0 %v1469
      %1739 = vmatpush2.bf16.msra.mxu0 %v1468
      %1740 = vmatprep.mubr.bf16.mxu0 %v1026
      %1741 = vmatmul.mubr.bf16.gmra.mxu0 %v1025
      %v1742 = vpop.f32.mrf.mxu0
      %v1743 = vadd.f32 %v1137, %v1742
      %v1744 = vpop.f32.mrf.mxu0
      %v1745 = vadd.f32 %v1141, %v1744
      %v1746 = vpop.f32.mrf.mxu0
      %v1747 = vpop.f32.mrf.mxu0
      %1748 = vdwg.mxu0
      %1749 = vmatprep.subr.bf16.mxu0 %v1529
      %1750 = vmatpush1.bf16.msra.mxu0 %v1528
      %1751 = vmatprep.subr.bf16.mxu0 %v1525
      %1752 = vmatpush1.bf16.msra.mxu0 %v1524
      %1753 = vmatprep.subr.bf16.mxu0 %v1521
      %1754 = vmatpush1.bf16.msra.mxu0 %v1520
      %1755 = vmatprep.subr.bf16.mxu0 %v1517
      %1756 = vmatpush1.bf16.msra.mxu0 %v1516
      %1757 = vmatprep.subr.bf16.mxu0 %v1513
      %1758 = vmatpush1.bf16.msra.mxu0 %v1512
      %1759 = vmatprep.subr.bf16.mxu0 %v1509
      %1760 = vmatpush1.bf16.msra.mxu0 %v1508
      %1761 = vmatprep.subr.bf16.mxu0 %v1505
      %1762 = vmatpush1.bf16.msra.mxu0 %v1504
      %1763 = vmatprep.subr.bf16.mxu0 %v1501
      %1764 = vmatpush1.bf16.msra.mxu0 %v1500
      %1765 = vmatprep.subr.bf16.mxu0 0
      %1766 = vmatpush2.bf16.msra.mxu0 0
      %1767 = vmatprep.subr.bf16.mxu0 0
      %1768 = vmatpush2.bf16.msra.mxu0 0
      %1769 = vmatprep.subr.bf16.mxu0 0
      %1770 = vmatpush2.bf16.msra.mxu0 0
      %1771 = vmatprep.subr.bf16.mxu0 0
      %1772 = vmatpush2.bf16.msra.mxu0 0
      %1773 = vmatprep.subr.bf16.mxu0 0
      %1774 = vmatpush2.bf16.msra.mxu0 0
      %1775 = vmatprep.subr.bf16.mxu0 0
      %1776 = vmatpush2.bf16.msra.mxu0 0
      %1777 = vmatprep.subr.bf16.mxu0 0
      %1778 = vmatpush2.bf16.msra.mxu0 0
      %1779 = vmatprep.subr.bf16.mxu0 0
      %1780 = vmatpush2.bf16.msra.mxu0 0
      %1781 = vmatprep.mubr.bf16.mxu0 0
      %1782 = vmatmul.mubr.bf16.gmra.mxu0 %v1027
      %v1783 = vpop.f32.mrf.mxu0
      %v1784 = vadd.f32 %v1743, %v1783
      %v1785 = vpop.f32.mrf.mxu0
      %v1786 = vadd.f32 %v1745, %v1785
      %v1787 = vpop.f32.mrf.mxu0
      %v1788 = vpop.f32.mrf.mxu0
      %1789 = vdwg.mxu0
      %v1790 = vmax.f32 %v1702, 0.0
      %v1791 = vmax.f32 %v1704, 0.0
      %v1792 = vmax.f32 %v1784, 0.0
      %v1793 = vmax.f32 %v1786, 0.0
      %v1794 = vld [vmem:[%s299] sm:$0x3]
      %v1795 = vunpack.c.l.bf16 %v1794
      %1797 = vset.pattern.permute.xlu0 0
      %1798 = vperm.xlu0 %1797, %v1795
      %v1799 = vpop.permute.xlu0 %1798
      %v1802 = vunpack.c.l.s4 839922192
      %v1803 = vunpack.c.0.s8 %v1802
      %v1804 = vlaneseq
      %v1805 = vshrl.u32 %v1804, 7
      %v1806 = vsub.s32 %v1803, %v1805
      %v1807 = vrot.slane %v1799, %v1806
      %v1809 = vcombine.high %v1807, %v1807
      %v1811 = vmul.f32 %v1790, %v1807
      %v1812 = vmul.f32 %v1791, %v1809
      %v1813 = vmul.f32 %v1792, %v1807
      %v1814 = vmul.f32 %v1793, %v1809
      %vm1815 = vcmask 1043456
      %v1816 = vsel %vm1815, %v1811, -inf
      %v1817 = vrot.slane %v1816, 4
      %v1818 = vmax.f32 %v1816, %v1817
      %v1819 = vrot.slane %v1818, 2
      %v1820 = vmax.f32 %v1818, %v1819
      %v1821 = vrot.slane %v1820, 1
      %v1822 = vmax.f32 %v1820, %v1821
      %v1823 = vsel %vm1815, %v1812, -inf
      %v1824 = vrot.slane %v1823, 4
      %v1825 = vmax.f32 %v1823, %v1824
      %v1826 = vrot.slane %v1825, 2
      %v1827 = vmax.f32 %v1825, %v1826
      %v1828 = vrot.slane %v1827, 1
      %v1829 = vmax.f32 %v1827, %v1828
      %v1830 = vsel %vm1815, %v1813, -inf
      %v1831 = vrot.slane %v1830, 4
      %v1832 = vmax.f32 %v1830, %v1831
      %v1833 = vrot.slane %v1832, 2
      %v1834 = vmax.f32 %v1832, %v1833
      %v1835 = vrot.slane %v1834, 1
      %v1836 = vmax.f32 %v1834, %v1835
      %v1837 = vsel %vm1815, %v1814, -inf
      %v1838 = vrot.slane %v1837, 4
      %v1839 = vmax.f32 %v1837, %v1838
      %v1840 = vrot.slane %v1839, 2
      %v1841 = vmax.f32 %v1839, %v1840
      %v1842 = vrot.slane %v1841, 1
      %v1843 = vmax.f32 %v1841, %v1842
      %v1844 = vld [vmem:[%s303] sm:$0xf]
      %v1849 = vcombine.low %v1822, %v1829
      %v1850 = vcombine.low %v1836, %v1843
      %v1852 = vunpack.c.l.s4 1966171168
      %v1853 = vunpack.c.0.s8 %v1852
      %v1854 = vlaneseq
      %v1855 = vshrl.u32 %v1854, 7
      %v1856 = vsub.s32 %v1853, %v1855
      %v1857 = vrot.slane %v1849, %v1856
      %v1859 = vunpack.c.l.s4 1966171168
      %v1860 = vunpack.c.0.s8 %v1859
      %v1861 = vlaneseq
      %v1862 = vshrl.u32 %v1861, 7
      %v1863 = vsub.s32 %v1860, %v1862
      %v1864 = vrot.slane %v1850, %v1863
      %v1865 = vcombine.low %v1857, %v1864
      %v1867 = vunpack.c.l.s4 1966171168
      %v1868 = vunpack.c.0.s8 %v1867
      %v1869 = vlaneseq
      %v1870 = vshrl.u32 %v1869, 7
      %v1871 = vsub.s32 %v1868, %v1870
      %v1872 = vrot.slane %v1865, %v1871
      %v1874 = vmax.f32 %v1844, %v1872
      %v1875 = vlaneseq
      %vm1876 = vcmp.ge.s32.totalorder %v1875, 0
      %vm1877 = vcmp.lt.s32.totalorder %v1875, 512
      %vm1878 = vmand %vm1876, %vm1877
      %1879 = vst.msk [vmem:[%s303] sm:$0xf] %vm1878, %v1874
      %p1880 = scmp.lt.s32.totalorder %s21, 1
      %s1881 = scalar_select %p1880, %s21, 1
      %s1882 = smul.addr %s1881, 4
      %s1883 = scalar_lea.vmem %s6, %s1882
      // Predicated region
      $region49: #{_forward_impl.5} parent=43 // pred_check
        %p1884 = pneg %p187
      $region50: #{_forward_impl.5} parent=43 // pred_check_branch
        %1886 = sbr.rel (%p1884) target = $region52
      $region51: #{_forward_impl.5} parent=43 // pred_region
        _
      $region52: #{_forward_impl.5} parent=43 // pred_fallthru
        _
    $region44: #{_forward_impl.5} parent=5 // pred_fallthru
      _
    %p1887 = scmp.le.s32.totalorder 2, %s12
    // Predicated region
    $region53: #{_forward_impl.5} parent=5 // pred_check
      %p1888 = pneg %p1887
    $region54: #{_forward_impl.5} parent=5 // pred_check_branch
      %1890 = sbr.rel (%p1888) target = $region56
    $region55: #{_forward_impl.5} parent=5 // pred_region
      %s1891 = ssub.s32 %s12, 2
      // Predicated region
      $region57: #{_forward_impl.5} parent=55 // pred_check
        %p1892 = pneg %p193
      $region58: #{_forward_impl.5} parent=55 // pred_check_branch
        %1894 = sbr.rel (%p1892) target = $region60
      $region59: #{_forward_impl.5} parent=55 // pred_region
        %p1895 = scmp.lt.s32.totalorder %s23, 1
        %s1896 = scalar_select %p1895, %s23, 1
        %s1897 = smul.addr %s1896, 4
        %s1898 = scalar_lea.vmem %s6, %s1897
      $region60: #{_forward_impl.5} parent=55 // pred_fallthru
        _
    $region56: #{_forward_impl.5} parent=5 // pred_fallthru
      _
  $region6: #{_forward_impl.5} parent=0 // loop_footer
    %s16 = sadd.s32 1, %s12
  $region7: #{_forward_impl.5} parent=0 // loop_footer_branch
    %11 = sbr.rel target = $region3
  $region8: #{_forward_impl.5} parent=0 // loop_exit
    _

</llo_original>
